<compile_context>
chip_gen: v6e
topology: v6e:2x2x1
jax: 0.10.0
libtpu: 0.0.40
codegen_flags: <defaults>
</compile_context>

<pallas_src>
import math
import functools

import jax
import jax.numpy as jnp
from jax import lax
from jax.experimental import pallas as pl
from jax.experimental.pallas import tpu as pltpu

EPS = 1e-6
NEG_INF = -1e9


# ----------------------------- in-kernel math ------------------------------

def _layernorm(x, g, b):
    # Module formula: a_2 * (x - mean) / sqrt(std + eps) + b_2 ;
    # std is the unbiased (ddof=1) standard deviation, exactly torch.std.
    d = x.shape[-1]
    mean = jnp.mean(x, axis=-1, keepdims=True)
    xc = x - mean
    var = jnp.sum(xc * xc, axis=-1, keepdims=True) * (1.0 / (d - 1))
    std = jnp.sqrt(var)
    # rsqrt -> EUP (separate VLIW slot), avoids a VALU divide chain.
    return g * (xc * lax.rsqrt(std + EPS)) + b


def _softmax(x):
    m = jnp.max(x, axis=-1, keepdims=True)
    e = jnp.exp(x - m)
    # EUP reciprocal instead of a VALU divide.
    return e * pl.reciprocal(jnp.sum(e, axis=-1, keepdims=True), approx=True)


# --------------------------------- kernel ----------------------------------

def decoder_layer_kernel(
    # per-batch-block activations + grid-invariant mask biases
    x_ref, mem_ref, tgt_bias_ref, src_bias_ref,
    # packed (10, D) LN params / D-length biases
    vec_ref,
    # self-attention: fused QKV weight (D,3D), fused bias (1,3D), out proj
    wqkv_s_ref, bqkv_s_ref, wo_s_ref,
    # cross-attention: Q weight (scale baked in), fused KV weight/bias, out proj
    wq_c_ref, wkv_c_ref, bkv_c_ref, wo_c_ref,
    # feed-forward
    w1_ref, b1_ref, w2_ref,
    # output
    o_ref,
    *, n_heads):
    Bt, S, D = x_ref.shape
    Sm = mem_ref.shape[1]
    dk = D // n_heads
    rows = Bt * S

    # Fold batch rows into the matmul M dimension.
    x = x_ref[...].reshape(rows, D)                       # (rows, D) f32
    mem = mem_ref[...].reshape(Bt * Sm, D)                # (Bt*Sm, D) f32

    tgt_bias = tgt_bias_ref[...]                          # (S, S)  additive
    src_bias = src_bias_ref[...]                          # (S, Sm) additive

    vec = vec_ref[...]                                    # (10, D) f32
    ln0_g, ln0_b = vec[0:1], vec[1:2]
    ln1_g, ln1_b = vec[2:3], vec[3:4]
    ln2_g, ln2_b = vec[4:5], vec[5:6]
    bo_s, bq_c, bo_c, b2 = vec[6:7], vec[7:8], vec[8:9], vec[9:10]

    def attn(q, k, v, bias, wo_ref, bo, Sk):
        """q: (rows, D); k,v: (Bt*Sk, D); bias: (S, Sk). Scale already in q."""
        ctx_rows = []
        for bi in range(Bt):                              # static unroll
            qb = q[bi * S:(bi + 1) * S]
            kb = k[bi * Sk:(bi + 1) * Sk]
            vb = v[bi * Sk:(bi + 1) * Sk]
            heads = []
            for h in range(n_heads):                      # static unroll
                sl = slice(h * dk, (h + 1) * dk)
                qh = qb[:, sl].astype(jnp.bfloat16)
                kh = kb[:, sl].astype(jnp.bfloat16)
                vh = vb[:, sl].astype(jnp.bfloat16)
                # Contract the LAST dims of both operands -> no kh.T transpose.
                s = lax.dot_general(qh, kh, (((1,), (1,)), ((), ())),
                                    preferred_element_type=jnp.float32)
                p = _softmax(s + bias)
                heads.append(jnp.dot(p.astype(jnp.bfloat16), vh,
                                     preferred_element_type=jnp.float32))
            ctx_rows.append(jnp.concatenate(heads, axis=-1))     # (S, D)
        ctx = ctx_rows[0] if Bt == 1 else jnp.concatenate(ctx_rows, axis=0)
        # ONE full-K (K=D) output projection instead of H small K=dk matmuls.
        return jnp.dot(ctx.astype(jnp.bfloat16), wo_ref[...],
                       preferred_element_type=jnp.float32) + bo

    # --- sublayer 0: x + self_attn(norm(x), norm(x), norm(x), tgt_mask) ---
    xn = _layernorm(x, ln0_g, ln0_b)
    qkv = jnp.dot(xn.astype(jnp.bfloat16), wqkv_s_ref[...],
                  preferred_element_type=jnp.float32) + bqkv_s_ref[...]
    x = x + attn(qkv[:, :D], qkv[:, D:2 * D], qkv[:, 2 * D:],
                 tgt_bias, wo_s_ref, bo_s, S)

    # --- sublayer 1: x + src_attn(norm(x), memory, memory, src_mask) ---
    xn = _layernorm(x, ln1_g, ln1_b)
    qc = jnp.dot(xn.astype(jnp.bfloat16), wq_c_ref[...],
                 preferred_element_type=jnp.float32) + bq_c
    kvc = jnp.dot(mem.astype(jnp.bfloat16), wkv_c_ref[...],
                  preferred_element_type=jnp.float32) + bkv_c_ref[...]
    x = x + attn(qc, kvc[:, :D], kvc[:, D:], src_bias, wo_c_ref, bo_c, Sm)

    # --- sublayer 2: x + feed_forward(norm(x)) ; ff = w2(relu(w1(x))) ---
    xn = _layernorm(x, ln2_g, ln2_b)
    hdn = jnp.maximum(
        jnp.dot(xn.astype(jnp.bfloat16), w1_ref[...],
                preferred_element_type=jnp.float32) + b1_ref[...], 0.0)
    ff = jnp.dot(hdn.astype(jnp.bfloat16), w2_ref[...],
                 preferred_element_type=jnp.float32) + b2

    o_ref[...] = (x + ff).reshape(Bt, S, D).astype(o_ref.dtype)


# -------------------------------- wrapper ----------------------------------

def _const_spec(shape, buffered):
    idx = {2: (lambda b: (0, 0)), 3: (lambda b: (0, 0, 0))}[len(shape)]
    if buffered:
        # Constant index_map across the grid -> one VMEM copy suffices
        # (default double-buffering would hold 2 copies of every weight).
        return pl.BlockSpec(shape, idx, pipeline_mode=pl.Buffered(1))
    return pl.BlockSpec(shape, idx)


@functools.lru_cache(maxsize=1)
def _buffered_supported():
    """One-time probe: does this jax build accept pipeline_mode=pl.Buffered(1)?"""
    try:
        def _copy(x_ref, o_ref):
            o_ref[...] = x_ref[...]
        f = pl.pallas_call(
            _copy,
            out_shape=jax.ShapeDtypeStruct((8, 128), jnp.float32),
            grid=(1,),
            in_specs=[pl.BlockSpec((8, 128), lambda i: (0, 0),
                                   pipeline_mode=pl.Buffered(1))],
            out_specs=pl.BlockSpec((8, 128), lambda i: (0, 0)))
        jax.block_until_ready(f(jnp.zeros((8, 128), jnp.float32)))
        return True
    except Exception:
        return False


@functools.lru_cache(maxsize=None)
def _build_call(B, S, Sm, D, D_FF, n_heads, block_b, out_dtype_name):
    buffered = _buffered_supported()
    grid = (B // block_b,)

    x_spec = pl.BlockSpec((block_b, S, D), lambda b: (b, 0, 0))
    mem_spec = pl.BlockSpec((block_b, Sm, D), lambda b: (b, 0, 0))
    out_spec = pl.BlockSpec((block_b, S, D), lambda b: (b, 0, 0))

    const_shapes = [
        (S, S), (S, Sm),                          # mask biases
        (10, D),                                  # packed LN params / biases
        (D, 3 * D), (1, 3 * D), (D, D),           # self-attn: wqkv, bqkv, wo
        (D, D), (D, 2 * D), (1, 2 * D), (D, D),   # cross-attn: wq, wkv, bkv, wo
        (D, D_FF), (1, D_FF), (D_FF, D),          # ffn: w1, b1, w2
    ]
    in_specs = [x_spec, mem_spec] + [_const_spec(s, buffered) for s in const_shapes]

    # VMEM budget from actual buffer sizes: activations/output double-buffered,
    # grid-invariant operands single-buffered if supported, plus temporaries.
    rows, rows_m = block_b * S, block_b * Sm
    act = (2 * block_b * S * D + block_b * Sm * D) * 4 * 2
    const_b = ((S * S + S * Sm + 10 * D + 3 * D + 2 * D + D_FF) * 4
               + (D * 3 * D + 3 * D * D + D * 2 * D + D * D_FF + D_FF * D) * 2)
    const_b *= (1 if buffered else 2)
    interm = (rows * (3 * D + 4 * D + D_FF) + rows_m * 2 * D
              + 2 * S * max(S, Sm)) * 4
    vmem_limit = min(max(int(1.5 * (act + const_b + interm)) + (4 << 20), 32 << 20),
                     60 << 20)

    return pl.pallas_call(
        functools.partial(decoder_layer_kernel, n_heads=n_heads),
        out_shape=jax.ShapeDtypeStruct((B, S, D), jnp.dtype(out_dtype_name)),
        grid=grid,
        in_specs=in_specs,
        out_specs=out_spec,
        compiler_params=pltpu.CompilerParams(
            # Each grid step writes a disjoint output block -> shard the batch
            # across TensorCores (2x on v7x when the grid has >= 2 steps).
            dimension_semantics=("parallel",),
            vmem_limit_bytes=vmem_limit,
        ),
    )


def decoder_layer(x, memory, src_mask, tgt_mask, params, n_heads, block_b=None):
    """Fused DecoderLayer forward. Weight packing / bf16 casts happen here and
    fuse/CSE under jit; the pallas_call is cached on static shapes."""
    B, S, D = x.shape
    Sm = memory.shape[1]
    D_FF = params["w1"].shape[1]
    assert D % n_heads == 0
    dk = D // n_heads
    scale = 1.0 / math.sqrt(dk)

    if block_b is None:
        # Keep >= 2 grid steps when the batch splits evenly (both v7x
        # TensorCores busy); otherwise fold the whole batch into one step.
        block_b = B // 2 if (B >= 2 and B % 2 == 0) else B
    assert B % block_b == 0

    f32, bf16 = jnp.float32, jnp.bfloat16
    r = lambda a, n: jnp.asarray(a, f32).reshape(1, n)

    # masked_fill(mask == 0, -1e9) precomputed once as an additive bias.
    tgt_bias = jnp.where(tgt_mask == 0, NEG_INF, 0.0).astype(f32)
    src_bias = jnp.where(src_mask == 0, NEG_INF, 0.0).astype(f32)

    # 1/sqrt(dk) baked into the Q projection (weights + bias) at pack time.
    wqkv_s = jnp.concatenate([params["wq_s"] * scale, params["wk_s"],
                              params["wv_s"]], axis=1).astype(bf16)
    bqkv_s = jnp.concatenate([r(params["bq_s"], D) * scale,
                              r(params["bk_s"], D), r(params["bv_s"], D)], axis=1)
    wo_s = params["wo_s"].astype(bf16)
    wq_c = (params["wq_c"] * scale).astype(bf16)
    wkv_c = jnp.concatenate([params["wk_c"], params["wv_c"]], axis=1).astype(bf16)
    bkv_c = jnp.concatenate([r(params["bk_c"], D), r(params["bv_c"], D)], axis=1)
    wo_c = params["wo_c"].astype(bf16)
    w1 = params["w1"].astype(bf16)
    b1 = r(params["b1"], D_FF)
    w2 = params["w2"].astype(bf16)

    # All D-length LN params / biases packed into one (10, D) operand.
    vec_pack = jnp.concatenate([
        r(params["ln0_g"], D), r(params["ln0_b"], D),
        r(params["ln1_g"], D), r(params["ln1_b"], D),
        r(params["ln2_g"], D), r(params["ln2_b"], D),
        r(params["bo_s"], D),
        r(params["bq_c"], D) * scale,
        r(params["bo_c"], D),
        r(params["b2"], D),
    ], axis=0)

    call = _build_call(B, S, Sm, D, D_FF, n_heads, block_b,
                       jnp.dtype(x.dtype).name)
    return call(x.astype(f32), memory.astype(f32), tgt_bias, src_bias, vec_pack,
                wqkv_s, bqkv_s, wo_s, wq_c, wkv_c, bkv_c, wo_c, w1, b1, w2)


# --------------------------- pure-JAX reference -----------------------------

def _ref_forward(x, memory, src_mask, tgt_mask, p, n_heads):
    def ln(x, g, b):
        d = x.shape[-1]
        mean = jnp.mean(x, axis=-1, keepdims=True)
        xc = x - mean
        std = jnp.sqrt(jnp.sum(xc * xc, axis=-1, keepdims=True) / (d - 1))
        return g * (xc / jnp.sqrt(std + EPS)) + b

    def mha(xq, xkv, mask, wq, bq, wk, bk, wv, bv, wo, bo):
        B, Sq, D = xq.shape
        Sk = xkv.shape[1]
        dk = D // n_heads
        q = (xq @ wq + bq).reshape(B, Sq, n_heads, dk).transpose(0, 2, 1, 3)
        k = (xkv @ wk + bk).reshape(B, Sk, n_heads, dk).transpose(0, 2, 1, 3)
        v = (xkv @ wv + bv).reshape(B, Sk, n_heads, dk).transpose(0, 2, 1, 3)
        s = jnp.einsum("bhqd,bhkd->bhqk", q, k) / math.sqrt(dk)
        s = jnp.where(mask[None, None] == 0, -1e9, s)
        a = jax.nn.softmax(s, axis=-1)
        o = jnp.einsum("bhqk,bhkd->bhqd", a, v).transpose(0, 2, 1, 3).reshape(B, Sq, D)
        return o @ wo + bo

    xn = ln(x, p["ln0_g"], p["ln0_b"])
    x = x + mha(xn, xn, tgt_mask, p["wq_s"], p["bq_s"], p["wk_s"], p["bk_s"],
                p["wv_s"], p["bv_s"], p["wo_s"], p["bo_s"])
    xn = ln(x, p["ln1_g"], p["ln1_b"])
    x = x + mha(xn, memory, src_mask, p["wq_c"], p["bq_c"], p["wk_c"], p["bk_c"],
                p["wv_c"], p["bv_c"], p["wo_c"], p["bo_c"])
    xn = ln(x, p["ln2_g"], p["ln2_b"])
    ff = jnp.maximum(xn @ p["w1"] + p["b1"], 0.0) @ p["w2"] + p["b2"]
    return x + ff


# ----------------------------------- main -----------------------------------

if __name__ == "__main__":
    # Lane-dense toy shapes: D multiple of 128 so every vreg/store is full-lane.
    B, S, Sm, D, D_FF, H = 2, 8, 8, 128, 256, 4

    key = jax.random.PRNGKey(0)
    keys = jax.random.split(key, 24)
    ki = iter(keys)

    def lin(k, din, dout):
        return jax.random.normal(k, (din, dout), jnp.float32) / math.sqrt(din)

    params = {
        "ln0_g": jnp.ones((1, D), jnp.float32),  "ln0_b": jnp.zeros((1, D), jnp.float32),
        "ln1_g": jnp.ones((1, D), jnp.float32),  "ln1_b": jnp.zeros((1, D), jnp.float32),
        "ln2_g": jnp.ones((1, D), jnp.float32),  "ln2_b": jnp.zeros((1, D), jnp.float32),
        # self-attention
        "wq_s": lin(next(ki), D, D), "bq_s": jnp.zeros((1, D), jnp.float32),
        "wk_s": lin(next(ki), D, D), "bk_s": jnp.zeros((1, D), jnp.float32),
        "wv_s": lin(next(ki), D, D), "bv_s": jnp.zeros((1, D), jnp.float32),
        "wo_s": lin(next(ki), D, D), "bo_s": jnp.zeros((1, D), jnp.float32),
        # src (cross) attention
        "wq_c": lin(next(ki), D, D), "bq_c": jnp.zeros((1, D), jnp.float32),
        "wk_c": lin(next(ki), D, D), "bk_c": jnp.zeros((1, D), jnp.float32),
        "wv_c": lin(next(ki), D, D), "bv_c": jnp.zeros((1, D), jnp.float32),
        "wo_c": lin(next(ki), D, D), "bo_c": jnp.zeros((1, D), jnp.float32),
        # feed-forward
        "w1": lin(next(ki), D, D_FF), "b1": jnp.zeros((1, D_FF), jnp.float32),
        "w2": lin(next(ki), D_FF, D), "b2": jnp.zeros((1, D), jnp.float32),
    }

    kx, km = jax.random.split(next(ki))
    x = jax.random.normal(kx, (B, S, D), jnp.float32)
    memory = jax.random.normal(km, (B, Sm, D), jnp.float32)

    tgt_mask = jnp.tril(jnp.ones((S, S), jnp.float32))   # causal self-attn mask
    src_mask = jnp.ones((S, Sm), jnp.float32)            # full cross-attn mask

    fwd = jax.jit(decoder_layer, static_argnames=("n_heads", "block_b"))
    out = jax.block_until_ready(fwd(x, memory, src_mask, tgt_mask, params, n_heads=H))

    ref = _ref_forward(x, memory, src_mask, tgt_mask, params, H)
    assert out.shape == (B, S, D)
    # bf16 MXU operands in the kernel vs f32 reference -> slightly loose tol.
    assert jnp.allclose(out, ref, rtol=5e-2, atol=5e-2), "mismatch vs pure-JAX reference"

    print("KERNEL_OK")
</pallas_src>

<mosaic_0001>
module attributes {stable_mosaic.version = 11 : i64} {
  func.func @decoder_layer_kernel(%arg0: i32, %arg1: memref<1x8x128xf32, #tpu.memory_space<vmem>>, %arg2: memref<1x8x128xf32, #tpu.memory_space<vmem>>, %arg3: memref<8x8xf32, #tpu.memory_space<vmem>>, %arg4: memref<8x8xf32, #tpu.memory_space<vmem>>, %arg5: memref<10x128xf32, #tpu.memory_space<vmem>>, %arg6: memref<128x384xbf16, #tpu.memory_space<vmem>>, %arg7: memref<1x384xf32, #tpu.memory_space<vmem>>, %arg8: memref<128x128xbf16, #tpu.memory_space<vmem>>, %arg9: memref<128x128xbf16, #tpu.memory_space<vmem>>, %arg10: memref<128x256xbf16, #tpu.memory_space<vmem>>, %arg11: memref<1x256xf32, #tpu.memory_space<vmem>>, %arg12: memref<128x128xbf16, #tpu.memory_space<vmem>>, %arg13: memref<128x256xbf16, #tpu.memory_space<vmem>>, %arg14: memref<1x256xf32, #tpu.memory_space<vmem>>, %arg15: memref<256x128xbf16, #tpu.memory_space<vmem>>, %arg16: memref<1x8x128xf32, #tpu.memory_space<vmem>>) attributes {dimension_semantics = [#tpu.dimension_semantics<parallel>], iteration_bounds = array<i64: 2>, scalar_prefetch = 0 : i64, scratch_operands = 0 : i64, tpu.core_type = #tpu.core_type<tc>, window_params = [{transform_indices = @transform_0, window_bounds = array<i64: 1, 8, 128>}, {transform_indices = @transform_1, window_bounds = array<i64: 1, 8, 128>}, {pipeline_mode = #tpu.pipeline_mode<synchronous>, transform_indices = @transform_2, window_bounds = array<i64: 8, 8>}, {pipeline_mode = #tpu.pipeline_mode<synchronous>, transform_indices = @transform_3, window_bounds = array<i64: 8, 8>}, {pipeline_mode = #tpu.pipeline_mode<synchronous>, transform_indices = @transform_4, window_bounds = array<i64: 10, 128>}, {pipeline_mode = #tpu.pipeline_mode<synchronous>, transform_indices = @transform_5, window_bounds = array<i64: 128, 384>}, {pipeline_mode = #tpu.pipeline_mode<synchronous>, transform_indices = @transform_6, window_bounds = array<i64: 1, 384>}, {pipeline_mode = #tpu.pipeline_mode<synchronous>, transform_indices = @transform_7, window_bounds = array<i64: 128, 128>}, {pipeline_mode = #tpu.pipeline_mode<synchronous>, transform_indices = @transform_8, window_bounds = array<i64: 128, 128>}, {pipeline_mode = #tpu.pipeline_mode<synchronous>, transform_indices = @transform_9, window_bounds = array<i64: 128, 256>}, {pipeline_mode = #tpu.pipeline_mode<synchronous>, transform_indices = @transform_10, window_bounds = array<i64: 1, 256>}, {pipeline_mode = #tpu.pipeline_mode<synchronous>, transform_indices = @transform_11, window_bounds = array<i64: 128, 128>}, {pipeline_mode = #tpu.pipeline_mode<synchronous>, transform_indices = @transform_12, window_bounds = array<i64: 128, 256>}, {pipeline_mode = #tpu.pipeline_mode<synchronous>, transform_indices = @transform_13, window_bounds = array<i64: 1, 256>}, {pipeline_mode = #tpu.pipeline_mode<synchronous>, transform_indices = @transform_14, window_bounds = array<i64: 256, 128>}, {transform_indices = @transform_15, window_bounds = array<i64: 1, 8, 128>}]} {
    %c0 = arith.constant 0 : index
    %c0_0 = arith.constant 0 : index
    %c0_1 = arith.constant 0 : index
    %0 = vector.load %arg1[%c0, %c0_0, %c0_1] : memref<1x8x128xf32, #tpu.memory_space<vmem>>, vector<1x8x128xf32>
    %1 = vector.shape_cast %0 : vector<1x8x128xf32> to vector<8x128xf32>
    %c0_2 = arith.constant 0 : index
    %c0_3 = arith.constant 0 : index
    %c0_4 = arith.constant 0 : index
    %2 = vector.load %arg2[%c0_2, %c0_3, %c0_4] : memref<1x8x128xf32, #tpu.memory_space<vmem>>, vector<1x8x128xf32>
    %3 = vector.shape_cast %2 : vector<1x8x128xf32> to vector<8x128xf32>
    %c0_5 = arith.constant 0 : index
    %c0_6 = arith.constant 0 : index
    %4 = vector.load %arg3[%c0_5, %c0_6] : memref<8x8xf32, #tpu.memory_space<vmem>>, vector<8x8xf32>
    %c0_7 = arith.constant 0 : index
    %c0_8 = arith.constant 0 : index
    %5 = vector.load %arg4[%c0_7, %c0_8] : memref<8x8xf32, #tpu.memory_space<vmem>>, vector<8x8xf32>
    %c0_9 = arith.constant 0 : index
    %c0_10 = arith.constant 0 : index
    %6 = vector.load %arg5[%c0_9, %c0_10] : memref<10x128xf32, #tpu.memory_space<vmem>>, vector<10x128xf32>
    %7 = vector.extract_strided_slice %6 {offsets = [0, 0], sizes = [1, 128], strides = [1, 1]} : vector<10x128xf32> to vector<1x128xf32>
    %8 = vector.extract_strided_slice %6 {offsets = [1, 0], sizes = [1, 128], strides = [1, 1]} : vector<10x128xf32> to vector<1x128xf32>
    %9 = vector.extract_strided_slice %6 {offsets = [2, 0], sizes = [1, 128], strides = [1, 1]} : vector<10x128xf32> to vector<1x128xf32>
    %10 = vector.extract_strided_slice %6 {offsets = [3, 0], sizes = [1, 128], strides = [1, 1]} : vector<10x128xf32> to vector<1x128xf32>
    %11 = vector.extract_strided_slice %6 {offsets = [4, 0], sizes = [1, 128], strides = [1, 1]} : vector<10x128xf32> to vector<1x128xf32>
    %12 = vector.extract_strided_slice %6 {offsets = [5, 0], sizes = [1, 128], strides = [1, 1]} : vector<10x128xf32> to vector<1x128xf32>
    %13 = vector.extract_strided_slice %6 {offsets = [6, 0], sizes = [1, 128], strides = [1, 1]} : vector<10x128xf32> to vector<1x128xf32>
    %14 = vector.extract_strided_slice %6 {offsets = [7, 0], sizes = [1, 128], strides = [1, 1]} : vector<10x128xf32> to vector<1x128xf32>
    %15 = vector.extract_strided_slice %6 {offsets = [8, 0], sizes = [1, 128], strides = [1, 1]} : vector<10x128xf32> to vector<1x128xf32>
    %16 = vector.extract_strided_slice %6 {offsets = [9, 0], sizes = [1, 128], strides = [1, 1]} : vector<10x128xf32> to vector<1x128xf32>
    %cst = arith.constant dense<0.000000e+00> : vector<8xf32>
    %17 = vector.multi_reduction <add>, %1, %cst [1] : vector<8x128xf32> to vector<8xf32>
    %18 = vector.shape_cast %17 : vector<8xf32> to vector<8x1xf32>
    %cst_11 = arith.constant 1.280000e+02 : f32
    %19 = vector.broadcast %cst_11 : f32 to vector<8x1xf32>
    %20 = arith.divf %18, %19 : vector<8x1xf32>
    %21 = vector.broadcast %20 : vector<8x1xf32> to vector<8x128xf32>
    %22 = arith.subf %1, %21 : vector<8x128xf32>
    %23 = arith.mulf %22, %22 : vector<8x128xf32>
    %cst_12 = arith.constant dense<0.000000e+00> : vector<8xf32>
    %24 = vector.multi_reduction <add>, %23, %cst_12 [1] : vector<8x128xf32> to vector<8xf32>
    %25 = vector.shape_cast %24 : vector<8xf32> to vector<8x1xf32>
    %cst_13 = arith.constant 0.00787401571 : f32
    %26 = vector.broadcast %cst_13 : f32 to vector<8x1xf32>
    %27 = arith.mulf %25, %26 : vector<8x1xf32>
    %28 = math.sqrt %27 : vector<8x1xf32>
    %cst_14 = arith.constant 9.99999997E-7 : f32
    %29 = vector.broadcast %cst_14 : f32 to vector<8x1xf32>
    %30 = arith.addf %28, %29 : vector<8x1xf32>
    %31 = math.rsqrt %30 : vector<8x1xf32>
    %32 = vector.broadcast %31 : vector<8x1xf32> to vector<8x128xf32>
    %33 = arith.mulf %22, %32 : vector<8x128xf32>
    %34 = vector.broadcast %7 : vector<1x128xf32> to vector<8x128xf32>
    %35 = arith.mulf %34, %33 : vector<8x128xf32>
    %36 = vector.broadcast %8 : vector<1x128xf32> to vector<8x128xf32>
    %37 = arith.addf %35, %36 : vector<8x128xf32>
    %38 = arith.truncf %37 : vector<8x128xf32> to vector<8x128xbf16>
    %c0_15 = arith.constant 0 : index
    %c0_16 = arith.constant 0 : index
    %39 = vector.load %arg6[%c0_15, %c0_16] : memref<128x384xbf16, #tpu.memory_space<vmem>>, vector<128x384xbf16>
    %cst_17 = arith.constant dense<0.000000e+00> : vector<8x384xf32>
    %40 = tpu.matmul %38, %39, %cst_17 {dimension_numbers = #tpu.dot_dimension_numbers<[1], [0], [0], [1], [0, 0, 1, 1], [], []>} : vector<8x128xbf16>, vector<128x384xbf16>, vector<8x384xf32> -> vector<8x384xf32>
    %c0_18 = arith.constant 0 : index
    %c0_19 = arith.constant 0 : index
    %41 = vector.load %arg7[%c0_18, %c0_19] : memref<1x384xf32, #tpu.memory_space<vmem>>, vector<1x384xf32>
    %42 = vector.broadcast %41 : vector<1x384xf32> to vector<8x384xf32>
    %43 = arith.addf %40, %42 : vector<8x384xf32>
    %44 = vector.extract_strided_slice %43 {offsets = [0, 0], sizes = [8, 128], strides = [1, 1]} : vector<8x384xf32> to vector<8x128xf32>
    %45 = vector.extract_strided_slice %43 {offsets = [0, 128], sizes = [8, 128], strides = [1, 1]} : vector<8x384xf32> to vector<8x128xf32>
    %46 = vector.extract_strided_slice %43 {offsets = [0, 256], sizes = [8, 128], strides = [1, 1]} : vector<8x384xf32> to vector<8x128xf32>
    %47 = vector.extract_strided_slice %44 {offsets = [0, 0], sizes = [8, 32], strides = [1, 1]} : vector<8x128xf32> to vector<8x32xf32>
    %48 = arith.truncf %47 : vector<8x32xf32> to vector<8x32xbf16>
    %49 = vector.extract_strided_slice %45 {offsets = [0, 0], sizes = [8, 32], strides = [1, 1]} : vector<8x128xf32> to vector<8x32xf32>
    %50 = arith.truncf %49 : vector<8x32xf32> to vector<8x32xbf16>
    %51 = vector.extract_strided_slice %46 {offsets = [0, 0], sizes = [8, 32], strides = [1, 1]} : vector<8x128xf32> to vector<8x32xf32>
    %52 = arith.truncf %51 : vector<8x32xf32> to vector<8x32xbf16>
    %cst_20 = arith.constant dense<0.000000e+00> : vector<8x8xf32>
    %53 = tpu.matmul %48, %50, %cst_20 {dimension_numbers = #tpu.dot_dimension_numbers<[1], [1], [0], [0], [0, 0, 1, 0], [], []>} : vector<8x32xbf16>, vector<8x32xbf16>, vector<8x8xf32> -> vector<8x8xf32>
    %54 = arith.addf %53, %4 : vector<8x8xf32>
    %cst_21 = arith.constant dense<0xFF800000> : vector<8xf32>
    %55 = vector.multi_reduction <maximumf>, %54, %cst_21 [1] : vector<8x8xf32> to vector<8xf32>
    %56 = vector.shape_cast %55 : vector<8xf32> to vector<8x1xf32>
    %57 = vector.broadcast %56 : vector<8x1xf32> to vector<8x8xf32>
    %58 = arith.subf %54, %57 : vector<8x8xf32>
    %59 = math.exp %58 : vector<8x8xf32>
    %cst_22 = arith.constant dense<0.000000e+00> : vector<8xf32>
    %60 = vector.multi_reduction <add>, %59, %cst_22 [1] : vector<8x8xf32> to vector<8xf32>
    %61 = vector.shape_cast %60 : vector<8xf32> to vector<8x1xf32>
    %62 = tpu.reciprocal %61 {approx = true} : vector<8x1xf32> -> vector<8x1xf32>
    %63 = vector.broadcast %62 : vector<8x1xf32> to vector<8x8xf32>
    %64 = arith.mulf %59, %63 : vector<8x8xf32>
    %65 = arith.truncf %64 : vector<8x8xf32> to vector<8x8xbf16>
    %cst_23 = arith.constant dense<0.000000e+00> : vector<8x32xf32>
    %66 = tpu.matmul %65, %52, %cst_23 {dimension_numbers = #tpu.dot_dimension_numbers<[1], [0], [0], [1], [0, 0, 1, 1], [], []>} : vector<8x8xbf16>, vector<8x32xbf16>, vector<8x32xf32> -> vector<8x32xf32>
    %67 = vector.extract_strided_slice %44 {offsets = [0, 32], sizes = [8, 32], strides = [1, 1]} : vector<8x128xf32> to vector<8x32xf32>
    %68 = arith.truncf %67 : vector<8x32xf32> to vector<8x32xbf16>
    %69 = vector.extract_strided_slice %45 {offsets = [0, 32], sizes = [8, 32], strides = [1, 1]} : vector<8x128xf32> to vector<8x32xf32>
    %70 = arith.truncf %69 : vector<8x32xf32> to vector<8x32xbf16>
    %71 = vector.extract_strided_slice %46 {offsets = [0, 32], sizes = [8, 32], strides = [1, 1]} : vector<8x128xf32> to vector<8x32xf32>
    %72 = arith.truncf %71 : vector<8x32xf32> to vector<8x32xbf16>
    %cst_24 = arith.constant dense<0.000000e+00> : vector<8x8xf32>
    %73 = tpu.matmul %68, %70, %cst_24 {dimension_numbers = #tpu.dot_dimension_numbers<[1], [1], [0], [0], [0, 0, 1, 0], [], []>} : vector<8x32xbf16>, vector<8x32xbf16>, vector<8x8xf32> -> vector<8x8xf32>
    %74 = arith.addf %73, %4 : vector<8x8xf32>
    %cst_25 = arith.constant dense<0xFF800000> : vector<8xf32>
    %75 = vector.multi_reduction <maximumf>, %74, %cst_25 [1] : vector<8x8xf32> to vector<8xf32>
    %76 = vector.shape_cast %75 : vector<8xf32> to vector<8x1xf32>
    %77 = vector.broadcast %76 : vector<8x1xf32> to vector<8x8xf32>
    %78 = arith.subf %74, %77 : vector<8x8xf32>
    %79 = math.exp %78 : vector<8x8xf32>
    %cst_26 = arith.constant dense<0.000000e+00> : vector<8xf32>
    %80 = vector.multi_reduction <add>, %79, %cst_26 [1] : vector<8x8xf32> to vector<8xf32>
    %81 = vector.shape_cast %80 : vector<8xf32> to vector<8x1xf32>
    %82 = tpu.reciprocal %81 {approx = true} : vector<8x1xf32> -> vector<8x1xf32>
    %83 = vector.broadcast %82 : vector<8x1xf32> to vector<8x8xf32>
    %84 = arith.mulf %79, %83 : vector<8x8xf32>
    %85 = arith.truncf %84 : vector<8x8xf32> to vector<8x8xbf16>
    %cst_27 = arith.constant dense<0.000000e+00> : vector<8x32xf32>
    %86 = tpu.matmul %85, %72, %cst_27 {dimension_numbers = #tpu.dot_dimension_numbers<[1], [0], [0], [1], [0, 0, 1, 1], [], []>} : vector<8x8xbf16>, vector<8x32xbf16>, vector<8x32xf32> -> vector<8x32xf32>
    %87 = vector.extract_strided_slice %44 {offsets = [0, 64], sizes = [8, 32], strides = [1, 1]} : vector<8x128xf32> to vector<8x32xf32>
    %88 = arith.truncf %87 : vector<8x32xf32> to vector<8x32xbf16>
    %89 = vector.extract_strided_slice %45 {offsets = [0, 64], sizes = [8, 32], strides = [1, 1]} : vector<8x128xf32> to vector<8x32xf32>
    %90 = arith.truncf %89 : vector<8x32xf32> to vector<8x32xbf16>
    %91 = vector.extract_strided_slice %46 {offsets = [0, 64], sizes = [8, 32], strides = [1, 1]} : vector<8x128xf32> to vector<8x32xf32>
    %92 = arith.truncf %91 : vector<8x32xf32> to vector<8x32xbf16>
    %cst_28 = arith.constant dense<0.000000e+00> : vector<8x8xf32>
    %93 = tpu.matmul %88, %90, %cst_28 {dimension_numbers = #tpu.dot_dimension_numbers<[1], [1], [0], [0], [0, 0, 1, 0], [], []>} : vector<8x32xbf16>, vector<8x32xbf16>, vector<8x8xf32> -> vector<8x8xf32>
    %94 = arith.addf %93, %4 : vector<8x8xf32>
    %cst_29 = arith.constant dense<0xFF800000> : vector<8xf32>
    %95 = vector.multi_reduction <maximumf>, %94, %cst_29 [1] : vector<8x8xf32> to vector<8xf32>
    %96 = vector.shape_cast %95 : vector<8xf32> to vector<8x1xf32>
    %97 = vector.broadcast %96 : vector<8x1xf32> to vector<8x8xf32>
    %98 = arith.subf %94, %97 : vector<8x8xf32>
    %99 = math.exp %98 : vector<8x8xf32>
    %cst_30 = arith.constant dense<0.000000e+00> : vector<8xf32>
    %100 = vector.multi_reduction <add>, %99, %cst_30 [1] : vector<8x8xf32> to vector<8xf32>
    %101 = vector.shape_cast %100 : vector<8xf32> to vector<8x1xf32>
    %102 = tpu.reciprocal %101 {approx = true} : vector<8x1xf32> -> vector<8x1xf32>
    %103 = vector.broadcast %102 : vector<8x1xf32> to vector<8x8xf32>
    %104 = arith.mulf %99, %103 : vector<8x8xf32>
    %105 = arith.truncf %104 : vector<8x8xf32> to vector<8x8xbf16>
    %cst_31 = arith.constant dense<0.000000e+00> : vector<8x32xf32>
    %106 = tpu.matmul %105, %92, %cst_31 {dimension_numbers = #tpu.dot_dimension_numbers<[1], [0], [0], [1], [0, 0, 1, 1], [], []>} : vector<8x8xbf16>, vector<8x32xbf16>, vector<8x32xf32> -> vector<8x32xf32>
    %107 = vector.extract_strided_slice %44 {offsets = [0, 96], sizes = [8, 32], strides = [1, 1]} : vector<8x128xf32> to vector<8x32xf32>
    %108 = arith.truncf %107 : vector<8x32xf32> to vector<8x32xbf16>
    %109 = vector.extract_strided_slice %45 {offsets = [0, 96], sizes = [8, 32], strides = [1, 1]} : vector<8x128xf32> to vector<8x32xf32>
    %110 = arith.truncf %109 : vector<8x32xf32> to vector<8x32xbf16>
    %111 = vector.extract_strided_slice %46 {offsets = [0, 96], sizes = [8, 32], strides = [1, 1]} : vector<8x128xf32> to vector<8x32xf32>
    %112 = arith.truncf %111 : vector<8x32xf32> to vector<8x32xbf16>
    %cst_32 = arith.constant dense<0.000000e+00> : vector<8x8xf32>
    %113 = tpu.matmul %108, %110, %cst_32 {dimension_numbers = #tpu.dot_dimension_numbers<[1], [1], [0], [0], [0, 0, 1, 0], [], []>} : vector<8x32xbf16>, vector<8x32xbf16>, vector<8x8xf32> -> vector<8x8xf32>
    %114 = arith.addf %113, %4 : vector<8x8xf32>
    %cst_33 = arith.constant dense<0xFF800000> : vector<8xf32>
    %115 = vector.multi_reduction <maximumf>, %114, %cst_33 [1] : vector<8x8xf32> to vector<8xf32>
    %116 = vector.shape_cast %115 : vector<8xf32> to vector<8x1xf32>
    %117 = vector.broadcast %116 : vector<8x1xf32> to vector<8x8xf32>
    %118 = arith.subf %114, %117 : vector<8x8xf32>
    %119 = math.exp %118 : vector<8x8xf32>
    %cst_34 = arith.constant dense<0.000000e+00> : vector<8xf32>
    %120 = vector.multi_reduction <add>, %119, %cst_34 [1] : vector<8x8xf32> to vector<8xf32>
    %121 = vector.shape_cast %120 : vector<8xf32> to vector<8x1xf32>
    %122 = tpu.reciprocal %121 {approx = true} : vector<8x1xf32> -> vector<8x1xf32>
    %123 = vector.broadcast %122 : vector<8x1xf32> to vector<8x8xf32>
    %124 = arith.mulf %119, %123 : vector<8x8xf32>
    %125 = arith.truncf %124 : vector<8x8xf32> to vector<8x8xbf16>
    %cst_35 = arith.constant dense<0.000000e+00> : vector<8x32xf32>
    %126 = tpu.matmul %125, %112, %cst_35 {dimension_numbers = #tpu.dot_dimension_numbers<[1], [0], [0], [1], [0, 0, 1, 1], [], []>} : vector<8x8xbf16>, vector<8x32xbf16>, vector<8x32xf32> -> vector<8x32xf32>
    %127 = tpu.concatenate %66, %86, %106, %126 in 1 : vector<8x32xf32>, vector<8x32xf32>, vector<8x32xf32>, vector<8x32xf32> -> vector<8x128xf32>
    %128 = arith.truncf %127 : vector<8x128xf32> to vector<8x128xbf16>
    %c0_36 = arith.constant 0 : index
    %c0_37 = arith.constant 0 : index
    %129 = vector.load %arg8[%c0_36, %c0_37] : memref<128x128xbf16, #tpu.memory_space<vmem>>, vector<128x128xbf16>
    %cst_38 = arith.constant dense<0.000000e+00> : vector<8x128xf32>
    %130 = tpu.matmul %128, %129, %cst_38 {dimension_numbers = #tpu.dot_dimension_numbers<[1], [0], [0], [1], [0, 0, 1, 1], [], []>} : vector<8x128xbf16>, vector<128x128xbf16>, vector<8x128xf32> -> vector<8x128xf32>
    %131 = vector.broadcast %13 : vector<1x128xf32> to vector<8x128xf32>
    %132 = arith.addf %130, %131 : vector<8x128xf32>
    %133 = arith.addf %1, %132 : vector<8x128xf32>
    %cst_39 = arith.constant dense<0.000000e+00> : vector<8xf32>
    %134 = vector.multi_reduction <add>, %133, %cst_39 [1] : vector<8x128xf32> to vector<8xf32>
    %135 = vector.shape_cast %134 : vector<8xf32> to vector<8x1xf32>
    %cst_40 = arith.constant 1.280000e+02 : f32
    %136 = vector.broadcast %cst_40 : f32 to vector<8x1xf32>
    %137 = arith.divf %135, %136 : vector<8x1xf32>
    %138 = vector.broadcast %137 : vector<8x1xf32> to vector<8x128xf32>
    %139 = arith.subf %133, %138 : vector<8x128xf32>
    %140 = arith.mulf %139, %139 : vector<8x128xf32>
    %cst_41 = arith.constant dense<0.000000e+00> : vector<8xf32>
    %141 = vector.multi_reduction <add>, %140, %cst_41 [1] : vector<8x128xf32> to vector<8xf32>
    %142 = vector.shape_cast %141 : vector<8xf32> to vector<8x1xf32>
    %cst_42 = arith.constant 0.00787401571 : f32
    %143 = vector.broadcast %cst_42 : f32 to vector<8x1xf32>
    %144 = arith.mulf %142, %143 : vector<8x1xf32>
    %145 = math.sqrt %144 : vector<8x1xf32>
    %cst_43 = arith.constant 9.99999997E-7 : f32
    %146 = vector.broadcast %cst_43 : f32 to vector<8x1xf32>
    %147 = arith.addf %145, %146 : vector<8x1xf32>
    %148 = math.rsqrt %147 : vector<8x1xf32>
    %149 = vector.broadcast %148 : vector<8x1xf32> to vector<8x128xf32>
    %150 = arith.mulf %139, %149 : vector<8x128xf32>
    %151 = vector.broadcast %9 : vector<1x128xf32> to vector<8x128xf32>
    %152 = arith.mulf %151, %150 : vector<8x128xf32>
    %153 = vector.broadcast %10 : vector<1x128xf32> to vector<8x128xf32>
    %154 = arith.addf %152, %153 : vector<8x128xf32>
    %155 = arith.truncf %154 : vector<8x128xf32> to vector<8x128xbf16>
    %c0_44 = arith.constant 0 : index
    %c0_45 = arith.constant 0 : index
    %156 = vector.load %arg9[%c0_44, %c0_45] : memref<128x128xbf16, #tpu.memory_space<vmem>>, vector<128x128xbf16>
    %cst_46 = arith.constant dense<0.000000e+00> : vector<8x128xf32>
    %157 = tpu.matmul %155, %156, %cst_46 {dimension_numbers = #tpu.dot_dimension_numbers<[1], [0], [0], [1], [0, 0, 1, 1], [], []>} : vector<8x128xbf16>, vector<128x128xbf16>, vector<8x128xf32> -> vector<8x128xf32>
    %158 = vector.broadcast %14 : vector<1x128xf32> to vector<8x128xf32>
    %159 = arith.addf %157, %158 : vector<8x128xf32>
    %160 = arith.truncf %3 : vector<8x128xf32> to vector<8x128xbf16>
    %c0_47 = arith.constant 0 : index
    %c0_48 = arith.constant 0 : index
    %161 = vector.load %arg10[%c0_47, %c0_48] : memref<128x256xbf16, #tpu.memory_space<vmem>>, vector<128x256xbf16>
    %cst_49 = arith.constant dense<0.000000e+00> : vector<8x256xf32>
    %162 = tpu.matmul %160, %161, %cst_49 {dimension_numbers = #tpu.dot_dimension_numbers<[1], [0], [0], [1], [0, 0, 1, 1], [], []>} : vector<8x128xbf16>, vector<128x256xbf16>, vector<8x256xf32> -> vector<8x256xf32>
    %c0_50 = arith.constant 0 : index
    %c0_51 = arith.constant 0 : index
    %163 = vector.load %arg11[%c0_50, %c0_51] : memref<1x256xf32, #tpu.memory_space<vmem>>, vector<1x256xf32>
    %164 = vector.broadcast %163 : vector<1x256xf32> to vector<8x256xf32>
    %165 = arith.addf %162, %164 : vector<8x256xf32>
    %166 = vector.extract_strided_slice %165 {offsets = [0, 0], sizes = [8, 128], strides = [1, 1]} : vector<8x256xf32> to vector<8x128xf32>
    %167 = vector.extract_strided_slice %165 {offsets = [0, 128], sizes = [8, 128], strides = [1, 1]} : vector<8x256xf32> to vector<8x128xf32>
    %168 = vector.extract_strided_slice %159 {offsets = [0, 0], sizes = [8, 32], strides = [1, 1]} : vector<8x128xf32> to vector<8x32xf32>
    %169 = arith.truncf %168 : vector<8x32xf32> to vector<8x32xbf16>
    %170 = vector.extract_strided_slice %166 {offsets = [0, 0], sizes = [8, 32], strides = [1, 1]} : vector<8x128xf32> to vector<8x32xf32>
    %171 = arith.truncf %170 : vector<8x32xf32> to vector<8x32xbf16>
    %172 = vector.extract_strided_slice %167 {offsets = [0, 0], sizes = [8, 32], strides = [1, 1]} : vector<8x128xf32> to vector<8x32xf32>
    %173 = arith.truncf %172 : vector<8x32xf32> to vector<8x32xbf16>
    %cst_52 = arith.constant dense<0.000000e+00> : vector<8x8xf32>
    %174 = tpu.matmul %169, %171, %cst_52 {dimension_numbers = #tpu.dot_dimension_numbers<[1], [1], [0], [0], [0, 0, 1, 0], [], []>} : vector<8x32xbf16>, vector<8x32xbf16>, vector<8x8xf32> -> vector<8x8xf32>
    %175 = arith.addf %174, %5 : vector<8x8xf32>
    %cst_53 = arith.constant dense<0xFF800000> : vector<8xf32>
    %176 = vector.multi_reduction <maximumf>, %175, %cst_53 [1] : vector<8x8xf32> to vector<8xf32>
    %177 = vector.shape_cast %176 : vector<8xf32> to vector<8x1xf32>
    %178 = vector.broadcast %177 : vector<8x1xf32> to vector<8x8xf32>
    %179 = arith.subf %175, %178 : vector<8x8xf32>
    %180 = math.exp %179 : vector<8x8xf32>
    %cst_54 = arith.constant dense<0.000000e+00> : vector<8xf32>
    %181 = vector.multi_reduction <add>, %180, %cst_54 [1] : vector<8x8xf32> to vector<8xf32>
    %182 = vector.shape_cast %181 : vector<8xf32> to vector<8x1xf32>
    %183 = tpu.reciprocal %182 {approx = true} : vector<8x1xf32> -> vector<8x1xf32>
    %184 = vector.broadcast %183 : vector<8x1xf32> to vector<8x8xf32>
    %185 = arith.mulf %180, %184 : vector<8x8xf32>
    %186 = arith.truncf %185 : vector<8x8xf32> to vector<8x8xbf16>
    %cst_55 = arith.constant dense<0.000000e+00> : vector<8x32xf32>
    %187 = tpu.matmul %186, %173, %cst_55 {dimension_numbers = #tpu.dot_dimension_numbers<[1], [0], [0], [1], [0, 0, 1, 1], [], []>} : vector<8x8xbf16>, vector<8x32xbf16>, vector<8x32xf32> -> vector<8x32xf32>
    %188 = vector.extract_strided_slice %159 {offsets = [0, 32], sizes = [8, 32], strides = [1, 1]} : vector<8x128xf32> to vector<8x32xf32>
    %189 = arith.truncf %188 : vector<8x32xf32> to vector<8x32xbf16>
    %190 = vector.extract_strided_slice %166 {offsets = [0, 32], sizes = [8, 32], strides = [1, 1]} : vector<8x128xf32> to vector<8x32xf32>
    %191 = arith.truncf %190 : vector<8x32xf32> to vector<8x32xbf16>
    %192 = vector.extract_strided_slice %167 {offsets = [0, 32], sizes = [8, 32], strides = [1, 1]} : vector<8x128xf32> to vector<8x32xf32>
    %193 = arith.truncf %192 : vector<8x32xf32> to vector<8x32xbf16>
    %cst_56 = arith.constant dense<0.000000e+00> : vector<8x8xf32>
    %194 = tpu.matmul %189, %191, %cst_56 {dimension_numbers = #tpu.dot_dimension_numbers<[1], [1], [0], [0], [0, 0, 1, 0], [], []>} : vector<8x32xbf16>, vector<8x32xbf16>, vector<8x8xf32> -> vector<8x8xf32>
    %195 = arith.addf %194, %5 : vector<8x8xf32>
    %cst_57 = arith.constant dense<0xFF800000> : vector<8xf32>
    %196 = vector.multi_reduction <maximumf>, %195, %cst_57 [1] : vector<8x8xf32> to vector<8xf32>
    %197 = vector.shape_cast %196 : vector<8xf32> to vector<8x1xf32>
    %198 = vector.broadcast %197 : vector<8x1xf32> to vector<8x8xf32>
    %199 = arith.subf %195, %198 : vector<8x8xf32>
    %200 = math.exp %199 : vector<8x8xf32>
    %cst_58 = arith.constant dense<0.000000e+00> : vector<8xf32>
    %201 = vector.multi_reduction <add>, %200, %cst_58 [1] : vector<8x8xf32> to vector<8xf32>
    %202 = vector.shape_cast %201 : vector<8xf32> to vector<8x1xf32>
    %203 = tpu.reciprocal %202 {approx = true} : vector<8x1xf32> -> vector<8x1xf32>
    %204 = vector.broadcast %203 : vector<8x1xf32> to vector<8x8xf32>
    %205 = arith.mulf %200, %204 : vector<8x8xf32>
    %206 = arith.truncf %205 : vector<8x8xf32> to vector<8x8xbf16>
    %cst_59 = arith.constant dense<0.000000e+00> : vector<8x32xf32>
    %207 = tpu.matmul %206, %193, %cst_59 {dimension_numbers = #tpu.dot_dimension_numbers<[1], [0], [0], [1], [0, 0, 1, 1], [], []>} : vector<8x8xbf16>, vector<8x32xbf16>, vector<8x32xf32> -> vector<8x32xf32>
    %208 = vector.extract_strided_slice %159 {offsets = [0, 64], sizes = [8, 32], strides = [1, 1]} : vector<8x128xf32> to vector<8x32xf32>
    %209 = arith.truncf %208 : vector<8x32xf32> to vector<8x32xbf16>
    %210 = vector.extract_strided_slice %166 {offsets = [0, 64], sizes = [8, 32], strides = [1, 1]} : vector<8x128xf32> to vector<8x32xf32>
    %211 = arith.truncf %210 : vector<8x32xf32> to vector<8x32xbf16>
    %212 = vector.extract_strided_slice %167 {offsets = [0, 64], sizes = [8, 32], strides = [1, 1]} : vector<8x128xf32> to vector<8x32xf32>
    %213 = arith.truncf %212 : vector<8x32xf32> to vector<8x32xbf16>
    %cst_60 = arith.constant dense<0.000000e+00> : vector<8x8xf32>
    %214 = tpu.matmul %209, %211, %cst_60 {dimension_numbers = #tpu.dot_dimension_numbers<[1], [1], [0], [0], [0, 0, 1, 0], [], []>} : vector<8x32xbf16>, vector<8x32xbf16>, vector<8x8xf32> -> vector<8x8xf32>
    %215 = arith.addf %214, %5 : vector<8x8xf32>
    %cst_61 = arith.constant dense<0xFF800000> : vector<8xf32>
    %216 = vector.multi_reduction <maximumf>, %215, %cst_61 [1] : vector<8x8xf32> to vector<8xf32>
    %217 = vector.shape_cast %216 : vector<8xf32> to vector<8x1xf32>
    %218 = vector.broadcast %217 : vector<8x1xf32> to vector<8x8xf32>
    %219 = arith.subf %215, %218 : vector<8x8xf32>
    %220 = math.exp %219 : vector<8x8xf32>
    %cst_62 = arith.constant dense<0.000000e+00> : vector<8xf32>
    %221 = vector.multi_reduction <add>, %220, %cst_62 [1] : vector<8x8xf32> to vector<8xf32>
    %222 = vector.shape_cast %221 : vector<8xf32> to vector<8x1xf32>
    %223 = tpu.reciprocal %222 {approx = true} : vector<8x1xf32> -> vector<8x1xf32>
    %224 = vector.broadcast %223 : vector<8x1xf32> to vector<8x8xf32>
    %225 = arith.mulf %220, %224 : vector<8x8xf32>
    %226 = arith.truncf %225 : vector<8x8xf32> to vector<8x8xbf16>
    %cst_63 = arith.constant dense<0.000000e+00> : vector<8x32xf32>
    %227 = tpu.matmul %226, %213, %cst_63 {dimension_numbers = #tpu.dot_dimension_numbers<[1], [0], [0], [1], [0, 0, 1, 1], [], []>} : vector<8x8xbf16>, vector<8x32xbf16>, vector<8x32xf32> -> vector<8x32xf32>
    %228 = vector.extract_strided_slice %159 {offsets = [0, 96], sizes = [8, 32], strides = [1, 1]} : vector<8x128xf32> to vector<8x32xf32>
    %229 = arith.truncf %228 : vector<8x32xf32> to vector<8x32xbf16>
    %230 = vector.extract_strided_slice %166 {offsets = [0, 96], sizes = [8, 32], strides = [1, 1]} : vector<8x128xf32> to vector<8x32xf32>
    %231 = arith.truncf %230 : vector<8x32xf32> to vector<8x32xbf16>
    %232 = vector.extract_strided_slice %167 {offsets = [0, 96], sizes = [8, 32], strides = [1, 1]} : vector<8x128xf32> to vector<8x32xf32>
    %233 = arith.truncf %232 : vector<8x32xf32> to vector<8x32xbf16>
    %cst_64 = arith.constant dense<0.000000e+00> : vector<8x8xf32>
    %234 = tpu.matmul %229, %231, %cst_64 {dimension_numbers = #tpu.dot_dimension_numbers<[1], [1], [0], [0], [0, 0, 1, 0], [], []>} : vector<8x32xbf16>, vector<8x32xbf16>, vector<8x8xf32> -> vector<8x8xf32>
    %235 = arith.addf %234, %5 : vector<8x8xf32>
    %cst_65 = arith.constant dense<0xFF800000> : vector<8xf32>
    %236 = vector.multi_reduction <maximumf>, %235, %cst_65 [1] : vector<8x8xf32> to vector<8xf32>
    %237 = vector.shape_cast %236 : vector<8xf32> to vector<8x1xf32>
    %238 = vector.broadcast %237 : vector<8x1xf32> to vector<8x8xf32>
    %239 = arith.subf %235, %238 : vector<8x8xf32>
    %240 = math.exp %239 : vector<8x8xf32>
    %cst_66 = arith.constant dense<0.000000e+00> : vector<8xf32>
    %241 = vector.multi_reduction <add>, %240, %cst_66 [1] : vector<8x8xf32> to vector<8xf32>
    %242 = vector.shape_cast %241 : vector<8xf32> to vector<8x1xf32>
    %243 = tpu.reciprocal %242 {approx = true} : vector<8x1xf32> -> vector<8x1xf32>
    %244 = vector.broadcast %243 : vector<8x1xf32> to vector<8x8xf32>
    %245 = arith.mulf %240, %244 : vector<8x8xf32>
    %246 = arith.truncf %245 : vector<8x8xf32> to vector<8x8xbf16>
    %cst_67 = arith.constant dense<0.000000e+00> : vector<8x32xf32>
    %247 = tpu.matmul %246, %233, %cst_67 {dimension_numbers = #tpu.dot_dimension_numbers<[1], [0], [0], [1], [0, 0, 1, 1], [], []>} : vector<8x8xbf16>, vector<8x32xbf16>, vector<8x32xf32> -> vector<8x32xf32>
    %248 = tpu.concatenate %187, %207, %227, %247 in 1 : vector<8x32xf32>, vector<8x32xf32>, vector<8x32xf32>, vector<8x32xf32> -> vector<8x128xf32>
    %249 = arith.truncf %248 : vector<8x128xf32> to vector<8x128xbf16>
    %c0_68 = arith.constant 0 : index
    %c0_69 = arith.constant 0 : index
    %250 = vector.load %arg12[%c0_68, %c0_69] : memref<128x128xbf16, #tpu.memory_space<vmem>>, vector<128x128xbf16>
    %cst_70 = arith.constant dense<0.000000e+00> : vector<8x128xf32>
    %251 = tpu.matmul %249, %250, %cst_70 {dimension_numbers = #tpu.dot_dimension_numbers<[1], [0], [0], [1], [0, 0, 1, 1], [], []>} : vector<8x128xbf16>, vector<128x128xbf16>, vector<8x128xf32> -> vector<8x128xf32>
    %252 = vector.broadcast %15 : vector<1x128xf32> to vector<8x128xf32>
    %253 = arith.addf %251, %252 : vector<8x128xf32>
    %254 = arith.addf %133, %253 : vector<8x128xf32>
    %cst_71 = arith.constant dense<0.000000e+00> : vector<8xf32>
    %255 = vector.multi_reduction <add>, %254, %cst_71 [1] : vector<8x128xf32> to vector<8xf32>
    %256 = vector.shape_cast %255 : vector<8xf32> to vector<8x1xf32>
    %cst_72 = arith.constant 1.280000e+02 : f32
    %257 = vector.broadcast %cst_72 : f32 to vector<8x1xf32>
    %258 = arith.divf %256, %257 : vector<8x1xf32>
    %259 = vector.broadcast %258 : vector<8x1xf32> to vector<8x128xf32>
    %260 = arith.subf %254, %259 : vector<8x128xf32>
    %261 = arith.mulf %260, %260 : vector<8x128xf32>
    %cst_73 = arith.constant dense<0.000000e+00> : vector<8xf32>
    %262 = vector.multi_reduction <add>, %261, %cst_73 [1] : vector<8x128xf32> to vector<8xf32>
    %263 = vector.shape_cast %262 : vector<8xf32> to vector<8x1xf32>
    %cst_74 = arith.constant 0.00787401571 : f32
    %264 = vector.broadcast %cst_74 : f32 to vector<8x1xf32>
    %265 = arith.mulf %263, %264 : vector<8x1xf32>
    %266 = math.sqrt %265 : vector<8x1xf32>
    %cst_75 = arith.constant 9.99999997E-7 : f32
    %267 = vector.broadcast %cst_75 : f32 to vector<8x1xf32>
    %268 = arith.addf %266, %267 : vector<8x1xf32>
    %269 = math.rsqrt %268 : vector<8x1xf32>
    %270 = vector.broadcast %269 : vector<8x1xf32> to vector<8x128xf32>
    %271 = arith.mulf %260, %270 : vector<8x128xf32>
    %272 = vector.broadcast %11 : vector<1x128xf32> to vector<8x128xf32>
    %273 = arith.mulf %272, %271 : vector<8x128xf32>
    %274 = vector.broadcast %12 : vector<1x128xf32> to vector<8x128xf32>
    %275 = arith.addf %273, %274 : vector<8x128xf32>
    %276 = arith.truncf %275 : vector<8x128xf32> to vector<8x128xbf16>
    %c0_76 = arith.constant 0 : index
    %c0_77 = arith.constant 0 : index
    %277 = vector.load %arg13[%c0_76, %c0_77] : memref<128x256xbf16, #tpu.memory_space<vmem>>, vector<128x256xbf16>
    %cst_78 = arith.constant dense<0.000000e+00> : vector<8x256xf32>
    %278 = tpu.matmul %276, %277, %cst_78 {dimension_numbers = #tpu.dot_dimension_numbers<[1], [0], [0], [1], [0, 0, 1, 1], [], []>} : vector<8x128xbf16>, vector<128x256xbf16>, vector<8x256xf32> -> vector<8x256xf32>
    %c0_79 = arith.constant 0 : index
    %c0_80 = arith.constant 0 : index
    %279 = vector.load %arg14[%c0_79, %c0_80] : memref<1x256xf32, #tpu.memory_space<vmem>>, vector<1x256xf32>
    %280 = vector.broadcast %279 : vector<1x256xf32> to vector<8x256xf32>
    %281 = arith.addf %278, %280 : vector<8x256xf32>
    %cst_81 = arith.constant 0.000000e+00 : f32
    %282 = vector.broadcast %cst_81 : f32 to vector<8x256xf32>
    %283 = arith.maximumf %281, %282 : vector<8x256xf32>
    %284 = arith.truncf %283 : vector<8x256xf32> to vector<8x256xbf16>
    %c0_82 = arith.constant 0 : index
    %c0_83 = arith.constant 0 : index
    %285 = vector.load %arg15[%c0_82, %c0_83] : memref<256x128xbf16, #tpu.memory_space<vmem>>, vector<256x128xbf16>
    %cst_84 = arith.constant dense<0.000000e+00> : vector<8x128xf32>
    %286 = tpu.matmul %284, %285, %cst_84 {dimension_numbers = #tpu.dot_dimension_numbers<[1], [0], [0], [1], [0, 0, 1, 1], [], []>} : vector<8x256xbf16>, vector<256x128xbf16>, vector<8x128xf32> -> vector<8x128xf32>
    %287 = vector.broadcast %16 : vector<1x128xf32> to vector<8x128xf32>
    %288 = arith.addf %286, %287 : vector<8x128xf32>
    %289 = arith.addf %254, %288 : vector<8x128xf32>
    %290 = vector.shape_cast %289 : vector<8x128xf32> to vector<1x8x128xf32>
    %c0_85 = arith.constant 0 : index
    %c0_86 = arith.constant 0 : index
    %c0_87 = arith.constant 0 : index
    %291 = vector.load %arg16[%c0_85, %c0_86, %c0_87] : memref<1x8x128xf32, #tpu.memory_space<vmem>>, vector<1x8x128xf32>
    tpu.vector_store %arg16[%c0_85, %c0_86, %c0_87], %290 {strides = array<i32>} : memref<1x8x128xf32, #tpu.memory_space<vmem>>, vector<1x8x128xf32>,
    return
  }
  func.func @transform_0(%arg0: i32) -> (i32, i32, i32) {
    %c0_i32 = arith.constant 0 : i32
    %c0_i32_0 = arith.constant 0 : i32
    %c0_i32_1 = arith.constant 0 : i32
    return %arg0, %c0_i32, %c0_i32_0 : i32, i32, i32
  }
  func.func @transform_1(%arg0: i32) -> (i32, i32, i32) {
    %c0_i32 = arith.constant 0 : i32
    %c0_i32_0 = arith.constant 0 : i32
    %c0_i32_1 = arith.constant 0 : i32
    return %arg0, %c0_i32, %c0_i32_0 : i32, i32, i32
  }
  func.func @transform_2(%arg0: i32) -> (i32, i32) {
    %c0_i32 = arith.constant 0 : i32
    %c0_i32_0 = arith.constant 0 : i32
    %c0_i32_1 = arith.constant 0 : i32
    return %c0_i32, %c0_i32_0 : i32, i32
  }
  func.func @transform_3(%arg0: i32) -> (i32, i32) {
    %c0_i32 = arith.constant 0 : i32
    %c0_i32_0 = arith.constant 0 : i32
    %c0_i32_1 = arith.constant 0 : i32
    return %c0_i32, %c0_i32_0 : i32, i32
  }
  func.func @transform_4(%arg0: i32) -> (i32, i32) {
    %c0_i32 = arith.constant 0 : i32
    %c0_i32_0 = arith.constant 0 : i32
    %c0_i32_1 = arith.constant 0 : i32
    return %c0_i32, %c0_i32_0 : i32, i32
  }
  func.func @transform_5(%arg0: i32) -> (i32, i32) {
    %c0_i32 = arith.constant 0 : i32
    %c0_i32_0 = arith.constant 0 : i32
    %c0_i32_1 = arith.constant 0 : i32
    return %c0_i32, %c0_i32_0 : i32, i32
  }
  func.func @transform_6(%arg0: i32) -> (i32, i32) {
    %c0_i32 = arith.constant 0 : i32
    %c0_i32_0 = arith.constant 0 : i32
    %c0_i32_1 = arith.constant 0 : i32
    return %c0_i32, %c0_i32_0 : i32, i32
  }
  func.func @transform_7(%arg0: i32) -> (i32, i32) {
    %c0_i32 = arith.constant 0 : i32
    %c0_i32_0 = arith.constant 0 : i32
    %c0_i32_1 = arith.constant 0 : i32
    return %c0_i32, %c0_i32_0 : i32, i32
  }
  func.func @transform_8(%arg0: i32) -> (i32, i32) {
    %c0_i32 = arith.constant 0 : i32
    %c0_i32_0 = arith.constant 0 : i32
    %c0_i32_1 = arith.constant 0 : i32
    return %c0_i32, %c0_i32_0 : i32, i32
  }
  func.func @transform_9(%arg0: i32) -> (i32, i32) {
    %c0_i32 = arith.constant 0 : i32
    %c0_i32_0 = arith.constant 0 : i32
    %c0_i32_1 = arith.constant 0 : i32
    return %c0_i32, %c0_i32_0 : i32, i32
  }
  func.func @transform_10(%arg0: i32) -> (i32, i32) {
    %c0_i32 = arith.constant 0 : i32
    %c0_i32_0 = arith.constant 0 : i32
    %c0_i32_1 = arith.constant 0 : i32
    return %c0_i32, %c0_i32_0 : i32, i32
  }
  func.func @transform_11(%arg0: i32) -> (i32, i32) {
    %c0_i32 = arith.constant 0 : i32
    %c0_i32_0 = arith.constant 0 : i32
    %c0_i32_1 = arith.constant 0 : i32
    return %c0_i32, %c0_i32_0 : i32, i32
  }
  func.func @transform_12(%arg0: i32) -> (i32, i32) {
    %c0_i32 = arith.constant 0 : i32
    %c0_i32_0 = arith.constant 0 : i32
    %c0_i32_1 = arith.constant 0 : i32
    return %c0_i32, %c0_i32_0 : i32, i32
  }
  func.func @transform_13(%arg0: i32) -> (i32, i32) {
    %c0_i32 = arith.constant 0 : i32
    %c0_i32_0 = arith.constant 0 : i32
    %c0_i32_1 = arith.constant 0 : i32
    return %c0_i32, %c0_i32_0 : i32, i32
  }
  func.func @transform_14(%arg0: i32) -> (i32, i32) {
    %c0_i32 = arith.constant 0 : i32
    %c0_i32_0 = arith.constant 0 : i32
    %c0_i32_1 = arith.constant 0 : i32
    return %c0_i32, %c0_i32_0 : i32, i32
  }
  func.func @transform_15(%arg0: i32) -> (i32, i32, i32) {
    %c0_i32 = arith.constant 0 : i32
    %c0_i32_0 = arith.constant 0 : i32
    %c0_i32_1 = arith.constant 0 : i32
    return %arg0, %c0_i32, %c0_i32_0 : i32, i32, i32
  }
}

</mosaic_0001>

<llo_original>
// kernel: decoder_layer.1
$region0: #{decoder_layer.1}
  #allocation0 [shape = 'u32[]', space=smem, size = 0x4, offset = 0x4, fixed_abs, tag = 'smem constant byte address 0x4 - core index']
  #allocation1 [shape = 'u32[144,128]{1,0:T(1,128)}', space=vmem, size = 0x12000, scoped, tag = 'internal scratch']
  %s0 = inlined_call_operand.vmem [shape: f32[2,8,128], index: 0, kind: input, shape index: {}]
  %s1 = inlined_call_operand.vmem [shape: f32[2,8,128], index: 1, kind: input, shape index: {}]
  %s2 = inlined_call_operand.vmem [shape: f32[8,8], index: 2, kind: input, shape index: {}]
  %s3 = inlined_call_operand.vmem [shape: f32[8,8], index: 3, kind: input, shape index: {}]
  %s4 = inlined_call_operand.vmem [shape: f32[10,128], index: 4, kind: input, shape index: {}]
  %s5 = inlined_call_operand.vmem [shape: bf16[128,384], index: 5, kind: input, shape index: {}]
  %s6 = inlined_call_operand.vmem [shape: f32[1,384], index: 6, kind: input, shape index: {}]
  %s7 = inlined_call_operand.vmem [shape: bf16[128,128], index: 7, kind: input, shape index: {}]
  %s8 = inlined_call_operand.vmem [shape: bf16[128,128], index: 8, kind: input, shape index: {}]
  %s9 = inlined_call_operand.vmem [shape: bf16[128,256], index: 9, kind: input, shape index: {}]
  %s10 = inlined_call_operand.vmem [shape: f32[1,256], index: 10, kind: input, shape index: {}]
  %s11 = inlined_call_operand.vmem [shape: bf16[128,128], index: 11, kind: input, shape index: {}]
  %s12 = inlined_call_operand.vmem [shape: bf16[128,256], index: 12, kind: input, shape index: {}]
  %s13 = inlined_call_operand.vmem [shape: f32[1,256], index: 13, kind: input, shape index: {}]
  %s14 = inlined_call_operand.vmem [shape: bf16[256,128], index: 14, kind: input, shape index: {}]
  %s15 = inlined_call_operand.hbm [shape: f32[2,8,128], index: 15, kind: output, shape index: {}]
  %s16 = sld [smem:[#allocation0]]
  $region93: #{decoder_layer.1} parent=0
    _
  %s18 = ssub.s32 1, %s16
  %s19 = scalar_select 0, %s18, %s16
  $region1: #{decoder_layer.1} parent=0
    #allocation2 [shape = 'u8[8192]{0}', space=vmem, size = 0x2000, scoped, tag = 'output window, operand 0']
    #allocation3 [shape = 's32[2]{0}', space=sflag, size = 0x8, scoped, tag = 'scoped memory for decoder_layer.1']
    %20 = vsyncpa [#allocation3], 0
    %s21 = scalar_lea.sflag [#allocation3], 1
    %22 = vsyncpa %s21, 0
    loop: start=0, step=1, limit=4
    $region2: #{decoder_layer.1} parent=1 // loop_pre_header
      _
    $region3: #{decoder_layer.1} parent=1 // loop_header
      %s24 = sphi 0, %s28
      %p25 = scmp.ge.s32.totalorder %s24, 4
      %s34 = sphi 0, %s36
      %s37 = sphi 0, %s34
      %s38 = sphi 0, %s37
      %s54 = sphi 0, %s38
      %s60 = sphi 0, %s62
      %s63 = sphi 0, %s60
      %s64 = sphi 0, %s63
      %s80 = sphi 0, %s64
      %s84 = sphi 0, %s84
      %s86 = sphi 0, %s84
      %s87 = sphi 0, %s86
      %s101 = sphi 0, %s87
      %s105 = sphi 0, %s105
      %s107 = sphi 0, %s105
      %s108 = sphi 0, %s107
      %s122 = sphi 0, %s108
      %s126 = sphi 0, %s126
      %s128 = sphi 0, %s126
      %s129 = sphi 0, %s128
      %s143 = sphi 0, %s129
      %s147 = sphi 0, %s147
      %s149 = sphi 0, %s147
      %s150 = sphi 0, %s149
      %s164 = sphi 0, %s150
      %s168 = sphi 0, %s168
      %s170 = sphi 0, %s168
      %s171 = sphi 0, %s170
      %s185 = sphi 0, %s171
      %s189 = sphi 0, %s189
      %s191 = sphi 0, %s189
      %s192 = sphi 0, %s191
      %s206 = sphi 0, %s192
      %s210 = sphi 0, %s210
      %s212 = sphi 0, %s210
      %s213 = sphi 0, %s212
      %s227 = sphi 0, %s213
      %s231 = sphi 0, %s231
      %s233 = sphi 0, %s231
      %s234 = sphi 0, %s233
      %s248 = sphi 0, %s234
      %s252 = sphi 0, %s252
      %s254 = sphi 0, %s252
      %s255 = sphi 0, %s254
      %s269 = sphi 0, %s255
      %s273 = sphi 0, %s273
      %s275 = sphi 0, %s273
      %s276 = sphi 0, %s275
      %s290 = sphi 0, %s276
      %s294 = sphi 0, %s294
      %s296 = sphi 0, %s294
      %s297 = sphi 0, %s296
      %s311 = sphi 0, %s297
      %s315 = sphi 0, %s315
      %s317 = sphi 0, %s315
      %s318 = sphi 0, %s317
      %s332 = sphi 0, %s318
      %s336 = sphi 0, %s336
      %s338 = sphi 0, %s336
      %s339 = sphi 0, %s338
      %s353 = sphi 0, %s339
      %s359 = sphi 0, %s361
      %s362 = sphi 0, %s359
      %s363 = sphi 0, %s362
      %s379 = sphi 0, %s363
    $region4: #{decoder_layer.1} parent=1 // loop_header_branch
      %27 = sbr.rel (%p25) target = $region8
    $region5: #{decoder_layer.1} parent=1 // loop_body
      %s29 = ssub.s32 %s24, 1
      %s30 = ssub.s32 %s24, 2
      %s31 = sadd.s32 %s24, 1
      %s32 = ssub.s32 %s24, %s31
      %p33 = scmp.eq.s32.totalorder %s32, 0
      %s35 = sadd.s32 %s34, 1
      %s36 = scalar_select %p33, %s34, %s35
      %p39 = pneg %p33
      %p40 = scmp.eq.s32.totalorder %s24, 1
      %p41 = por %p39, %p40
      %p42 = scmp.ne.s32.totalorder %s34, %s37
      %p43 = scmp.eq.s32.totalorder %s24, 0
      %p44 = por %p42, %p43
      %p45 = scmp.ne.s32.totalorder %s34, %s37
      %p46 = scmp.eq.s32.totalorder %s29, 1
      %p47 = por %p45, %p46
      %p48 = scmp.ne.s32.totalorder %s37, %s38
      %p49 = scmp.eq.s32.totalorder %s29, 0
      %p50 = por %p48, %p49
      %p51 = scmp.ne.s32.totalorder %s37, %s38
      %p52 = scmp.eq.s32.totalorder %s30, 1
      %p53 = por %p51, %p52
      %p55 = scmp.ne.s32.totalorder %s38, %s54
      %p56 = scmp.eq.s32.totalorder %s30, 0
      %p57 = por %p55, %p56
      %s58 = ssub.s32 %s24, %s31
      %p59 = scmp.eq.s32.totalorder %s58, 0
      %s61 = sadd.s32 %s60, 1
      %s62 = scalar_select %p59, %s60, %s61
      %p65 = pneg %p59
      %p66 = scmp.eq.s32.totalorder %s24, 1
      %p67 = por %p65, %p66
      %p68 = scmp.ne.s32.totalorder %s60, %s63
      %p69 = scmp.eq.s32.totalorder %s24, 0
      %p70 = por %p68, %p69
      %p71 = scmp.ne.s32.totalorder %s60, %s63
      %p72 = scmp.eq.s32.totalorder %s29, 1
      %p73 = por %p71, %p72
      %p74 = scmp.ne.s32.totalorder %s63, %s64
      %p75 = scmp.eq.s32.totalorder %s29, 0
      %p76 = por %p74, %p75
      %p77 = scmp.ne.s32.totalorder %s63, %s64
      %p78 = scmp.eq.s32.totalorder %s30, 1
      %p79 = por %p77, %p78
      %p81 = scmp.ne.s32.totalorder %s64, %s80
      %p82 = scmp.eq.s32.totalorder %s30, 0
      %p83 = por %p81, %p82
      %s85 = sadd.s32 %s84, 1
      %p88 = scmp.eq.s32.totalorder %s24, 1
      %p89 = scmp.ne.s32.totalorder %s84, %s86
      %p90 = scmp.eq.s32.totalorder %s24, 0
      %p91 = por %p89, %p90
      %p92 = scmp.ne.s32.totalorder %s84, %s86
      %p93 = scmp.eq.s32.totalorder %s29, 1
      %p94 = por %p92, %p93
      %p95 = scmp.ne.s32.totalorder %s86, %s87
      %p96 = scmp.eq.s32.totalorder %s29, 0
      %p97 = por %p95, %p96
      %p98 = scmp.ne.s32.totalorder %s86, %s87
      %p99 = scmp.eq.s32.totalorder %s30, 1
      %p100 = por %p98, %p99
      %p102 = scmp.ne.s32.totalorder %s87, %s101
      %p103 = scmp.eq.s32.totalorder %s30, 0
      %p104 = por %p102, %p103
      %s106 = sadd.s32 %s105, 1
      %p109 = scmp.eq.s32.totalorder %s24, 1
      %p110 = scmp.ne.s32.totalorder %s105, %s107
      %p111 = scmp.eq.s32.totalorder %s24, 0
      %p112 = por %p110, %p111
      %p113 = scmp.ne.s32.totalorder %s105, %s107
      %p114 = scmp.eq.s32.totalorder %s29, 1
      %p115 = por %p113, %p114
      %p116 = scmp.ne.s32.totalorder %s107, %s108
      %p117 = scmp.eq.s32.totalorder %s29, 0
      %p118 = por %p116, %p117
      %p119 = scmp.ne.s32.totalorder %s107, %s108
      %p120 = scmp.eq.s32.totalorder %s30, 1
      %p121 = por %p119, %p120
      %p123 = scmp.ne.s32.totalorder %s108, %s122
      %p124 = scmp.eq.s32.totalorder %s30, 0
      %p125 = por %p123, %p124
      %s127 = sadd.s32 %s126, 1
      %p130 = scmp.eq.s32.totalorder %s24, 1
      %p131 = scmp.ne.s32.totalorder %s126, %s128
      %p132 = scmp.eq.s32.totalorder %s24, 0
      %p133 = por %p131, %p132
      %p134 = scmp.ne.s32.totalorder %s126, %s128
      %p135 = scmp.eq.s32.totalorder %s29, 1
      %p136 = por %p134, %p135
      %p137 = scmp.ne.s32.totalorder %s128, %s129
      %p138 = scmp.eq.s32.totalorder %s29, 0
      %p139 = por %p137, %p138
      %p140 = scmp.ne.s32.totalorder %s128, %s129
      %p141 = scmp.eq.s32.totalorder %s30, 1
      %p142 = por %p140, %p141
      %p144 = scmp.ne.s32.totalorder %s129, %s143
      %p145 = scmp.eq.s32.totalorder %s30, 0
      %p146 = por %p144, %p145
      %s148 = sadd.s32 %s147, 1
      %p151 = scmp.eq.s32.totalorder %s24, 1
      %p152 = scmp.ne.s32.totalorder %s147, %s149
      %p153 = scmp.eq.s32.totalorder %s24, 0
      %p154 = por %p152, %p153
      %p155 = scmp.ne.s32.totalorder %s147, %s149
      %p156 = scmp.eq.s32.totalorder %s29, 1
      %p157 = por %p155, %p156
      %p158 = scmp.ne.s32.totalorder %s149, %s150
      %p159 = scmp.eq.s32.totalorder %s29, 0
      %p160 = por %p158, %p159
      %p161 = scmp.ne.s32.totalorder %s149, %s150
      %p162 = scmp.eq.s32.totalorder %s30, 1
      %p163 = por %p161, %p162
      %p165 = scmp.ne.s32.totalorder %s150, %s164
      %p166 = scmp.eq.s32.totalorder %s30, 0
      %p167 = por %p165, %p166
      %s169 = sadd.s32 %s168, 1
      %p172 = scmp.eq.s32.totalorder %s24, 1
      %p173 = scmp.ne.s32.totalorder %s168, %s170
      %p174 = scmp.eq.s32.totalorder %s24, 0
      %p175 = por %p173, %p174
      %p176 = scmp.ne.s32.totalorder %s168, %s170
      %p177 = scmp.eq.s32.totalorder %s29, 1
      %p178 = por %p176, %p177
      %p179 = scmp.ne.s32.totalorder %s170, %s171
      %p180 = scmp.eq.s32.totalorder %s29, 0
      %p181 = por %p179, %p180
      %p182 = scmp.ne.s32.totalorder %s170, %s171
      %p183 = scmp.eq.s32.totalorder %s30, 1
      %p184 = por %p182, %p183
      %p186 = scmp.ne.s32.totalorder %s171, %s185
      %p187 = scmp.eq.s32.totalorder %s30, 0
      %p188 = por %p186, %p187
      %s190 = sadd.s32 %s189, 1
      %p193 = scmp.eq.s32.totalorder %s24, 1
      %p194 = scmp.ne.s32.totalorder %s189, %s191
      %p195 = scmp.eq.s32.totalorder %s24, 0
      %p196 = por %p194, %p195
      %p197 = scmp.ne.s32.totalorder %s189, %s191
      %p198 = scmp.eq.s32.totalorder %s29, 1
      %p199 = por %p197, %p198
      %p200 = scmp.ne.s32.totalorder %s191, %s192
      %p201 = scmp.eq.s32.totalorder %s29, 0
      %p202 = por %p200, %p201
      %p203 = scmp.ne.s32.totalorder %s191, %s192
      %p204 = scmp.eq.s32.totalorder %s30, 1
      %p205 = por %p203, %p204
      %p207 = scmp.ne.s32.totalorder %s192, %s206
      %p208 = scmp.eq.s32.totalorder %s30, 0
      %p209 = por %p207, %p208
      %s211 = sadd.s32 %s210, 1
      %p214 = scmp.eq.s32.totalorder %s24, 1
      %p215 = scmp.ne.s32.totalorder %s210, %s212
      %p216 = scmp.eq.s32.totalorder %s24, 0
      %p217 = por %p215, %p216
      %p218 = scmp.ne.s32.totalorder %s210, %s212
      %p219 = scmp.eq.s32.totalorder %s29, 1
      %p220 = por %p218, %p219
      %p221 = scmp.ne.s32.totalorder %s212, %s213
      %p222 = scmp.eq.s32.totalorder %s29, 0
      %p223 = por %p221, %p222
      %p224 = scmp.ne.s32.totalorder %s212, %s213
      %p225 = scmp.eq.s32.totalorder %s30, 1
      %p226 = por %p224, %p225
      %p228 = scmp.ne.s32.totalorder %s213, %s227
      %p229 = scmp.eq.s32.totalorder %s30, 0
      %p230 = por %p228, %p229
      %s232 = sadd.s32 %s231, 1
      %p235 = scmp.eq.s32.totalorder %s24, 1
      %p236 = scmp.ne.s32.totalorder %s231, %s233
      %p237 = scmp.eq.s32.totalorder %s24, 0
      %p238 = por %p236, %p237
      %p239 = scmp.ne.s32.totalorder %s231, %s233
      %p240 = scmp.eq.s32.totalorder %s29, 1
      %p241 = por %p239, %p240
      %p242 = scmp.ne.s32.totalorder %s233, %s234
      %p243 = scmp.eq.s32.totalorder %s29, 0
      %p244 = por %p242, %p243
      %p245 = scmp.ne.s32.totalorder %s233, %s234
      %p246 = scmp.eq.s32.totalorder %s30, 1
      %p247 = por %p245, %p246
      %p249 = scmp.ne.s32.totalorder %s234, %s248
      %p250 = scmp.eq.s32.totalorder %s30, 0
      %p251 = por %p249, %p250
      %s253 = sadd.s32 %s252, 1
      %p256 = scmp.eq.s32.totalorder %s24, 1
      %p257 = scmp.ne.s32.totalorder %s252, %s254
      %p258 = scmp.eq.s32.totalorder %s24, 0
      %p259 = por %p257, %p258
      %p260 = scmp.ne.s32.totalorder %s252, %s254
      %p261 = scmp.eq.s32.totalorder %s29, 1
      %p262 = por %p260, %p261
      %p263 = scmp.ne.s32.totalorder %s254, %s255
      %p264 = scmp.eq.s32.totalorder %s29, 0
      %p265 = por %p263, %p264
      %p266 = scmp.ne.s32.totalorder %s254, %s255
      %p267 = scmp.eq.s32.totalorder %s30, 1
      %p268 = por %p266, %p267
      %p270 = scmp.ne.s32.totalorder %s255, %s269
      %p271 = scmp.eq.s32.totalorder %s30, 0
      %p272 = por %p270, %p271
      %s274 = sadd.s32 %s273, 1
      %p277 = scmp.eq.s32.totalorder %s24, 1
      %p278 = scmp.ne.s32.totalorder %s273, %s275
      %p279 = scmp.eq.s32.totalorder %s24, 0
      %p280 = por %p278, %p279
      %p281 = scmp.ne.s32.totalorder %s273, %s275
      %p282 = scmp.eq.s32.totalorder %s29, 1
      %p283 = por %p281, %p282
      %p284 = scmp.ne.s32.totalorder %s275, %s276
      %p285 = scmp.eq.s32.totalorder %s29, 0
      %p286 = por %p284, %p285
      %p287 = scmp.ne.s32.totalorder %s275, %s276
      %p288 = scmp.eq.s32.totalorder %s30, 1
      %p289 = por %p287, %p288
      %p291 = scmp.ne.s32.totalorder %s276, %s290
      %p292 = scmp.eq.s32.totalorder %s30, 0
      %p293 = por %p291, %p292
      %s295 = sadd.s32 %s294, 1
      %p298 = scmp.eq.s32.totalorder %s24, 1
      %p299 = scmp.ne.s32.totalorder %s294, %s296
      %p300 = scmp.eq.s32.totalorder %s24, 0
      %p301 = por %p299, %p300
      %p302 = scmp.ne.s32.totalorder %s294, %s296
      %p303 = scmp.eq.s32.totalorder %s29, 1
      %p304 = por %p302, %p303
      %p305 = scmp.ne.s32.totalorder %s296, %s297
      %p306 = scmp.eq.s32.totalorder %s29, 0
      %p307 = por %p305, %p306
      %p308 = scmp.ne.s32.totalorder %s296, %s297
      %p309 = scmp.eq.s32.totalorder %s30, 1
      %p310 = por %p308, %p309
      %p312 = scmp.ne.s32.totalorder %s297, %s311
      %p313 = scmp.eq.s32.totalorder %s30, 0
      %p314 = por %p312, %p313
      %s316 = sadd.s32 %s315, 1
      %p319 = scmp.eq.s32.totalorder %s24, 1
      %p320 = scmp.ne.s32.totalorder %s315, %s317
      %p321 = scmp.eq.s32.totalorder %s24, 0
      %p322 = por %p320, %p321
      %p323 = scmp.ne.s32.totalorder %s315, %s317
      %p324 = scmp.eq.s32.totalorder %s29, 1
      %p325 = por %p323, %p324
      %p326 = scmp.ne.s32.totalorder %s317, %s318
      %p327 = scmp.eq.s32.totalorder %s29, 0
      %p328 = por %p326, %p327
      %p329 = scmp.ne.s32.totalorder %s317, %s318
      %p330 = scmp.eq.s32.totalorder %s30, 1
      %p331 = por %p329, %p330
      %p333 = scmp.ne.s32.totalorder %s318, %s332
      %p334 = scmp.eq.s32.totalorder %s30, 0
      %p335 = por %p333, %p334
      %s337 = sadd.s32 %s336, 1
      %p340 = scmp.eq.s32.totalorder %s24, 1
      %p341 = scmp.ne.s32.totalorder %s336, %s338
      %p342 = scmp.eq.s32.totalorder %s24, 0
      %p343 = por %p341, %p342
      %p344 = scmp.ne.s32.totalorder %s336, %s338
      %p345 = scmp.eq.s32.totalorder %s29, 1
      %p346 = por %p344, %p345
      %p347 = scmp.ne.s32.totalorder %s338, %s339
      %p348 = scmp.eq.s32.totalorder %s29, 0
      %p349 = por %p347, %p348
      %p350 = scmp.ne.s32.totalorder %s338, %s339
      %p351 = scmp.eq.s32.totalorder %s30, 1
      %p352 = por %p350, %p351
      %p354 = scmp.ne.s32.totalorder %s339, %s353
      %p355 = scmp.eq.s32.totalorder %s30, 0
      %p356 = por %p354, %p355
      %s357 = ssub.s32 %s24, %s31
      %p358 = scmp.eq.s32.totalorder %s357, 0
      %s360 = sadd.s32 %s359, 1
      %s361 = scalar_select %p358, %s359, %s360
      %p364 = pneg %p358
      %p365 = scmp.eq.s32.totalorder %s24, 1
      %p366 = por %p364, %p365
      %p367 = scmp.ne.s32.totalorder %s359, %s362
      %p368 = scmp.eq.s32.totalorder %s24, 0
      %p369 = por %p367, %p368
      %p370 = scmp.ne.s32.totalorder %s359, %s362
      %p371 = scmp.eq.s32.totalorder %s29, 1
      %p372 = por %p370, %p371
      %p373 = scmp.ne.s32.totalorder %s362, %s363
      %p374 = scmp.eq.s32.totalorder %s29, 0
      %p375 = por %p373, %p374
      %p376 = scmp.ne.s32.totalorder %s362, %s363
      %p377 = scmp.eq.s32.totalorder %s30, 1
      %p378 = por %p376, %p377
      %p380 = scmp.ne.s32.totalorder %s363, %s379
      %p381 = scmp.eq.s32.totalorder %s30, 0
      %p382 = por %p380, %p381
      %p383 = scmp.le.s32.totalorder 1, %s24
      %p384 = scmp.lt.s32.totalorder %s24, 3
      %p385 = pnand %p383, %p384
      %p386 = pneg %p385
      // Predicated region
      $region9: #{decoder_layer.1} parent=5 // pred_check
        _
      $region10: #{decoder_layer.1} parent=5 // pred_check_branch
        %388 = sbr.rel (%p385) target = $region12
      $region11: #{decoder_layer.1} parent=5 // pred_region
        %s389 = ssub.s32 %s24, 1
        // Predicated region
        $region13: #{decoder_layer.1} parent=11 // pred_check
          %p390 = pneg %p97
        $region14: #{decoder_layer.1} parent=11 // pred_check_branch
          %392 = sbr.rel (%p390) target = $region16
        $region15: #{decoder_layer.1} parent=11 // pred_region
          _
        $region16: #{decoder_layer.1} parent=11 // pred_fallthru
          _
        // Predicated region
        $region17: #{decoder_layer.1} parent=11 // pred_check
          %p393 = pneg %p118
        $region18: #{decoder_layer.1} parent=11 // pred_check_branch
          %395 = sbr.rel (%p393) target = $region20
        $region19: #{decoder_layer.1} parent=11 // pred_region
          _
        $region20: #{decoder_layer.1} parent=11 // pred_fallthru
          _
        // Predicated region
        $region21: #{decoder_layer.1} parent=11 // pred_check
          %p396 = pneg %p139
        $region22: #{decoder_layer.1} parent=11 // pred_check_branch
          %398 = sbr.rel (%p396) target = $region24
        $region23: #{decoder_layer.1} parent=11 // pred_region
          _
        $region24: #{decoder_layer.1} parent=11 // pred_fallthru
          _
        // Predicated region
        $region25: #{decoder_layer.1} parent=11 // pred_check
          %p399 = pneg %p160
        $region26: #{decoder_layer.1} parent=11 // pred_check_branch
          %401 = sbr.rel (%p399) target = $region28
        $region27: #{decoder_layer.1} parent=11 // pred_region
          _
        $region28: #{decoder_layer.1} parent=11 // pred_fallthru
          _
        // Predicated region
        $region29: #{decoder_layer.1} parent=11 // pred_check
          %p402 = pneg %p181
        $region30: #{decoder_layer.1} parent=11 // pred_check_branch
          %404 = sbr.rel (%p402) target = $region32
        $region31: #{decoder_layer.1} parent=11 // pred_region
          _
        $region32: #{decoder_layer.1} parent=11 // pred_fallthru
          _
        // Predicated region
        $region33: #{decoder_layer.1} parent=11 // pred_check
          %p405 = pneg %p202
        $region34: #{decoder_layer.1} parent=11 // pred_check_branch
          %407 = sbr.rel (%p405) target = $region36
        $region35: #{decoder_layer.1} parent=11 // pred_region
          _
        $region36: #{decoder_layer.1} parent=11 // pred_fallthru
          _
        // Predicated region
        $region37: #{decoder_layer.1} parent=11 // pred_check
          %p408 = pneg %p223
        $region38: #{decoder_layer.1} parent=11 // pred_check_branch
          %410 = sbr.rel (%p408) target = $region40
        $region39: #{decoder_layer.1} parent=11 // pred_region
          _
        $region40: #{decoder_layer.1} parent=11 // pred_fallthru
          _
        // Predicated region
        $region41: #{decoder_layer.1} parent=11 // pred_check
          %p411 = pneg %p244
        $region42: #{decoder_layer.1} parent=11 // pred_check_branch
          %413 = sbr.rel (%p411) target = $region44
        $region43: #{decoder_layer.1} parent=11 // pred_region
          _
        $region44: #{decoder_layer.1} parent=11 // pred_fallthru
          _
        // Predicated region
        $region45: #{decoder_layer.1} parent=11 // pred_check
          %p414 = pneg %p265
        $region46: #{decoder_layer.1} parent=11 // pred_check_branch
          %416 = sbr.rel (%p414) target = $region48
        $region47: #{decoder_layer.1} parent=11 // pred_region
          _
        $region48: #{decoder_layer.1} parent=11 // pred_fallthru
          _
        // Predicated region
        $region49: #{decoder_layer.1} parent=11 // pred_check
          %p417 = pneg %p286
        $region50: #{decoder_layer.1} parent=11 // pred_check_branch
          %419 = sbr.rel (%p417) target = $region52
        $region51: #{decoder_layer.1} parent=11 // pred_region
          _
        $region52: #{decoder_layer.1} parent=11 // pred_fallthru
          _
        // Predicated region
        $region53: #{decoder_layer.1} parent=11 // pred_check
          %p420 = pneg %p307
        $region54: #{decoder_layer.1} parent=11 // pred_check_branch
          %422 = sbr.rel (%p420) target = $region56
        $region55: #{decoder_layer.1} parent=11 // pred_region
          _
        $region56: #{decoder_layer.1} parent=11 // pred_fallthru
          _
        // Predicated region
        $region57: #{decoder_layer.1} parent=11 // pred_check
          %p423 = pneg %p328
        $region58: #{decoder_layer.1} parent=11 // pred_check_branch
          %425 = sbr.rel (%p423) target = $region60
        $region59: #{decoder_layer.1} parent=11 // pred_region
          _
        $region60: #{decoder_layer.1} parent=11 // pred_fallthru
          _
        // Predicated region
        $region61: #{decoder_layer.1} parent=11 // pred_check
          %p426 = pneg %p349
        $region62: #{decoder_layer.1} parent=11 // pred_check_branch
          %428 = sbr.rel (%p426) target = $region64
        $region63: #{decoder_layer.1} parent=11 // pred_region
          _
        $region64: #{decoder_layer.1} parent=11 // pred_fallthru
          _
      $region12: #{decoder_layer.1} parent=5 // pred_fallthru
        _
      %p429 = scmp.lt.s32.totalorder %s24, 2
      // Predicated region
      $region65: #{decoder_layer.1} parent=5 // pred_check
        %p430 = pneg %p429
      $region66: #{decoder_layer.1} parent=5 // pred_check_branch
        %432 = sbr.rel (%p430) target = $region68
      $region67: #{decoder_layer.1} parent=5 // pred_region
        // Predicated region
        $region69: #{decoder_layer.1} parent=67 // pred_check
          %p433 = pneg %p44
        $region70: #{decoder_layer.1} parent=67 // pred_check_branch
          %435 = sbr.rel (%p433) target = $region72
        $region71: #{decoder_layer.1} parent=67 // pred_region
          %p436 = scmp.lt.s32.totalorder %s24, 1
          %s437 = scalar_select %p436, %s24, 1
          %s438 = smul.addr %s437, 8
          %s439 = scalar_lea.vmem %s0, %s438
        $region72: #{decoder_layer.1} parent=67 // pred_fallthru
          _
        // Predicated region
        $region73: #{decoder_layer.1} parent=67 // pred_check
          %p440 = pneg %p70
        $region74: #{decoder_layer.1} parent=67 // pred_check_branch
          %442 = sbr.rel (%p440) target = $region76
        $region75: #{decoder_layer.1} parent=67 // pred_region
          %p443 = scmp.lt.s32.totalorder %s24, 1
          %s444 = scalar_select %p443, %s24, 1
          %s445 = smul.addr %s444, 8
          %s446 = scalar_lea.vmem %s1, %s445
        $region76: #{decoder_layer.1} parent=67 // pred_fallthru
          _
      $region68: #{decoder_layer.1} parent=5 // pred_fallthru
        _
      %p447 = scmp.le.s32.totalorder 1, %s24
      %p448 = scmp.lt.s32.totalorder %s24, 3
      %p449 = pnand %p447, %p448
      %p450 = pneg %p449
      // Predicated region
      $region77: #{decoder_layer.1} parent=5 // pred_check
        _
      $region78: #{decoder_layer.1} parent=5 // pred_check_branch
        %452 = sbr.rel (%p449) target = $region80
      $region79: #{decoder_layer.1} parent=5 // pred_region
        %s453 = ssub.s32 %s24, 1
        %p454 = scmp.lt.s32.totalorder %s29, 1
        %s455 = scalar_select %p454, %s29, 1
        %s456 = smul.addr %s455, 8
        %s457 = scalar_lea.vmem %s0, %s456
        %p458 = pneg %p50
        %p459 = pneg %p47
        %p460 = scmp.lt.s32.totalorder %s29, 1
        %s461 = scalar_select %p460, %s29, 1
        %s462 = smul.addr %s461, 8
        %s463 = scalar_lea.vmem %s1, %s462
        %p464 = pneg %p76
        %p465 = pneg %p73
        %p466 = pneg %p97
        %p467 = pneg %p94
        %p468 = pneg %p118
        %p469 = pneg %p115
        %p470 = pneg %p139
        %p471 = pneg %p136
        %p472 = pneg %p160
        %p473 = pneg %p157
        %p474 = pneg %p181
        %p475 = pneg %p178
        %p476 = pneg %p202
        %p477 = pneg %p199
        %p478 = pneg %p223
        %p479 = pneg %p220
        %p480 = pneg %p244
        %p481 = pneg %p241
        %p482 = pneg %p265
        %p483 = pneg %p262
        %p484 = pneg %p286
        %p485 = pneg %p283
        %p486 = pneg %p307
        %p487 = pneg %p304
        %p488 = pneg %p328
        %p489 = pneg %p325
        %p490 = pneg %p349
        %p491 = pneg %p346
        %p492 = pneg %p375
        %p493 = pneg %p372
        %s494 = sand.u32 %s362, 1
        %s495 = scalar_lea.sflag [#allocation3], %s494
        %s496 = sand.u32 %s362, 1
        %s497 = smul.addr %s496, 8
        %s498 = scalar_lea.vmem [#allocation2], %s497
        %p499 = scmp.lt.s32.totalorder %s29, 1
        %s500 = scalar_select %p499, %s29, 1
        %s501 = smul.addr %s500, 8
        %s502 = scalar_lea.vmem %s0, %s501
        %p503 = scmp.lt.s32.totalorder %s29, 1
        %s504 = scalar_select %p503, %s29, 1
        %s505 = smul.addr %s504, 8
        %s506 = scalar_lea.vmem %s1, %s505
        %v508 = vld [vmem:[%s502] sm:$0xff]
        %v509 = vld [vmem:[%s506] sm:$0xff]
        %v510 = vld [vmem:[%s2] sm:$0xff]
        %v511 = vld [vmem:[%s3] sm:$0xff]
        %v512 = vld [vmem:[%s4] sm:$0xff]
        %v513 = vld [vmem:[%s4 + $0x8] sm:$0x3]
        %514 = vadd.xlane.f32.xlu0 %v508
        %v515 = vpop.xlane.xlu0 %514
        %v516 = vrcp.pop 128.0
        %v517 = vmul.f32 %v515, %v516
        %v518 = vsub.f32 %v508, %v517
        %v519 = vmul.f32 %v518, %v518
        %520 = vadd.xlane.f32.xlu0 %v519
        %v521 = vpop.xlane.xlu0 %520
        %v522 = vmul.f32 %v521, 0.007874016
        %v523 = vrsqrt.pop %v522
        %v524 = vmul.f32 %v522, %v523
        %vm525 = vcmp.eq.f32.partialorder %v522, inf
        %v526 = vsel %vm525, %v522, %v524
        %vm527 = vcmp.eq.f32.partialorder %v522, 0.0
        %v528 = vand.u32 %v522, 2147483648
        %v529 = vsel %vm527, %v528, %v526
        %v530 = vadd.f32 %v529, 1e-06
        %v531 = vrsqrt.pop %v530
        %v532 = vmul.f32 %v518, %v531
        %v533 = vlaneseq
        %v534 = vshrl.u32 %v533, 7
        %v535 = vsub.s32 0, %v534
        %v536 = vrot.slane %v512, %v535
        %v537 = vmul.f32 %v536, %v532
        %v538 = vlaneseq
        %v539 = vshrl.u32 %v538, 7
        %v540 = vsub.s32 1, %v539
        %v541 = vrot.slane %v512, %v540
        %v542 = vadd.f32 %v537, %v541
        %v543 = vpack.c.bf16 %v542, %v542
        %v544 = vld [vmem:[%s5] sm:$0xff]
        %v545 = vld [vmem:[%s5 + $0x8] sm:$0xf]
        %v546 = vld [vmem:[%s5 + $0xc] sm:$0xff]
        %v547 = vld [vmem:[%s5 + $0x14] sm:$0xf]
        %v548 = vld [vmem:[%s5 + $0x18] sm:$0xff]
        %v549 = vld [vmem:[%s5 + $0x20] sm:$0xf]
        %v550 = vld [vmem:[%s5 + $0x24] sm:$0xff]
        %v551 = vld [vmem:[%s5 + $0x2c] sm:$0xf]
        %v552 = vld [vmem:[%s5 + $0x30] sm:$0xff]
        %v553 = vld [vmem:[%s5 + $0x38] sm:$0xf]
        %v554 = vld [vmem:[%s5 + $0x3c] sm:$0xff]
        %v555 = vld [vmem:[%s5 + $0x44] sm:$0xf]
        %v556 = vld [vmem:[%s5 + $0x48] sm:$0xff]
        %v557 = vld [vmem:[%s5 + $0x50] sm:$0xf]
        %v558 = vld [vmem:[%s5 + $0x54] sm:$0xff]
        %v559 = vld [vmem:[%s5 + $0x5c] sm:$0xf]
        %v560 = vld [vmem:[%s5 + $0x60] sm:$0xff]
        %v561 = vld [vmem:[%s5 + $0x68] sm:$0xf]
        %v562 = vld [vmem:[%s5 + $0x6c] sm:$0xff]
        %v563 = vld [vmem:[%s5 + $0x74] sm:$0xf]
        %v564 = vld [vmem:[%s5 + $0x78] sm:$0xff]
        %v565 = vld [vmem:[%s5 + $0x80] sm:$0xf]
        %v566 = vld [vmem:[%s5 + $0x84] sm:$0xff]
        %v567 = vld [vmem:[%s5 + $0x8c] sm:$0xf]
        %v568 = vld [vmem:[%s5 + $0x90] sm:$0xff]
        %v569 = vld [vmem:[%s5 + $0x98] sm:$0xf]
        %v570 = vld [vmem:[%s5 + $0x9c] sm:$0xff]
        %v571 = vld [vmem:[%s5 + $0xa4] sm:$0xf]
        %v572 = vld [vmem:[%s5 + $0xa8] sm:$0xff]
        %v573 = vld [vmem:[%s5 + $0xb0] sm:$0xf]
        %v574 = vld [vmem:[%s5 + $0xb4] sm:$0xff]
        %v575 = vld [vmem:[%s5 + $0xbc] sm:$0xf]
        %v576 = vld [vmem:[%s6] sm:$0x7]
        %v578 = vlaneseq
        %v579 = vshrl.u32 %v578, 7
        %v580 = vsub.s32 0, %v579
        %v581 = vrot.slane %v576, %v580
        %v582 = vlaneseq
        %v583 = vshrl.u32 %v582, 7
        %v584 = vsub.s32 1, %v583
        %v585 = vrot.slane %v576, %v584
        %v586 = vlaneseq
        %v587 = vshrl.u32 %v586, 7
        %v588 = vsub.s32 2, %v587
        %v589 = vrot.slane %v576, %v588
        %v625 = vunpack.c.l.b16 %v544
        %v626 = vunpack.c.h.b16 %v544
        %v627 = vunpack.c.l.b16 %v545
        %v628 = vunpack.c.l.b16 %v546
        %v629 = vunpack.c.h.b16 %v546
        %v630 = vunpack.c.l.b16 %v547
        %v631 = vunpack.c.l.b16 %v548
        %v632 = vunpack.c.h.b16 %v548
        %v633 = vunpack.c.l.b16 %v549
        %v634 = vunpack.c.l.b16 %v550
        %v635 = vunpack.c.h.b16 %v550
        %v636 = vunpack.c.l.b16 %v551
        %v637 = vunpack.c.l.b16 %v552
        %v638 = vunpack.c.h.b16 %v552
        %v639 = vunpack.c.l.b16 %v553
        %v640 = vunpack.c.l.b16 %v554
        %v641 = vunpack.c.h.b16 %v554
        %v642 = vunpack.c.l.b16 %v555
        %v643 = vunpack.c.l.b16 %v556
        %v644 = vunpack.c.h.b16 %v556
        %v645 = vunpack.c.l.b16 %v557
        %v646 = vunpack.c.l.b16 %v558
        %v647 = vunpack.c.h.b16 %v558
        %v648 = vunpack.c.l.b16 %v559
        %v649 = vunpack.c.l.b16 %v560
        %v650 = vunpack.c.h.b16 %v560
        %v651 = vunpack.c.l.b16 %v561
        %v652 = vunpack.c.l.b16 %v562
        %v653 = vunpack.c.h.b16 %v562
        %v654 = vunpack.c.l.b16 %v563
        %v655 = vunpack.c.l.b16 %v564
        %v656 = vunpack.c.h.b16 %v564
        %v657 = vunpack.c.l.b16 %v565
        %v658 = vunpack.c.l.b16 %v566
        %v659 = vunpack.c.h.b16 %v566
        %v660 = vunpack.c.l.b16 %v567
        %v661 = vunpack.c.l.b16 %v568
        %v662 = vunpack.c.h.b16 %v568
        %v663 = vunpack.c.l.b16 %v569
        %v664 = vunpack.c.l.b16 %v570
        %v665 = vunpack.c.h.b16 %v570
        %v666 = vunpack.c.l.b16 %v571
        %v667 = vunpack.c.l.b16 %v572
        %v668 = vunpack.c.h.b16 %v572
        %v669 = vunpack.c.l.b16 %v573
        %v670 = vunpack.c.l.b16 %v574
        %v671 = vunpack.c.h.b16 %v574
        %v672 = vunpack.c.l.b16 %v575
        %v673 = vpack.c.b16 %v628, %v625
        %v674 = vpack.c.b16 %v629, %v626
        %v675 = vpack.c.b16 %v630, %v627
        %v676 = vpack.c.b16 %v634, %v631
        %v677 = vpack.c.b16 %v635, %v632
        %v678 = vpack.c.b16 %v636, %v633
        %v679 = vpack.c.b16 %v640, %v637
        %v680 = vpack.c.b16 %v641, %v638
        %v681 = vpack.c.b16 %v642, %v639
        %v682 = vpack.c.b16 %v646, %v643
        %v683 = vpack.c.b16 %v647, %v644
        %v684 = vpack.c.b16 %v648, %v645
        %v685 = vpack.c.b16 %v652, %v649
        %v686 = vpack.c.b16 %v653, %v650
        %v687 = vpack.c.b16 %v654, %v651
        %v688 = vpack.c.b16 %v658, %v655
        %v689 = vpack.c.b16 %v659, %v656
        %v690 = vpack.c.b16 %v660, %v657
        %v691 = vpack.c.b16 %v664, %v661
        %v692 = vpack.c.b16 %v665, %v662
        %v693 = vpack.c.b16 %v666, %v663
        %v694 = vpack.c.b16 %v670, %v667
        %v695 = vpack.c.b16 %v671, %v668
        %v696 = vpack.c.b16 %v672, %v669
        %721 = vmatprep.subr.bf16.mxu0 %v695
        %722 = vmatpush1.bf16.msra.mxu0 %v694
        %723 = vmatprep.subr.bf16.mxu0 %v692
        %724 = vmatpush1.bf16.msra.mxu0 %v691
        %725 = vmatprep.subr.bf16.mxu0 %v689
        %726 = vmatpush1.bf16.msra.mxu0 %v688
        %727 = vmatprep.subr.bf16.mxu0 %v686
        %728 = vmatpush1.bf16.msra.mxu0 %v685
        %729 = vmatprep.subr.bf16.mxu0 %v683
        %730 = vmatpush1.bf16.msra.mxu0 %v682
        %731 = vmatprep.subr.bf16.mxu0 %v680
        %732 = vmatpush1.bf16.msra.mxu0 %v679
        %733 = vmatprep.subr.bf16.mxu0 %v677
        %734 = vmatpush1.bf16.msra.mxu0 %v676
        %735 = vmatprep.subr.bf16.mxu0 %v674
        %736 = vmatpush1.bf16.msra.mxu0 %v673
        %737 = vmatprep.subr.bf16.mxu0 0
        %738 = vmatpush2.bf16.msra.mxu0 0
        %739 = vmatprep.subr.bf16.mxu0 0
        %740 = vmatpush2.bf16.msra.mxu0 0
        %741 = vmatprep.subr.bf16.mxu0 0
        %742 = vmatpush2.bf16.msra.mxu0 0
        %743 = vmatprep.subr.bf16.mxu0 0
        %744 = vmatpush2.bf16.msra.mxu0 0
        %745 = vmatprep.subr.bf16.mxu0 0
        %746 = vmatpush2.bf16.msra.mxu0 0
        %747 = vmatprep.subr.bf16.mxu0 0
        %748 = vmatpush2.bf16.msra.mxu0 0
        %749 = vmatprep.subr.bf16.mxu0 0
        %750 = vmatpush2.bf16.msra.mxu0 0
        %751 = vmatprep.subr.bf16.mxu0 0
        %752 = vmatpush2.bf16.msra.mxu0 0
        %753 = vmatprep.mubr.bf16.mxu0 0
        %754 = vmatmul.mubr.bf16.gmra.mxu0 %v543
        %v755 = vpop.f32.mrf.mxu0
        %v756 = vadd.f32 %v581, %v755
        %v757 = vpop.f32.mrf.mxu0
        %v758 = vadd.f32 %v585, %v757
        %v759 = vpop.f32.mrf.mxu0
        %v760 = vpop.f32.mrf.mxu0
        %761 = vdwg.mxu0
        %762 = vmatprep.subr.bf16.mxu0 0
        %763 = vmatpush1.bf16.msra.mxu0 %v696
        %764 = vmatprep.subr.bf16.mxu0 0
        %765 = vmatpush1.bf16.msra.mxu0 %v693
        %766 = vmatprep.subr.bf16.mxu0 0
        %767 = vmatpush1.bf16.msra.mxu0 %v690
        %768 = vmatprep.subr.bf16.mxu0 0
        %769 = vmatpush1.bf16.msra.mxu0 %v687
        %770 = vmatprep.subr.bf16.mxu0 0
        %771 = vmatpush1.bf16.msra.mxu0 %v684
        %772 = vmatprep.subr.bf16.mxu0 0
        %773 = vmatpush1.bf16.msra.mxu0 %v681
        %774 = vmatprep.subr.bf16.mxu0 0
        %775 = vmatpush1.bf16.msra.mxu0 %v678
        %776 = vmatprep.subr.bf16.mxu0 0
        %777 = vmatpush1.bf16.msra.mxu0 %v675
        %778 = vmatprep.subr.bf16.mxu0 0
        %779 = vmatpush2.bf16.msra.mxu0 0
        %780 = vmatprep.subr.bf16.mxu0 0
        %781 = vmatpush2.bf16.msra.mxu0 0
        %782 = vmatprep.subr.bf16.mxu0 0
        %783 = vmatpush2.bf16.msra.mxu0 0
        %784 = vmatprep.subr.bf16.mxu0 0
        %785 = vmatpush2.bf16.msra.mxu0 0
        %786 = vmatprep.subr.bf16.mxu0 0
        %787 = vmatpush2.bf16.msra.mxu0 0
        %788 = vmatprep.subr.bf16.mxu0 0
        %789 = vmatpush2.bf16.msra.mxu0 0
        %790 = vmatprep.subr.bf16.mxu0 0
        %791 = vmatpush2.bf16.msra.mxu0 0
        %792 = vmatprep.subr.bf16.mxu0 0
        %793 = vmatpush2.bf16.msra.mxu0 0
        %794 = vmatprep.mubr.bf16.mxu0 0
        %795 = vmatmul.mubr.bf16.gmra.mxu0 %v543
        %v796 = vpop.f32.mrf.mxu0
        %v797 = vadd.f32 %v589, %v796
        %v798 = vpop.f32.mrf.mxu0
        %v799 = vpop.f32.mrf.mxu0
        %v800 = vpop.f32.mrf.mxu0
        %801 = vdwg.mxu0
        %v802 = vpack.c.bf16 %v756, %v756
        %v803 = vpack.c.bf16 %v758, %v758
        %v804 = vpack.c.bf16 %v797, %v797
        %vm805 = vcmask 261120
        %v807 = vsel %vm805, %v802, 0
        %v810 = vsel %vm805, %v803, 0
        %812 = vmatprep.subr.bf16.mxu0 0
        %813 = vmatpush1.bf16.xpose.msra.mxu0 0
        %814 = vmatprep.subr.bf16.mxu0 0
        %815 = vmatpush1.bf16.xpose.msra.mxu0 0
        %816 = vmatprep.subr.bf16.mxu0 0
        %817 = vmatpush1.bf16.xpose.msra.mxu0 0
        %818 = vmatprep.subr.bf16.mxu0 0
        %819 = vmatpush1.bf16.xpose.msra.mxu0 0
        %820 = vmatprep.subr.bf16.mxu0 0
        %821 = vmatpush1.bf16.xpose.msra.mxu0 0
        %822 = vmatprep.subr.bf16.mxu0 0
        %823 = vmatpush1.bf16.xpose.msra.mxu0 0
        %824 = vmatprep.subr.bf16.mxu0 0
        %825 = vmatpush1.bf16.xpose.msra.mxu0 0
        %826 = vmatprep.subr.bf16.mxu0 0
        %827 = vmatpush1.bf16.xpose.msra.mxu0 %v810
        %828 = vmatprep.subr.bf16.mxu0 0
        %829 = vmatpush2.bf16.xpose.msra.mxu0 0
        %830 = vmatprep.subr.bf16.mxu0 0
        %831 = vmatpush2.bf16.xpose.msra.mxu0 0
        %832 = vmatprep.subr.bf16.mxu0 0
        %833 = vmatpush2.bf16.xpose.msra.mxu0 0
        %834 = vmatprep.subr.bf16.mxu0 0
        %835 = vmatpush2.bf16.xpose.msra.mxu0 0
        %836 = vmatprep.subr.bf16.mxu0 0
        %837 = vmatpush2.bf16.xpose.msra.mxu0 0
        %838 = vmatprep.subr.bf16.mxu0 0
        %839 = vmatpush2.bf16.xpose.msra.mxu0 0
        %840 = vmatprep.subr.bf16.mxu0 0
        %841 = vmatpush2.bf16.xpose.msra.mxu0 0
        %842 = vmatprep.subr.bf16.mxu0 0
        %843 = vmatpush2.bf16.xpose.msra.mxu0 0
        %844 = vmatprep.mubr.bf16.mxu0 0
        %845 = vmatmul.mubr.bf16.gmra.mxu0 %v807
        %v846 = vpop.f32.mrf.mxu0
        %v847 = vadd.f32 %v510, %v846
        %v848 = vpop.f32.mrf.mxu0
        %v849 = vpop.f32.mrf.mxu0
        %v850 = vpop.f32.mrf.mxu0
        %851 = vdwg.mxu0
        %vm852 = vcmask 64512
        %v853 = vsel %vm852, %v847, -inf
        %854 = vmax.xlane.f32.xlu0 %v853
        %v855 = vpop.xlane.xlu0 %854
        %v856 = vsub.f32 %v847, %v855
        %v857 = vmul.f32 %v856, 1.442695
        %v858 = vpow.pop %v857
        %v859 = vsel %vm852, %v858, 0.0
        %860 = vadd.xlane.f32.xlu0 %v859
        %v861 = vpop.xlane.xlu0 %860
        %v862 = vrcp.pop %v861
        %v863 = vmul.f32 %v858, %v862
        %v864 = vpack.c.bf16 %v863, %v863
        %v866 = vsel %vm852, %v864, 0
        %vm868 = vcmask 1043456
        %v870 = vsel %vm868, %v804, 0
        %872 = vmatprep.subr.bf16.mxu0 0
        %873 = vmatpush1.bf16.msra.mxu0 0
        %874 = vmatprep.subr.bf16.mxu0 0
        %875 = vmatpush1.bf16.msra.mxu0 0
        %876 = vmatprep.subr.bf16.mxu0 0
        %877 = vmatpush1.bf16.msra.mxu0 0
        %878 = vmatprep.subr.bf16.mxu0 0
        %879 = vmatpush1.bf16.msra.mxu0 0
        %880 = vmatprep.subr.bf16.mxu0 0
        %881 = vmatpush1.bf16.msra.mxu0 0
        %882 = vmatprep.subr.bf16.mxu0 0
        %883 = vmatpush1.bf16.msra.mxu0 0
        %884 = vmatprep.subr.bf16.mxu0 0
        %885 = vmatpush1.bf16.msra.mxu0 0
        %886 = vmatprep.subr.bf16.mxu0 0
        %887 = vmatpush1.bf16.msra.mxu0 %v870
        %888 = vmatprep.subr.bf16.mxu0 0
        %889 = vmatpush2.bf16.msra.mxu0 0
        %890 = vmatprep.subr.bf16.mxu0 0
        %891 = vmatpush2.bf16.msra.mxu0 0
        %892 = vmatprep.subr.bf16.mxu0 0
        %893 = vmatpush2.bf16.msra.mxu0 0
        %894 = vmatprep.subr.bf16.mxu0 0
        %895 = vmatpush2.bf16.msra.mxu0 0
        %896 = vmatprep.subr.bf16.mxu0 0
        %897 = vmatpush2.bf16.msra.mxu0 0
        %898 = vmatprep.subr.bf16.mxu0 0
        %899 = vmatpush2.bf16.msra.mxu0 0
        %900 = vmatprep.subr.bf16.mxu0 0
        %901 = vmatpush2.bf16.msra.mxu0 0
        %902 = vmatprep.subr.bf16.mxu0 0
        %903 = vmatpush2.bf16.msra.mxu0 0
        %904 = vmatprep.mubr.bf16.mxu0 0
        %905 = vmatmul.mubr.bf16.gmra.mxu0 %v866
        %v906 = vpop.f32.mrf.mxu0
        %v907 = vadd.f32 0.0, %v906
        %v908 = vpop.f32.mrf.mxu0
        %v909 = vpop.f32.mrf.mxu0
        %v910 = vpop.f32.mrf.mxu0
        %911 = vdwg.mxu0
        %913 = vrot.lane.b32.xlu0 %v802, 96
        %v914 = vpop.permute.xlu0 %913
        %916 = vrot.lane.b32.xlu0 %v803, 96
        %v917 = vpop.permute.xlu0 %916
        %v919 = vsel %vm805, %v914, 0
        %v922 = vsel %vm805, %v917, 0
        %924 = vmatprep.subr.bf16.mxu0 0
        %925 = vmatpush1.bf16.xpose.msra.mxu0 0
        %926 = vmatprep.subr.bf16.mxu0 0
        %927 = vmatpush1.bf16.xpose.msra.mxu0 0
        %928 = vmatprep.subr.bf16.mxu0 0
        %929 = vmatpush1.bf16.xpose.msra.mxu0 0
        %930 = vmatprep.subr.bf16.mxu0 0
        %931 = vmatpush1.bf16.xpose.msra.mxu0 0
        %932 = vmatprep.subr.bf16.mxu0 0
        %933 = vmatpush1.bf16.xpose.msra.mxu0 0
        %934 = vmatprep.subr.bf16.mxu0 0
        %935 = vmatpush1.bf16.xpose.msra.mxu0 0
        %936 = vmatprep.subr.bf16.mxu0 0
        %937 = vmatpush1.bf16.xpose.msra.mxu0 0
        %938 = vmatprep.subr.bf16.mxu0 0
        %939 = vmatpush1.bf16.xpose.msra.mxu0 %v922
        %940 = vmatprep.subr.bf16.mxu0 0
        %941 = vmatpush2.bf16.xpose.msra.mxu0 0
        %942 = vmatprep.subr.bf16.mxu0 0
        %943 = vmatpush2.bf16.xpose.msra.mxu0 0
        %944 = vmatprep.subr.bf16.mxu0 0
        %945 = vmatpush2.bf16.xpose.msra.mxu0 0
        %946 = vmatprep.subr.bf16.mxu0 0
        %947 = vmatpush2.bf16.xpose.msra.mxu0 0
        %948 = vmatprep.subr.bf16.mxu0 0
        %949 = vmatpush2.bf16.xpose.msra.mxu0 0
        %950 = vmatprep.subr.bf16.mxu0 0
        %951 = vmatpush2.bf16.xpose.msra.mxu0 0
        %952 = vmatprep.subr.bf16.mxu0 0
        %953 = vmatpush2.bf16.xpose.msra.mxu0 0
        %954 = vmatprep.subr.bf16.mxu0 0
        %955 = vmatpush2.bf16.xpose.msra.mxu0 0
        %956 = vmatprep.mubr.bf16.mxu0 0
        %957 = vmatmul.mubr.bf16.gmra.mxu0 %v919
        %v958 = vpop.f32.mrf.mxu0
        %v959 = vadd.f32 %v510, %v958
        %v960 = vpop.f32.mrf.mxu0
        %v961 = vpop.f32.mrf.mxu0
        %v962 = vpop.f32.mrf.mxu0
        %963 = vdwg.mxu0
        %v964 = vsel %vm852, %v959, -inf
        %965 = vmax.xlane.f32.xlu0 %v964
        %v966 = vpop.xlane.xlu0 %965
        %v967 = vsub.f32 %v959, %v966
        %v968 = vmul.f32 %v967, 1.442695
        %v969 = vpow.pop %v968
        %v970 = vsel %vm852, %v969, 0.0
        %971 = vadd.xlane.f32.xlu0 %v970
        %v972 = vpop.xlane.xlu0 %971
        %v973 = vrcp.pop %v972
        %v974 = vmul.f32 %v969, %v973
        %v975 = vpack.c.bf16 %v974, %v974
        %977 = vrot.lane.b32.xlu0 %v804, 96
        %v978 = vpop.permute.xlu0 %977
        %v980 = vsel %vm852, %v975, 0
        %v983 = vsel %vm868, %v978, 0
        %985 = vmatprep.subr.bf16.mxu0 0
        %986 = vmatpush1.bf16.msra.mxu0 0
        %987 = vmatprep.subr.bf16.mxu0 0
        %988 = vmatpush1.bf16.msra.mxu0 0
        %989 = vmatprep.subr.bf16.mxu0 0
        %990 = vmatpush1.bf16.msra.mxu0 0
        %991 = vmatprep.subr.bf16.mxu0 0
        %992 = vmatpush1.bf16.msra.mxu0 0
        %993 = vmatprep.subr.bf16.mxu0 0
        %994 = vmatpush1.bf16.msra.mxu0 0
        %995 = vmatprep.subr.bf16.mxu0 0
        %996 = vmatpush1.bf16.msra.mxu0 0
        %997 = vmatprep.subr.bf16.mxu0 0
        %998 = vmatpush1.bf16.msra.mxu0 0
        %999 = vmatprep.subr.bf16.mxu0 0
        %1000 = vmatpush1.bf16.msra.mxu0 %v983
        %1001 = vmatprep.subr.bf16.mxu0 0
        %1002 = vmatpush2.bf16.msra.mxu0 0
        %1003 = vmatprep.subr.bf16.mxu0 0
        %1004 = vmatpush2.bf16.msra.mxu0 0
        %1005 = vmatprep.subr.bf16.mxu0 0
        %1006 = vmatpush2.bf16.msra.mxu0 0
        %1007 = vmatprep.subr.bf16.mxu0 0
        %1008 = vmatpush2.bf16.msra.mxu0 0
        %1009 = vmatprep.subr.bf16.mxu0 0
        %1010 = vmatpush2.bf16.msra.mxu0 0
        %1011 = vmatprep.subr.bf16.mxu0 0
        %1012 = vmatpush2.bf16.msra.mxu0 0
        %1013 = vmatprep.subr.bf16.mxu0 0
        %1014 = vmatpush2.bf16.msra.mxu0 0
        %1015 = vmatprep.subr.bf16.mxu0 0
        %1016 = vmatpush2.bf16.msra.mxu0 0
        %1017 = vmatprep.mubr.bf16.mxu0 0
        %1018 = vmatmul.mubr.bf16.gmra.mxu0 %v980
        %v1019 = vpop.f32.mrf.mxu0
        %v1020 = vadd.f32 0.0, %v1019
        %v1021 = vpop.f32.mrf.mxu0
        %v1022 = vpop.f32.mrf.mxu0
        %v1023 = vpop.f32.mrf.mxu0
        %1024 = vdwg.mxu0
        %1025 = vrot.lane.b32.xlu0 %v802, 64
        %v1026 = vpop.permute.xlu0 %1025
        %1027 = vrot.lane.b32.xlu0 %v803, 64
        %v1028 = vpop.permute.xlu0 %1027
        %v1030 = vsel %vm805, %v1026, 0
        %v1033 = vsel %vm805, %v1028, 0
        %1035 = vmatprep.subr.bf16.mxu0 0
        %1036 = vmatpush1.bf16.xpose.msra.mxu0 0
        %1037 = vmatprep.subr.bf16.mxu0 0
        %1038 = vmatpush1.bf16.xpose.msra.mxu0 0
        %1039 = vmatprep.subr.bf16.mxu0 0
        %1040 = vmatpush1.bf16.xpose.msra.mxu0 0
        %1041 = vmatprep.subr.bf16.mxu0 0
        %1042 = vmatpush1.bf16.xpose.msra.mxu0 0
        %1043 = vmatprep.subr.bf16.mxu0 0
        %1044 = vmatpush1.bf16.xpose.msra.mxu0 0
        %1045 = vmatprep.subr.bf16.mxu0 0
        %1046 = vmatpush1.bf16.xpose.msra.mxu0 0
        %1047 = vmatprep.subr.bf16.mxu0 0
        %1048 = vmatpush1.bf16.xpose.msra.mxu0 0
        %1049 = vmatprep.subr.bf16.mxu0 0
        %1050 = vmatpush1.bf16.xpose.msra.mxu0 %v1033
        %1051 = vmatprep.subr.bf16.mxu0 0
        %1052 = vmatpush2.bf16.xpose.msra.mxu0 0
        %1053 = vmatprep.subr.bf16.mxu0 0
        %1054 = vmatpush2.bf16.xpose.msra.mxu0 0
        %1055 = vmatprep.subr.bf16.mxu0 0
        %1056 = vmatpush2.bf16.xpose.msra.mxu0 0
        %1057 = vmatprep.subr.bf16.mxu0 0
        %1058 = vmatpush2.bf16.xpose.msra.mxu0 0
        %1059 = vmatprep.subr.bf16.mxu0 0
        %1060 = vmatpush2.bf16.xpose.msra.mxu0 0
        %1061 = vmatprep.subr.bf16.mxu0 0
        %1062 = vmatpush2.bf16.xpose.msra.mxu0 0
        %1063 = vmatprep.subr.bf16.mxu0 0
        %1064 = vmatpush2.bf16.xpose.msra.mxu0 0
        %1065 = vmatprep.subr.bf16.mxu0 0
        %1066 = vmatpush2.bf16.xpose.msra.mxu0 0
        %1067 = vmatprep.mubr.bf16.mxu0 0
        %1068 = vmatmul.mubr.bf16.gmra.mxu0 %v1030
        %v1069 = vpop.f32.mrf.mxu0
        %v1070 = vadd.f32 %v510, %v1069
        %v1071 = vpop.f32.mrf.mxu0
        %v1072 = vpop.f32.mrf.mxu0
        %v1073 = vpop.f32.mrf.mxu0
        %1074 = vdwg.mxu0
        %v1075 = vsel %vm852, %v1070, -inf
        %1076 = vmax.xlane.f32.xlu0 %v1075
        %v1077 = vpop.xlane.xlu0 %1076
        %v1078 = vsub.f32 %v1070, %v1077
        %v1079 = vmul.f32 %v1078, 1.442695
        %v1080 = vpow.pop %v1079
        %v1081 = vsel %vm852, %v1080, 0.0
        %1082 = vadd.xlane.f32.xlu0 %v1081
        %v1083 = vpop.xlane.xlu0 %1082
        %v1084 = vrcp.pop %v1083
        %v1085 = vmul.f32 %v1080, %v1084
        %v1086 = vpack.c.bf16 %v1085, %v1085
        %1087 = vrot.lane.b32.xlu0 %v804, 64
        %v1088 = vpop.permute.xlu0 %1087
        %v1090 = vsel %vm852, %v1086, 0
        %v1093 = vsel %vm868, %v1088, 0
        %1095 = vmatprep.subr.bf16.mxu0 0
        %1096 = vmatpush1.bf16.msra.mxu0 0
        %1097 = vmatprep.subr.bf16.mxu0 0
        %1098 = vmatpush1.bf16.msra.mxu0 0
        %1099 = vmatprep.subr.bf16.mxu0 0
        %1100 = vmatpush1.bf16.msra.mxu0 0
        %1101 = vmatprep.subr.bf16.mxu0 0
        %1102 = vmatpush1.bf16.msra.mxu0 0
        %1103 = vmatprep.subr.bf16.mxu0 0
        %1104 = vmatpush1.bf16.msra.mxu0 0
        %1105 = vmatprep.subr.bf16.mxu0 0
        %1106 = vmatpush1.bf16.msra.mxu0 0
        %1107 = vmatprep.subr.bf16.mxu0 0
        %1108 = vmatpush1.bf16.msra.mxu0 0
        %1109 = vmatprep.subr.bf16.mxu0 0
        %1110 = vmatpush1.bf16.msra.mxu0 %v1093
        %1111 = vmatprep.subr.bf16.mxu0 0
        %1112 = vmatpush2.bf16.msra.mxu0 0
        %1113 = vmatprep.subr.bf16.mxu0 0
        %1114 = vmatpush2.bf16.msra.mxu0 0
        %1115 = vmatprep.subr.bf16.mxu0 0
        %1116 = vmatpush2.bf16.msra.mxu0 0
        %1117 = vmatprep.subr.bf16.mxu0 0
        %1118 = vmatpush2.bf16.msra.mxu0 0
        %1119 = vmatprep.subr.bf16.mxu0 0
        %1120 = vmatpush2.bf16.msra.mxu0 0
        %1121 = vmatprep.subr.bf16.mxu0 0
        %1122 = vmatpush2.bf16.msra.mxu0 0
        %1123 = vmatprep.subr.bf16.mxu0 0
        %1124 = vmatpush2.bf16.msra.mxu0 0
        %1125 = vmatprep.subr.bf16.mxu0 0
        %1126 = vmatpush2.bf16.msra.mxu0 0
        %1127 = vmatprep.mubr.bf16.mxu0 0
        %1128 = vmatmul.mubr.bf16.gmra.mxu0 %v1090
        %v1129 = vpop.f32.mrf.mxu0
        %v1130 = vadd.f32 0.0, %v1129
        %v1131 = vpop.f32.mrf.mxu0
        %v1132 = vpop.f32.mrf.mxu0
        %v1133 = vpop.f32.mrf.mxu0
        %1134 = vdwg.mxu0
        %1135 = vrot.lane.b32.xlu0 %v802, 32
        %v1136 = vpop.permute.xlu0 %1135
        %1137 = vrot.lane.b32.xlu0 %v803, 32
        %v1138 = vpop.permute.xlu0 %1137
        %v1140 = vsel %vm805, %v1136, 0
        %v1143 = vsel %vm805, %v1138, 0
        %1145 = vmatprep.subr.bf16.mxu0 0
        %1146 = vmatpush1.bf16.xpose.msra.mxu0 0
        %1147 = vmatprep.subr.bf16.mxu0 0
        %1148 = vmatpush1.bf16.xpose.msra.mxu0 0
        %1149 = vmatprep.subr.bf16.mxu0 0
        %1150 = vmatpush1.bf16.xpose.msra.mxu0 0
        %1151 = vmatprep.subr.bf16.mxu0 0
        %1152 = vmatpush1.bf16.xpose.msra.mxu0 0
        %1153 = vmatprep.subr.bf16.mxu0 0
        %1154 = vmatpush1.bf16.xpose.msra.mxu0 0
        %1155 = vmatprep.subr.bf16.mxu0 0
        %1156 = vmatpush1.bf16.xpose.msra.mxu0 0
        %1157 = vmatprep.subr.bf16.mxu0 0
        %1158 = vmatpush1.bf16.xpose.msra.mxu0 0
        %1159 = vmatprep.subr.bf16.mxu0 0
        %1160 = vmatpush1.bf16.xpose.msra.mxu0 %v1143
        %1161 = vmatprep.subr.bf16.mxu0 0
        %1162 = vmatpush2.bf16.xpose.msra.mxu0 0
        %1163 = vmatprep.subr.bf16.mxu0 0
        %1164 = vmatpush2.bf16.xpose.msra.mxu0 0
        %1165 = vmatprep.subr.bf16.mxu0 0
        %1166 = vmatpush2.bf16.xpose.msra.mxu0 0
        %1167 = vmatprep.subr.bf16.mxu0 0
        %1168 = vmatpush2.bf16.xpose.msra.mxu0 0
        %1169 = vmatprep.subr.bf16.mxu0 0
        %1170 = vmatpush2.bf16.xpose.msra.mxu0 0
        %1171 = vmatprep.subr.bf16.mxu0 0
        %1172 = vmatpush2.bf16.xpose.msra.mxu0 0
        %1173 = vmatprep.subr.bf16.mxu0 0
        %1174 = vmatpush2.bf16.xpose.msra.mxu0 0
        %1175 = vmatprep.subr.bf16.mxu0 0
        %1176 = vmatpush2.bf16.xpose.msra.mxu0 0
        %1177 = vmatprep.mubr.bf16.mxu0 0
        %1178 = vmatmul.mubr.bf16.gmra.mxu0 %v1140
        %v1179 = vpop.f32.mrf.mxu0
        %v1180 = vadd.f32 %v510, %v1179
        %v1181 = vpop.f32.mrf.mxu0
        %v1182 = vpop.f32.mrf.mxu0
        %v1183 = vpop.f32.mrf.mxu0
        %1184 = vdwg.mxu0
        %v1185 = vsel %vm852, %v1180, -inf
        %1186 = vmax.xlane.f32.xlu0 %v1185
        %v1187 = vpop.xlane.xlu0 %1186
        %v1188 = vsub.f32 %v1180, %v1187
        %v1189 = vmul.f32 %v1188, 1.442695
        %v1190 = vpow.pop %v1189
        %v1191 = vsel %vm852, %v1190, 0.0
        %1192 = vadd.xlane.f32.xlu0 %v1191
        %v1193 = vpop.xlane.xlu0 %1192
        %v1194 = vrcp.pop %v1193
        %v1195 = vmul.f32 %v1190, %v1194
        %v1196 = vpack.c.bf16 %v1195, %v1195
        %1197 = vrot.lane.b32.xlu0 %v804, 32
        %v1198 = vpop.permute.xlu0 %1197
        %v1200 = vsel %vm852, %v1196, 0
        %v1203 = vsel %vm868, %v1198, 0
        %1205 = vmatprep.subr.bf16.mxu0 0
        %1206 = vmatpush1.bf16.msra.mxu0 0
        %1207 = vmatprep.subr.bf16.mxu0 0
        %1208 = vmatpush1.bf16.msra.mxu0 0
        %1209 = vmatprep.subr.bf16.mxu0 0
        %1210 = vmatpush1.bf16.msra.mxu0 0
        %1211 = vmatprep.subr.bf16.mxu0 0
        %1212 = vmatpush1.bf16.msra.mxu0 0
        %1213 = vmatprep.subr.bf16.mxu0 0
        %1214 = vmatpush1.bf16.msra.mxu0 0
        %1215 = vmatprep.subr.bf16.mxu0 0
        %1216 = vmatpush1.bf16.msra.mxu0 0
        %1217 = vmatprep.subr.bf16.mxu0 0
        %1218 = vmatpush1.bf16.msra.mxu0 0
        %1219 = vmatprep.subr.bf16.mxu0 0
        %1220 = vmatpush1.bf16.msra.mxu0 %v1203
        %1221 = vmatprep.subr.bf16.mxu0 0
        %1222 = vmatpush2.bf16.msra.mxu0 0
        %1223 = vmatprep.subr.bf16.mxu0 0
        %1224 = vmatpush2.bf16.msra.mxu0 0
        %1225 = vmatprep.subr.bf16.mxu0 0
        %1226 = vmatpush2.bf16.msra.mxu0 0
        %1227 = vmatprep.subr.bf16.mxu0 0
        %1228 = vmatpush2.bf16.msra.mxu0 0
        %1229 = vmatprep.subr.bf16.mxu0 0
        %1230 = vmatpush2.bf16.msra.mxu0 0
        %1231 = vmatprep.subr.bf16.mxu0 0
        %1232 = vmatpush2.bf16.msra.mxu0 0
        %1233 = vmatprep.subr.bf16.mxu0 0
        %1234 = vmatpush2.bf16.msra.mxu0 0
        %1235 = vmatprep.subr.bf16.mxu0 0
        %1236 = vmatpush2.bf16.msra.mxu0 0
        %1237 = vmatprep.mubr.bf16.mxu0 0
        %1238 = vmatmul.mubr.bf16.gmra.mxu0 %v1200
        %v1239 = vpop.f32.mrf.mxu0
        %v1240 = vadd.f32 0.0, %v1239
        %v1241 = vpop.f32.mrf.mxu0
        %v1242 = vpop.f32.mrf.mxu0
        %v1243 = vpop.f32.mrf.mxu0
        %1244 = vdwg.mxu0
        %1246 = vrot.lane.b32.xlu0 %v1020, 32
        %v1247 = vpop.permute.xlu0 %1246
        %1250 = vrot.lane.b32.xlu0 %v1130, 64
        %v1251 = vpop.permute.xlu0 %1250
        %1254 = vrot.lane.b32.xlu0 %v1240, 96
        %v1255 = vpop.permute.xlu0 %1254
        %v1257 = vsel %vm805, %v907, %v1247
        %vm1258 = vcmask 523264
        %v1259 = vsel %vm1258, %v1257, %v1251
        %vm1260 = vcmask 785408
        %v1261 = vsel %vm1260, %v1259, %v1255
        %v1262 = vpack.c.bf16 %v1261, %v1261
        %v1263 = vld [vmem:[%s7] sm:$0xf]
        %v1264 = vld [vmem:[%s7 + $0x4] sm:$0xf]
        %v1265 = vld [vmem:[%s7 + $0x8] sm:$0xf]
        %v1266 = vld [vmem:[%s7 + $0xc] sm:$0xf]
        %v1267 = vld [vmem:[%s7 + $0x10] sm:$0xf]
        %v1268 = vld [vmem:[%s7 + $0x14] sm:$0xf]
        %v1269 = vld [vmem:[%s7 + $0x18] sm:$0xf]
        %v1270 = vld [vmem:[%s7 + $0x1c] sm:$0xf]
        %v1271 = vld [vmem:[%s7 + $0x20] sm:$0xf]
        %v1272 = vld [vmem:[%s7 + $0x24] sm:$0xf]
        %v1273 = vld [vmem:[%s7 + $0x28] sm:$0xf]
        %v1274 = vld [vmem:[%s7 + $0x2c] sm:$0xf]
        %v1275 = vld [vmem:[%s7 + $0x30] sm:$0xf]
        %v1276 = vld [vmem:[%s7 + $0x34] sm:$0xf]
        %v1277 = vld [vmem:[%s7 + $0x38] sm:$0xf]
        %v1278 = vld [vmem:[%s7 + $0x3c] sm:$0xf]
        %v1279 = vlaneseq
        %v1280 = vshrl.u32 %v1279, 7
        %v1281 = vsub.s32 6, %v1280
        %v1282 = vrot.slane %v512, %v1281
        %v1299 = vunpack.c.l.b16 %v1263
        %v1300 = vunpack.c.l.b16 %v1264
        %v1301 = vunpack.c.l.b16 %v1265
        %v1302 = vunpack.c.l.b16 %v1266
        %v1303 = vunpack.c.l.b16 %v1267
        %v1304 = vunpack.c.l.b16 %v1268
        %v1305 = vunpack.c.l.b16 %v1269
        %v1306 = vunpack.c.l.b16 %v1270
        %v1307 = vunpack.c.l.b16 %v1271
        %v1308 = vunpack.c.l.b16 %v1272
        %v1309 = vunpack.c.l.b16 %v1273
        %v1310 = vunpack.c.l.b16 %v1274
        %v1311 = vunpack.c.l.b16 %v1275
        %v1312 = vunpack.c.l.b16 %v1276
        %v1313 = vunpack.c.l.b16 %v1277
        %v1314 = vunpack.c.l.b16 %v1278
        %v1315 = vpack.c.b16 %v1300, %v1299
        %v1316 = vpack.c.b16 %v1302, %v1301
        %v1317 = vpack.c.b16 %v1304, %v1303
        %v1318 = vpack.c.b16 %v1306, %v1305
        %v1319 = vpack.c.b16 %v1308, %v1307
        %v1320 = vpack.c.b16 %v1310, %v1309
        %v1321 = vpack.c.b16 %v1312, %v1311
        %v1322 = vpack.c.b16 %v1314, %v1313
        %1331 = vmatprep.subr.bf16.mxu0 0
        %1332 = vmatpush1.bf16.msra.mxu0 %v1322
        %1333 = vmatprep.subr.bf16.mxu0 0
        %1334 = vmatpush1.bf16.msra.mxu0 %v1321
        %1335 = vmatprep.subr.bf16.mxu0 0
        %1336 = vmatpush1.bf16.msra.mxu0 %v1320
        %1337 = vmatprep.subr.bf16.mxu0 0
        %1338 = vmatpush1.bf16.msra.mxu0 %v1319
        %1339 = vmatprep.subr.bf16.mxu0 0
        %1340 = vmatpush1.bf16.msra.mxu0 %v1318
        %1341 = vmatprep.subr.bf16.mxu0 0
        %1342 = vmatpush1.bf16.msra.mxu0 %v1317
        %1343 = vmatprep.subr.bf16.mxu0 0
        %1344 = vmatpush1.bf16.msra.mxu0 %v1316
        %1345 = vmatprep.subr.bf16.mxu0 0
        %1346 = vmatpush1.bf16.msra.mxu0 %v1315
        %1347 = vmatprep.subr.bf16.mxu0 0
        %1348 = vmatpush2.bf16.msra.mxu0 0
        %1349 = vmatprep.subr.bf16.mxu0 0
        %1350 = vmatpush2.bf16.msra.mxu0 0
        %1351 = vmatprep.subr.bf16.mxu0 0
        %1352 = vmatpush2.bf16.msra.mxu0 0
        %1353 = vmatprep.subr.bf16.mxu0 0
        %1354 = vmatpush2.bf16.msra.mxu0 0
        %1355 = vmatprep.subr.bf16.mxu0 0
        %1356 = vmatpush2.bf16.msra.mxu0 0
        %1357 = vmatprep.subr.bf16.mxu0 0
        %1358 = vmatpush2.bf16.msra.mxu0 0
        %1359 = vmatprep.subr.bf16.mxu0 0
        %1360 = vmatpush2.bf16.msra.mxu0 0
        %1361 = vmatprep.subr.bf16.mxu0 0
        %1362 = vmatpush2.bf16.msra.mxu0 0
        %1363 = vmatprep.mubr.bf16.mxu0 0
        %1364 = vmatmul.mubr.bf16.gmra.mxu0 %v1262
        %v1365 = vpop.f32.mrf.mxu0
        %v1366 = vadd.f32 %v1282, %v1365
        %v1367 = vpop.f32.mrf.mxu0
        %v1368 = vpop.f32.mrf.mxu0
        %v1369 = vpop.f32.mrf.mxu0
        %1370 = vdwg.mxu0
        %v1371 = vadd.f32 %v508, %v1366
        %1372 = vadd.xlane.f32.xlu0 %v1371
        %v1373 = vpop.xlane.xlu0 %1372
        %v1374 = vmul.f32 %v1373, %v516
        %v1375 = vsub.f32 %v1371, %v1374
        %v1376 = vmul.f32 %v1375, %v1375
        %1377 = vadd.xlane.f32.xlu0 %v1376
        %v1378 = vpop.xlane.xlu0 %1377
        %v1379 = vmul.f32 %v1378, 0.007874016
        %v1380 = vrsqrt.pop %v1379
        %v1381 = vmul.f32 %v1379, %v1380
        %vm1382 = vcmp.eq.f32.partialorder %v1379, inf
        %v1383 = vsel %vm1382, %v1379, %v1381
        %vm1384 = vcmp.eq.f32.partialorder %v1379, 0.0
        %v1385 = vand.u32 %v1379, 2147483648
        %v1386 = vsel %vm1384, %v1385, %v1383
        %v1387 = vadd.f32 %v1386, 1e-06
        %v1388 = vrsqrt.pop %v1387
        %v1389 = vmul.f32 %v1375, %v1388
        %v1390 = vlaneseq
        %v1391 = vshrl.u32 %v1390, 7
        %v1392 = vsub.s32 2, %v1391
        %v1393 = vrot.slane %v512, %v1392
        %v1394 = vmul.f32 %v1393, %v1389
        %v1395 = vlaneseq
        %v1396 = vshrl.u32 %v1395, 7
        %v1397 = vsub.s32 3, %v1396
        %v1398 = vrot.slane %v512, %v1397
        %v1399 = vadd.f32 %v1394, %v1398
        %v1400 = vpack.c.bf16 %v1399, %v1399
        %v1401 = vld [vmem:[%s8] sm:$0xf]
        %v1402 = vld [vmem:[%s8 + $0x4] sm:$0xf]
        %v1403 = vld [vmem:[%s8 + $0x8] sm:$0xf]
        %v1404 = vld [vmem:[%s8 + $0xc] sm:$0xf]
        %v1405 = vld [vmem:[%s8 + $0x10] sm:$0xf]
        %v1406 = vld [vmem:[%s8 + $0x14] sm:$0xf]
        %v1407 = vld [vmem:[%s8 + $0x18] sm:$0xf]
        %v1408 = vld [vmem:[%s8 + $0x1c] sm:$0xf]
        %v1409 = vld [vmem:[%s8 + $0x20] sm:$0xf]
        %v1410 = vld [vmem:[%s8 + $0x24] sm:$0xf]
        %v1411 = vld [vmem:[%s8 + $0x28] sm:$0xf]
        %v1412 = vld [vmem:[%s8 + $0x2c] sm:$0xf]
        %v1413 = vld [vmem:[%s8 + $0x30] sm:$0xf]
        %v1414 = vld [vmem:[%s8 + $0x34] sm:$0xf]
        %v1415 = vld [vmem:[%s8 + $0x38] sm:$0xf]
        %v1416 = vld [vmem:[%s8 + $0x3c] sm:$0xf]
        %v1417 = vlaneseq
        %v1418 = vshrl.u32 %v1417, 7
        %v1419 = vsub.s32 7, %v1418
        %v1420 = vrot.slane %v512, %v1419
        %v1437 = vunpack.c.l.b16 %v1401
        %v1438 = vunpack.c.l.b16 %v1402
        %v1439 = vunpack.c.l.b16 %v1403
        %v1440 = vunpack.c.l.b16 %v1404
        %v1441 = vunpack.c.l.b16 %v1405
        %v1442 = vunpack.c.l.b16 %v1406
        %v1443 = vunpack.c.l.b16 %v1407
        %v1444 = vunpack.c.l.b16 %v1408
        %v1445 = vunpack.c.l.b16 %v1409
        %v1446 = vunpack.c.l.b16 %v1410
        %v1447 = vunpack.c.l.b16 %v1411
        %v1448 = vunpack.c.l.b16 %v1412
        %v1449 = vunpack.c.l.b16 %v1413
        %v1450 = vunpack.c.l.b16 %v1414
        %v1451 = vunpack.c.l.b16 %v1415
        %v1452 = vunpack.c.l.b16 %v1416
        %v1453 = vpack.c.b16 %v1438, %v1437
        %v1454 = vpack.c.b16 %v1440, %v1439
        %v1455 = vpack.c.b16 %v1442, %v1441
        %v1456 = vpack.c.b16 %v1444, %v1443
        %v1457 = vpack.c.b16 %v1446, %v1445
        %v1458 = vpack.c.b16 %v1448, %v1447
        %v1459 = vpack.c.b16 %v1450, %v1449
        %v1460 = vpack.c.b16 %v1452, %v1451
        %1469 = vmatprep.subr.bf16.mxu0 0
        %1470 = vmatpush1.bf16.msra.mxu0 %v1460
        %1471 = vmatprep.subr.bf16.mxu0 0
        %1472 = vmatpush1.bf16.msra.mxu0 %v1459
        %1473 = vmatprep.subr.bf16.mxu0 0
        %1474 = vmatpush1.bf16.msra.mxu0 %v1458
        %1475 = vmatprep.subr.bf16.mxu0 0
        %1476 = vmatpush1.bf16.msra.mxu0 %v1457
        %1477 = vmatprep.subr.bf16.mxu0 0
        %1478 = vmatpush1.bf16.msra.mxu0 %v1456
        %1479 = vmatprep.subr.bf16.mxu0 0
        %1480 = vmatpush1.bf16.msra.mxu0 %v1455
        %1481 = vmatprep.subr.bf16.mxu0 0
        %1482 = vmatpush1.bf16.msra.mxu0 %v1454
        %1483 = vmatprep.subr.bf16.mxu0 0
        %1484 = vmatpush1.bf16.msra.mxu0 %v1453
        %1485 = vmatprep.subr.bf16.mxu0 0
        %1486 = vmatpush2.bf16.msra.mxu0 0
        %1487 = vmatprep.subr.bf16.mxu0 0
        %1488 = vmatpush2.bf16.msra.mxu0 0
        %1489 = vmatprep.subr.bf16.mxu0 0
        %1490 = vmatpush2.bf16.msra.mxu0 0
        %1491 = vmatprep.subr.bf16.mxu0 0
        %1492 = vmatpush2.bf16.msra.mxu0 0
        %1493 = vmatprep.subr.bf16.mxu0 0
        %1494 = vmatpush2.bf16.msra.mxu0 0
        %1495 = vmatprep.subr.bf16.mxu0 0
        %1496 = vmatpush2.bf16.msra.mxu0 0
        %1497 = vmatprep.subr.bf16.mxu0 0
        %1498 = vmatpush2.bf16.msra.mxu0 0
        %1499 = vmatprep.subr.bf16.mxu0 0
        %1500 = vmatpush2.bf16.msra.mxu0 0
        %1501 = vmatprep.mubr.bf16.mxu0 0
        %1502 = vmatmul.mubr.bf16.gmra.mxu0 %v1400
        %v1503 = vpop.f32.mrf.mxu0
        %v1504 = vadd.f32 %v1420, %v1503
        %v1505 = vpop.f32.mrf.mxu0
        %v1506 = vpop.f32.mrf.mxu0
        %v1507 = vpop.f32.mrf.mxu0
        %1508 = vdwg.mxu0
        %v1509 = vpack.c.bf16 %v509, %v509
        %v1510 = vld [vmem:[%s9] sm:$0xff]
        %v1511 = vld [vmem:[%s9 + $0x8] sm:$0xff]
        %v1512 = vld [vmem:[%s9 + $0x10] sm:$0xff]
        %v1513 = vld [vmem:[%s9 + $0x18] sm:$0xff]
        %v1514 = vld [vmem:[%s9 + $0x20] sm:$0xff]
        %v1515 = vld [vmem:[%s9 + $0x28] sm:$0xff]
        %v1516 = vld [vmem:[%s9 + $0x30] sm:$0xff]
        %v1517 = vld [vmem:[%s9 + $0x38] sm:$0xff]
        %v1518 = vld [vmem:[%s9 + $0x40] sm:$0xff]
        %v1519 = vld [vmem:[%s9 + $0x48] sm:$0xff]
        %v1520 = vld [vmem:[%s9 + $0x50] sm:$0xff]
        %v1521 = vld [vmem:[%s9 + $0x58] sm:$0xff]
        %v1522 = vld [vmem:[%s9 + $0x60] sm:$0xff]
        %v1523 = vld [vmem:[%s9 + $0x68] sm:$0xff]
        %v1524 = vld [vmem:[%s9 + $0x70] sm:$0xff]
        %v1525 = vld [vmem:[%s9 + $0x78] sm:$0xff]
        %v1526 = vld [vmem:[%s10] sm:$0x3]
        %v1528 = vlaneseq
        %v1529 = vshrl.u32 %v1528, 7
        %v1530 = vsub.s32 0, %v1529
        %v1531 = vrot.slane %v1526, %v1530
        %v1532 = vlaneseq
        %v1533 = vshrl.u32 %v1532, 7
        %v1534 = vsub.s32 1, %v1533
        %v1535 = vrot.slane %v1526, %v1534
        %v1554 = vunpack.c.l.b16 %v1510
        %v1555 = vunpack.c.h.b16 %v1510
        %v1556 = vunpack.c.l.b16 %v1511
        %v1557 = vunpack.c.h.b16 %v1511
        %v1558 = vunpack.c.l.b16 %v1512
        %v1559 = vunpack.c.h.b16 %v1512
        %v1560 = vunpack.c.l.b16 %v1513
        %v1561 = vunpack.c.h.b16 %v1513
        %v1562 = vunpack.c.l.b16 %v1514
        %v1563 = vunpack.c.h.b16 %v1514
        %v1564 = vunpack.c.l.b16 %v1515
        %v1565 = vunpack.c.h.b16 %v1515
        %v1566 = vunpack.c.l.b16 %v1516
        %v1567 = vunpack.c.h.b16 %v1516
        %v1568 = vunpack.c.l.b16 %v1517
        %v1569 = vunpack.c.h.b16 %v1517
        %v1570 = vunpack.c.l.b16 %v1518
        %v1571 = vunpack.c.h.b16 %v1518
        %v1572 = vunpack.c.l.b16 %v1519
        %v1573 = vunpack.c.h.b16 %v1519
        %v1574 = vunpack.c.l.b16 %v1520
        %v1575 = vunpack.c.h.b16 %v1520
        %v1576 = vunpack.c.l.b16 %v1521
        %v1577 = vunpack.c.h.b16 %v1521
        %v1578 = vunpack.c.l.b16 %v1522
        %v1579 = vunpack.c.h.b16 %v1522
        %v1580 = vunpack.c.l.b16 %v1523
        %v1581 = vunpack.c.h.b16 %v1523
        %v1582 = vunpack.c.l.b16 %v1524
        %v1583 = vunpack.c.h.b16 %v1524
        %v1584 = vunpack.c.l.b16 %v1525
        %v1585 = vunpack.c.h.b16 %v1525
        %v1586 = vpack.c.b16 %v1556, %v1554
        %v1587 = vpack.c.b16 %v1557, %v1555
        %v1588 = vpack.c.b16 %v1560, %v1558
        %v1589 = vpack.c.b16 %v1561, %v1559
        %v1590 = vpack.c.b16 %v1564, %v1562
        %v1591 = vpack.c.b16 %v1565, %v1563
        %v1592 = vpack.c.b16 %v1568, %v1566
        %v1593 = vpack.c.b16 %v1569, %v1567
        %v1594 = vpack.c.b16 %v1572, %v1570
        %v1595 = vpack.c.b16 %v1573, %v1571
        %v1596 = vpack.c.b16 %v1576, %v1574
        %v1597 = vpack.c.b16 %v1577, %v1575
        %v1598 = vpack.c.b16 %v1580, %v1578
        %v1599 = vpack.c.b16 %v1581, %v1579
        %v1600 = vpack.c.b16 %v1584, %v1582
        %v1601 = vpack.c.b16 %v1585, %v1583
        %1618 = vmatprep.subr.bf16.mxu0 %v1601
        %1619 = vmatpush1.bf16.msra.mxu0 %v1600
        %1620 = vmatprep.subr.bf16.mxu0 %v1599
        %1621 = vmatpush1.bf16.msra.mxu0 %v1598
        %1622 = vmatprep.subr.bf16.mxu0 %v1597
        %1623 = vmatpush1.bf16.msra.mxu0 %v1596
        %1624 = vmatprep.subr.bf16.mxu0 %v1595
        %1625 = vmatpush1.bf16.msra.mxu0 %v1594
        %1626 = vmatprep.subr.bf16.mxu0 %v1593
        %1627 = vmatpush1.bf16.msra.mxu0 %v1592
        %1628 = vmatprep.subr.bf16.mxu0 %v1591
        %1629 = vmatpush1.bf16.msra.mxu0 %v1590
        %1630 = vmatprep.subr.bf16.mxu0 %v1589
        %1631 = vmatpush1.bf16.msra.mxu0 %v1588
        %1632 = vmatprep.subr.bf16.mxu0 %v1587
        %1633 = vmatpush1.bf16.msra.mxu0 %v1586
        %1634 = vmatprep.subr.bf16.mxu0 0
        %1635 = vmatpush2.bf16.msra.mxu0 0
        %1636 = vmatprep.subr.bf16.mxu0 0
        %1637 = vmatpush2.bf16.msra.mxu0 0
        %1638 = vmatprep.subr.bf16.mxu0 0
        %1639 = vmatpush2.bf16.msra.mxu0 0
        %1640 = vmatprep.subr.bf16.mxu0 0
        %1641 = vmatpush2.bf16.msra.mxu0 0
        %1642 = vmatprep.subr.bf16.mxu0 0
        %1643 = vmatpush2.bf16.msra.mxu0 0
        %1644 = vmatprep.subr.bf16.mxu0 0
        %1645 = vmatpush2.bf16.msra.mxu0 0
        %1646 = vmatprep.subr.bf16.mxu0 0
        %1647 = vmatpush2.bf16.msra.mxu0 0
        %1648 = vmatprep.subr.bf16.mxu0 0
        %1649 = vmatpush2.bf16.msra.mxu0 0
        %1650 = vmatprep.mubr.bf16.mxu0 0
        %1651 = vmatmul.mubr.bf16.gmra.mxu0 %v1509
        %v1652 = vpop.f32.mrf.mxu0
        %v1653 = vadd.f32 %v1531, %v1652
        %v1654 = vpop.f32.mrf.mxu0
        %v1655 = vadd.f32 %v1535, %v1654
        %v1656 = vpop.f32.mrf.mxu0
        %v1657 = vpop.f32.mrf.mxu0
        %1658 = vdwg.mxu0
        %v1659 = vpack.c.bf16 %v1504, %v1504
        %v1660 = vpack.c.bf16 %v1653, %v1653
        %v1661 = vpack.c.bf16 %v1655, %v1655
        %v1663 = vsel %vm805, %v1659, 0
        %v1666 = vsel %vm805, %v1660, 0
        %1668 = vmatprep.subr.bf16.mxu0 0
        %1669 = vmatpush1.bf16.xpose.msra.mxu0 0
        %1670 = vmatprep.subr.bf16.mxu0 0
        %1671 = vmatpush1.bf16.xpose.msra.mxu0 0
        %1672 = vmatprep.subr.bf16.mxu0 0
        %1673 = vmatpush1.bf16.xpose.msra.mxu0 0
        %1674 = vmatprep.subr.bf16.mxu0 0
        %1675 = vmatpush1.bf16.xpose.msra.mxu0 0
        %1676 = vmatprep.subr.bf16.mxu0 0
        %1677 = vmatpush1.bf16.xpose.msra.mxu0 0
        %1678 = vmatprep.subr.bf16.mxu0 0
        %1679 = vmatpush1.bf16.xpose.msra.mxu0 0
        %1680 = vmatprep.subr.bf16.mxu0 0
        %1681 = vmatpush1.bf16.xpose.msra.mxu0 0
        %1682 = vmatprep.subr.bf16.mxu0 0
        %1683 = vmatpush1.bf16.xpose.msra.mxu0 %v1666
        %1684 = vmatprep.subr.bf16.mxu0 0
        %1685 = vmatpush2.bf16.xpose.msra.mxu0 0
        %1686 = vmatprep.subr.bf16.mxu0 0
        %1687 = vmatpush2.bf16.xpose.msra.mxu0 0
        %1688 = vmatprep.subr.bf16.mxu0 0
        %1689 = vmatpush2.bf16.xpose.msra.mxu0 0
        %1690 = vmatprep.subr.bf16.mxu0 0
        %1691 = vmatpush2.bf16.xpose.msra.mxu0 0
        %1692 = vmatprep.subr.bf16.mxu0 0
        %1693 = vmatpush2.bf16.xpose.msra.mxu0 0
        %1694 = vmatprep.subr.bf16.mxu0 0
        %1695 = vmatpush2.bf16.xpose.msra.mxu0 0
        %1696 = vmatprep.subr.bf16.mxu0 0
        %1697 = vmatpush2.bf16.xpose.msra.mxu0 0
        %1698 = vmatprep.subr.bf16.mxu0 0
        %1699 = vmatpush2.bf16.xpose.msra.mxu0 0
        %1700 = vmatprep.mubr.bf16.mxu0 0
        %1701 = vmatmul.mubr.bf16.gmra.mxu0 %v1663
        %v1702 = vpop.f32.mrf.mxu0
        %v1703 = vadd.f32 %v511, %v1702
        %v1704 = vpop.f32.mrf.mxu0
        %v1705 = vpop.f32.mrf.mxu0
        %v1706 = vpop.f32.mrf.mxu0
        %1707 = vdwg.mxu0
        %v1708 = vsel %vm852, %v1703, -inf
        %1709 = vmax.xlane.f32.xlu0 %v1708
        %v1710 = vpop.xlane.xlu0 %1709
        %v1711 = vsub.f32 %v1703, %v1710
        %v1712 = vmul.f32 %v1711, 1.442695
        %v1713 = vpow.pop %v1712
        %v1714 = vsel %vm852, %v1713, 0.0
        %1715 = vadd.xlane.f32.xlu0 %v1714
        %v1716 = vpop.xlane.xlu0 %1715
        %v1717 = vrcp.pop %v1716
        %v1718 = vmul.f32 %v1713, %v1717
        %v1719 = vpack.c.bf16 %v1718, %v1718
        %v1721 = vsel %vm852, %v1719, 0
        %v1724 = vsel %vm868, %v1661, 0
        %1726 = vmatprep.subr.bf16.mxu0 0
        %1727 = vmatpush1.bf16.msra.mxu0 0
        %1728 = vmatprep.subr.bf16.mxu0 0
        %1729 = vmatpush1.bf16.msra.mxu0 0
        %1730 = vmatprep.subr.bf16.mxu0 0
        %1731 = vmatpush1.bf16.msra.mxu0 0
        %1732 = vmatprep.subr.bf16.mxu0 0
        %1733 = vmatpush1.bf16.msra.mxu0 0
        %1734 = vmatprep.subr.bf16.mxu0 0
        %1735 = vmatpush1.bf16.msra.mxu0 0
        %1736 = vmatprep.subr.bf16.mxu0 0
        %1737 = vmatpush1.bf16.msra.mxu0 0
        %1738 = vmatprep.subr.bf16.mxu0 0
        %1739 = vmatpush1.bf16.msra.mxu0 0
        %1740 = vmatprep.subr.bf16.mxu0 0
        %1741 = vmatpush1.bf16.msra.mxu0 %v1724
        %1742 = vmatprep.subr.bf16.mxu0 0
        %1743 = vmatpush2.bf16.msra.mxu0 0
        %1744 = vmatprep.subr.bf16.mxu0 0
        %1745 = vmatpush2.bf16.msra.mxu0 0
        %1746 = vmatprep.subr.bf16.mxu0 0
        %1747 = vmatpush2.bf16.msra.mxu0 0
        %1748 = vmatprep.subr.bf16.mxu0 0
        %1749 = vmatpush2.bf16.msra.mxu0 0
        %1750 = vmatprep.subr.bf16.mxu0 0
        %1751 = vmatpush2.bf16.msra.mxu0 0
        %1752 = vmatprep.subr.bf16.mxu0 0
        %1753 = vmatpush2.bf16.msra.mxu0 0
        %1754 = vmatprep.subr.bf16.mxu0 0
        %1755 = vmatpush2.bf16.msra.mxu0 0
        %1756 = vmatprep.subr.bf16.mxu0 0
        %1757 = vmatpush2.bf16.msra.mxu0 0
        %1758 = vmatprep.mubr.bf16.mxu0 0
        %1759 = vmatmul.mubr.bf16.gmra.mxu0 %v1721
        %v1760 = vpop.f32.mrf.mxu0
        %v1761 = vadd.f32 0.0, %v1760
        %v1762 = vpop.f32.mrf.mxu0
        %v1763 = vpop.f32.mrf.mxu0
        %v1764 = vpop.f32.mrf.mxu0
        %1765 = vdwg.mxu0
        %1767 = vrot.lane.b32.xlu0 %v1659, 96
        %v1768 = vpop.permute.xlu0 %1767
        %1770 = vrot.lane.b32.xlu0 %v1660, 96
        %v1771 = vpop.permute.xlu0 %1770
        %v1773 = vsel %vm805, %v1768, 0
        %v1776 = vsel %vm805, %v1771, 0
        %1778 = vmatprep.subr.bf16.mxu0 0
        %1779 = vmatpush1.bf16.xpose.msra.mxu0 0
        %1780 = vmatprep.subr.bf16.mxu0 0
        %1781 = vmatpush1.bf16.xpose.msra.mxu0 0
        %1782 = vmatprep.subr.bf16.mxu0 0
        %1783 = vmatpush1.bf16.xpose.msra.mxu0 0
        %1784 = vmatprep.subr.bf16.mxu0 0
        %1785 = vmatpush1.bf16.xpose.msra.mxu0 0
        %1786 = vmatprep.subr.bf16.mxu0 0
        %1787 = vmatpush1.bf16.xpose.msra.mxu0 0
        %1788 = vmatprep.subr.bf16.mxu0 0
        %1789 = vmatpush1.bf16.xpose.msra.mxu0 0
        %1790 = vmatprep.subr.bf16.mxu0 0
        %1791 = vmatpush1.bf16.xpose.msra.mxu0 0
        %1792 = vmatprep.subr.bf16.mxu0 0
        %1793 = vmatpush1.bf16.xpose.msra.mxu0 %v1776
        %1794 = vmatprep.subr.bf16.mxu0 0
        %1795 = vmatpush2.bf16.xpose.msra.mxu0 0
        %1796 = vmatprep.subr.bf16.mxu0 0
        %1797 = vmatpush2.bf16.xpose.msra.mxu0 0
        %1798 = vmatprep.subr.bf16.mxu0 0
        %1799 = vmatpush2.bf16.xpose.msra.mxu0 0
        %1800 = vmatprep.subr.bf16.mxu0 0
        %1801 = vmatpush2.bf16.xpose.msra.mxu0 0
        %1802 = vmatprep.subr.bf16.mxu0 0
        %1803 = vmatpush2.bf16.xpose.msra.mxu0 0
        %1804 = vmatprep.subr.bf16.mxu0 0
        %1805 = vmatpush2.bf16.xpose.msra.mxu0 0
        %1806 = vmatprep.subr.bf16.mxu0 0
        %1807 = vmatpush2.bf16.xpose.msra.mxu0 0
        %1808 = vmatprep.subr.bf16.mxu0 0
        %1809 = vmatpush2.bf16.xpose.msra.mxu0 0
        %1810 = vmatprep.mubr.bf16.mxu0 0
        %1811 = vmatmul.mubr.bf16.gmra.mxu0 %v1773
        %v1812 = vpop.f32.mrf.mxu0
        %v1813 = vadd.f32 %v511, %v1812
        %v1814 = vpop.f32.mrf.mxu0
        %v1815 = vpop.f32.mrf.mxu0
        %v1816 = vpop.f32.mrf.mxu0
        %1817 = vdwg.mxu0
        %v1818 = vsel %vm852, %v1813, -inf
        %1819 = vmax.xlane.f32.xlu0 %v1818
        %v1820 = vpop.xlane.xlu0 %1819
        %v1821 = vsub.f32 %v1813, %v1820
        %v1822 = vmul.f32 %v1821, 1.442695
        %v1823 = vpow.pop %v1822
        %v1824 = vsel %vm852, %v1823, 0.0
        %1825 = vadd.xlane.f32.xlu0 %v1824
        %v1826 = vpop.xlane.xlu0 %1825
        %v1827 = vrcp.pop %v1826
        %v1828 = vmul.f32 %v1823, %v1827
        %v1829 = vpack.c.bf16 %v1828, %v1828
        %1831 = vrot.lane.b32.xlu0 %v1661, 96
        %v1832 = vpop.permute.xlu0 %1831
        %v1834 = vsel %vm852, %v1829, 0
        %v1837 = vsel %vm868, %v1832, 0
        %1839 = vmatprep.subr.bf16.mxu0 0
        %1840 = vmatpush1.bf16.msra.mxu0 0
        %1841 = vmatprep.subr.bf16.mxu0 0
        %1842 = vmatpush1.bf16.msra.mxu0 0
        %1843 = vmatprep.subr.bf16.mxu0 0
        %1844 = vmatpush1.bf16.msra.mxu0 0
        %1845 = vmatprep.subr.bf16.mxu0 0
        %1846 = vmatpush1.bf16.msra.mxu0 0
        %1847 = vmatprep.subr.bf16.mxu0 0
        %1848 = vmatpush1.bf16.msra.mxu0 0
        %1849 = vmatprep.subr.bf16.mxu0 0
        %1850 = vmatpush1.bf16.msra.mxu0 0
        %1851 = vmatprep.subr.bf16.mxu0 0
        %1852 = vmatpush1.bf16.msra.mxu0 0
        %1853 = vmatprep.subr.bf16.mxu0 0
        %1854 = vmatpush1.bf16.msra.mxu0 %v1837
        %1855 = vmatprep.subr.bf16.mxu0 0
        %1856 = vmatpush2.bf16.msra.mxu0 0
        %1857 = vmatprep.subr.bf16.mxu0 0
        %1858 = vmatpush2.bf16.msra.mxu0 0
        %1859 = vmatprep.subr.bf16.mxu0 0
        %1860 = vmatpush2.bf16.msra.mxu0 0
        %1861 = vmatprep.subr.bf16.mxu0 0
        %1862 = vmatpush2.bf16.msra.mxu0 0
        %1863 = vmatprep.subr.bf16.mxu0 0
        %1864 = vmatpush2.bf16.msra.mxu0 0
        %1865 = vmatprep.subr.bf16.mxu0 0
        %1866 = vmatpush2.bf16.msra.mxu0 0
        %1867 = vmatprep.subr.bf16.mxu0 0
        %1868 = vmatpush2.bf16.msra.mxu0 0
        %1869 = vmatprep.subr.bf16.mxu0 0
        %1870 = vmatpush2.bf16.msra.mxu0 0
        %1871 = vmatprep.mubr.bf16.mxu0 0
        %1872 = vmatmul.mubr.bf16.gmra.mxu0 %v1834
        %v1873 = vpop.f32.mrf.mxu0
        %v1874 = vadd.f32 0.0, %v1873
        %v1875 = vpop.f32.mrf.mxu0
        %v1876 = vpop.f32.mrf.mxu0
        %v1877 = vpop.f32.mrf.mxu0
        %1878 = vdwg.mxu0
        %1879 = vrot.lane.b32.xlu0 %v1659, 64
        %v1880 = vpop.permute.xlu0 %1879
        %1881 = vrot.lane.b32.xlu0 %v1660, 64
        %v1882 = vpop.permute.xlu0 %1881
        %v1884 = vsel %vm805, %v1880, 0
        %v1887 = vsel %vm805, %v1882, 0
        %1889 = vmatprep.subr.bf16.mxu0 0
        %1890 = vmatpush1.bf16.xpose.msra.mxu0 0
        %1891 = vmatprep.subr.bf16.mxu0 0
        %1892 = vmatpush1.bf16.xpose.msra.mxu0 0
        %1893 = vmatprep.subr.bf16.mxu0 0
        %1894 = vmatpush1.bf16.xpose.msra.mxu0 0
        %1895 = vmatprep.subr.bf16.mxu0 0
        %1896 = vmatpush1.bf16.xpose.msra.mxu0 0
        %1897 = vmatprep.subr.bf16.mxu0 0
        %1898 = vmatpush1.bf16.xpose.msra.mxu0 0
        %1899 = vmatprep.subr.bf16.mxu0 0
        %1900 = vmatpush1.bf16.xpose.msra.mxu0 0
        %1901 = vmatprep.subr.bf16.mxu0 0
        %1902 = vmatpush1.bf16.xpose.msra.mxu0 0
        %1903 = vmatprep.subr.bf16.mxu0 0
        %1904 = vmatpush1.bf16.xpose.msra.mxu0 %v1887
        %1905 = vmatprep.subr.bf16.mxu0 0
        %1906 = vmatpush2.bf16.xpose.msra.mxu0 0
        %1907 = vmatprep.subr.bf16.mxu0 0
        %1908 = vmatpush2.bf16.xpose.msra.mxu0 0
        %1909 = vmatprep.subr.bf16.mxu0 0
        %1910 = vmatpush2.bf16.xpose.msra.mxu0 0
        %1911 = vmatprep.subr.bf16.mxu0 0
        %1912 = vmatpush2.bf16.xpose.msra.mxu0 0
        %1913 = vmatprep.subr.bf16.mxu0 0
        %1914 = vmatpush2.bf16.xpose.msra.mxu0 0
        %1915 = vmatprep.subr.bf16.mxu0 0
        %1916 = vmatpush2.bf16.xpose.msra.mxu0 0
        %1917 = vmatprep.subr.bf16.mxu0 0
        %1918 = vmatpush2.bf16.xpose.msra.mxu0 0
        %1919 = vmatprep.subr.bf16.mxu0 0
        %1920 = vmatpush2.bf16.xpose.msra.mxu0 0
        %1921 = vmatprep.mubr.bf16.mxu0 0
        %1922 = vmatmul.mubr.bf16.gmra.mxu0 %v1884
        %v1923 = vpop.f32.mrf.mxu0
        %v1924 = vadd.f32 %v511, %v1923
        %v1925 = vpop.f32.mrf.mxu0
        %v1926 = vpop.f32.mrf.mxu0
        %v1927 = vpop.f32.mrf.mxu0
        %1928 = vdwg.mxu0
        %v1929 = vsel %vm852, %v1924, -inf
        %1930 = vmax.xlane.f32.xlu0 %v1929
        %v1931 = vpop.xlane.xlu0 %1930
        %v1932 = vsub.f32 %v1924, %v1931
        %v1933 = vmul.f32 %v1932, 1.442695
        %v1934 = vpow.pop %v1933
        %v1935 = vsel %vm852, %v1934, 0.0
        %1936 = vadd.xlane.f32.xlu0 %v1935
        %v1937 = vpop.xlane.xlu0 %1936
        %v1938 = vrcp.pop %v1937
        %v1939 = vmul.f32 %v1934, %v1938
        %v1940 = vpack.c.bf16 %v1939, %v1939
        %1941 = vrot.lane.b32.xlu0 %v1661, 64
        %v1942 = vpop.permute.xlu0 %1941
        %v1944 = vsel %vm852, %v1940, 0
        %v1947 = vsel %vm868, %v1942, 0
        %1949 = vmatprep.subr.bf16.mxu0 0
        %1950 = vmatpush1.bf16.msra.mxu0 0
        %1951 = vmatprep.subr.bf16.mxu0 0
        %1952 = vmatpush1.bf16.msra.mxu0 0
        %1953 = vmatprep.subr.bf16.mxu0 0
        %1954 = vmatpush1.bf16.msra.mxu0 0
        %1955 = vmatprep.subr.bf16.mxu0 0
        %1956 = vmatpush1.bf16.msra.mxu0 0
        %1957 = vmatprep.subr.bf16.mxu0 0
        %1958 = vmatpush1.bf16.msra.mxu0 0
        %1959 = vmatprep.subr.bf16.mxu0 0
        %1960 = vmatpush1.bf16.msra.mxu0 0
        %1961 = vmatprep.subr.bf16.mxu0 0
        %1962 = vmatpush1.bf16.msra.mxu0 0
        %1963 = vmatprep.subr.bf16.mxu0 0
        %1964 = vmatpush1.bf16.msra.mxu0 %v1947
        %1965 = vmatprep.subr.bf16.mxu0 0
        %1966 = vmatpush2.bf16.msra.mxu0 0
        %1967 = vmatprep.subr.bf16.mxu0 0
        %1968 = vmatpush2.bf16.msra.mxu0 0
        %1969 = vmatprep.subr.bf16.mxu0 0
        %1970 = vmatpush2.bf16.msra.mxu0 0
        %1971 = vmatprep.subr.bf16.mxu0 0
        %1972 = vmatpush2.bf16.msra.mxu0 0
        %1973 = vmatprep.subr.bf16.mxu0 0
        %1974 = vmatpush2.bf16.msra.mxu0 0
        %1975 = vmatprep.subr.bf16.mxu0 0
        %1976 = vmatpush2.bf16.msra.mxu0 0
        %1977 = vmatprep.subr.bf16.mxu0 0
        %1978 = vmatpush2.bf16.msra.mxu0 0
        %1979 = vmatprep.subr.bf16.mxu0 0
        %1980 = vmatpush2.bf16.msra.mxu0 0
        %1981 = vmatprep.mubr.bf16.mxu0 0
        %1982 = vmatmul.mubr.bf16.gmra.mxu0 %v1944
        %v1983 = vpop.f32.mrf.mxu0
        %v1984 = vadd.f32 0.0, %v1983
        %v1985 = vpop.f32.mrf.mxu0
        %v1986 = vpop.f32.mrf.mxu0
        %v1987 = vpop.f32.mrf.mxu0
        %1988 = vdwg.mxu0
        %1989 = vrot.lane.b32.xlu0 %v1659, 32
        %v1990 = vpop.permute.xlu0 %1989
        %1991 = vrot.lane.b32.xlu0 %v1660, 32
        %v1992 = vpop.permute.xlu0 %1991
        %v1994 = vsel %vm805, %v1990, 0
        %v1997 = vsel %vm805, %v1992, 0
        %1999 = vmatprep.subr.bf16.mxu0 0
        %2000 = vmatpush1.bf16.xpose.msra.mxu0 0
        %2001 = vmatprep.subr.bf16.mxu0 0
        %2002 = vmatpush1.bf16.xpose.msra.mxu0 0
        %2003 = vmatprep.subr.bf16.mxu0 0
        %2004 = vmatpush1.bf16.xpose.msra.mxu0 0
        %2005 = vmatprep.subr.bf16.mxu0 0
        %2006 = vmatpush1.bf16.xpose.msra.mxu0 0
        %2007 = vmatprep.subr.bf16.mxu0 0
        %2008 = vmatpush1.bf16.xpose.msra.mxu0 0
        %2009 = vmatprep.subr.bf16.mxu0 0
        %2010 = vmatpush1.bf16.xpose.msra.mxu0 0
        %2011 = vmatprep.subr.bf16.mxu0 0
        %2012 = vmatpush1.bf16.xpose.msra.mxu0 0
        %2013 = vmatprep.subr.bf16.mxu0 0
        %2014 = vmatpush1.bf16.xpose.msra.mxu0 %v1997
        %2015 = vmatprep.subr.bf16.mxu0 0
        %2016 = vmatpush2.bf16.xpose.msra.mxu0 0
        %2017 = vmatprep.subr.bf16.mxu0 0
        %2018 = vmatpush2.bf16.xpose.msra.mxu0 0
        %2019 = vmatprep.subr.bf16.mxu0 0
        %2020 = vmatpush2.bf16.xpose.msra.mxu0 0
        %2021 = vmatprep.subr.bf16.mxu0 0
        %2022 = vmatpush2.bf16.xpose.msra.mxu0 0
        %2023 = vmatprep.subr.bf16.mxu0 0
        %2024 = vmatpush2.bf16.xpose.msra.mxu0 0
        %2025 = vmatprep.subr.bf16.mxu0 0
        %2026 = vmatpush2.bf16.xpose.msra.mxu0 0
        %2027 = vmatprep.subr.bf16.mxu0 0
        %2028 = vmatpush2.bf16.xpose.msra.mxu0 0
        %2029 = vmatprep.subr.bf16.mxu0 0
        %2030 = vmatpush2.bf16.xpose.msra.mxu0 0
        %2031 = vmatprep.mubr.bf16.mxu0 0
        %2032 = vmatmul.mubr.bf16.gmra.mxu0 %v1994
        %v2033 = vpop.f32.mrf.mxu0
        %v2034 = vadd.f32 %v511, %v2033
        %v2035 = vpop.f32.mrf.mxu0
        %v2036 = vpop.f32.mrf.mxu0
        %v2037 = vpop.f32.mrf.mxu0
        %2038 = vdwg.mxu0
        %v2039 = vsel %vm852, %v2034, -inf
        %2040 = vmax.xlane.f32.xlu0 %v2039
        %v2041 = vpop.xlane.xlu0 %2040
        %v2042 = vsub.f32 %v2034, %v2041
        %v2043 = vmul.f32 %v2042, 1.442695
        %v2044 = vpow.pop %v2043
        %v2045 = vsel %vm852, %v2044, 0.0
        %2046 = vadd.xlane.f32.xlu0 %v2045
        %v2047 = vpop.xlane.xlu0 %2046
        %v2048 = vrcp.pop %v2047
        %v2049 = vmul.f32 %v2044, %v2048
        %v2050 = vpack.c.bf16 %v2049, %v2049
        %2051 = vrot.lane.b32.xlu0 %v1661, 32
        %v2052 = vpop.permute.xlu0 %2051
        %v2054 = vsel %vm852, %v2050, 0
        %v2057 = vsel %vm868, %v2052, 0
        %2059 = vmatprep.subr.bf16.mxu0 0
        %2060 = vmatpush1.bf16.msra.mxu0 0
        %2061 = vmatprep.subr.bf16.mxu0 0
        %2062 = vmatpush1.bf16.msra.mxu0 0
        %2063 = vmatprep.subr.bf16.mxu0 0
        %2064 = vmatpush1.bf16.msra.mxu0 0
        %2065 = vmatprep.subr.bf16.mxu0 0
        %2066 = vmatpush1.bf16.msra.mxu0 0
        %2067 = vmatprep.subr.bf16.mxu0 0
        %2068 = vmatpush1.bf16.msra.mxu0 0
        %2069 = vmatprep.subr.bf16.mxu0 0
        %2070 = vmatpush1.bf16.msra.mxu0 0
        %2071 = vmatprep.subr.bf16.mxu0 0
        %2072 = vmatpush1.bf16.msra.mxu0 0
        %2073 = vmatprep.subr.bf16.mxu0 0
        %2074 = vmatpush1.bf16.msra.mxu0 %v2057
        %2075 = vmatprep.subr.bf16.mxu0 0
        %2076 = vmatpush2.bf16.msra.mxu0 0
        %2077 = vmatprep.subr.bf16.mxu0 0
        %2078 = vmatpush2.bf16.msra.mxu0 0
        %2079 = vmatprep.subr.bf16.mxu0 0
        %2080 = vmatpush2.bf16.msra.mxu0 0
        %2081 = vmatprep.subr.bf16.mxu0 0
        %2082 = vmatpush2.bf16.msra.mxu0 0
        %2083 = vmatprep.subr.bf16.mxu0 0
        %2084 = vmatpush2.bf16.msra.mxu0 0
        %2085 = vmatprep.subr.bf16.mxu0 0
        %2086 = vmatpush2.bf16.msra.mxu0 0
        %2087 = vmatprep.subr.bf16.mxu0 0
        %2088 = vmatpush2.bf16.msra.mxu0 0
        %2089 = vmatprep.subr.bf16.mxu0 0
        %2090 = vmatpush2.bf16.msra.mxu0 0
        %2091 = vmatprep.mubr.bf16.mxu0 0
        %2092 = vmatmul.mubr.bf16.gmra.mxu0 %v2054
        %v2093 = vpop.f32.mrf.mxu0
        %v2094 = vadd.f32 0.0, %v2093
        %v2095 = vpop.f32.mrf.mxu0
        %v2096 = vpop.f32.mrf.mxu0
        %v2097 = vpop.f32.mrf.mxu0
        %2098 = vdwg.mxu0
        %2100 = vrot.lane.b32.xlu0 %v1874, 32
        %v2101 = vpop.permute.xlu0 %2100
        %2104 = vrot.lane.b32.xlu0 %v1984, 64
        %v2105 = vpop.permute.xlu0 %2104
        %2108 = vrot.lane.b32.xlu0 %v2094, 96
        %v2109 = vpop.permute.xlu0 %2108
        %v2111 = vsel %vm805, %v1761, %v2101
        %v2112 = vsel %vm1258, %v2111, %v2105
        %v2113 = vsel %vm1260, %v2112, %v2109
        %v2114 = vpack.c.bf16 %v2113, %v2113
        %v2115 = vld [vmem:[%s11] sm:$0xf]
        %v2116 = vld [vmem:[%s11 + $0x4] sm:$0xf]
        %v2117 = vld [vmem:[%s11 + $0x8] sm:$0xf]
        %v2118 = vld [vmem:[%s11 + $0xc] sm:$0xf]
        %v2119 = vld [vmem:[%s11 + $0x10] sm:$0xf]
        %v2120 = vld [vmem:[%s11 + $0x14] sm:$0xf]
        %v2121 = vld [vmem:[%s11 + $0x18] sm:$0xf]
        %v2122 = vld [vmem:[%s11 + $0x1c] sm:$0xf]
        %v2123 = vld [vmem:[%s11 + $0x20] sm:$0xf]
        %v2124 = vld [vmem:[%s11 + $0x24] sm:$0xf]
        %v2125 = vld [vmem:[%s11 + $0x28] sm:$0xf]
        %v2126 = vld [vmem:[%s11 + $0x2c] sm:$0xf]
        %v2127 = vld [vmem:[%s11 + $0x30] sm:$0xf]
        %v2128 = vld [vmem:[%s11 + $0x34] sm:$0xf]
        %v2129 = vld [vmem:[%s11 + $0x38] sm:$0xf]
        %v2130 = vld [vmem:[%s11 + $0x3c] sm:$0xf]
        %v2131 = vlaneseq
        %v2132 = vshrl.u32 %v2131, 7
        %v2133 = vsub.s32 0, %v2132
        %v2134 = vrot.slane %v513, %v2133
        %v2151 = vunpack.c.l.b16 %v2115
        %v2152 = vunpack.c.l.b16 %v2116
        %v2153 = vunpack.c.l.b16 %v2117
        %v2154 = vunpack.c.l.b16 %v2118
        %v2155 = vunpack.c.l.b16 %v2119
        %v2156 = vunpack.c.l.b16 %v2120
        %v2157 = vunpack.c.l.b16 %v2121
        %v2158 = vunpack.c.l.b16 %v2122
        %v2159 = vunpack.c.l.b16 %v2123
        %v2160 = vunpack.c.l.b16 %v2124
        %v2161 = vunpack.c.l.b16 %v2125
        %v2162 = vunpack.c.l.b16 %v2126
        %v2163 = vunpack.c.l.b16 %v2127
        %v2164 = vunpack.c.l.b16 %v2128
        %v2165 = vunpack.c.l.b16 %v2129
        %v2166 = vunpack.c.l.b16 %v2130
        %v2167 = vpack.c.b16 %v2152, %v2151
        %v2168 = vpack.c.b16 %v2154, %v2153
        %v2169 = vpack.c.b16 %v2156, %v2155
        %v2170 = vpack.c.b16 %v2158, %v2157
        %v2171 = vpack.c.b16 %v2160, %v2159
        %v2172 = vpack.c.b16 %v2162, %v2161
        %v2173 = vpack.c.b16 %v2164, %v2163
        %v2174 = vpack.c.b16 %v2166, %v2165
        %2183 = vmatprep.subr.bf16.mxu0 0
        %2184 = vmatpush1.bf16.msra.mxu0 %v2174
        %2185 = vmatprep.subr.bf16.mxu0 0
        %2186 = vmatpush1.bf16.msra.mxu0 %v2173
        %2187 = vmatprep.subr.bf16.mxu0 0
        %2188 = vmatpush1.bf16.msra.mxu0 %v2172
        %2189 = vmatprep.subr.bf16.mxu0 0
        %2190 = vmatpush1.bf16.msra.mxu0 %v2171
        %2191 = vmatprep.subr.bf16.mxu0 0
        %2192 = vmatpush1.bf16.msra.mxu0 %v2170
        %2193 = vmatprep.subr.bf16.mxu0 0
        %2194 = vmatpush1.bf16.msra.mxu0 %v2169
        %2195 = vmatprep.subr.bf16.mxu0 0
        %2196 = vmatpush1.bf16.msra.mxu0 %v2168
        %2197 = vmatprep.subr.bf16.mxu0 0
        %2198 = vmatpush1.bf16.msra.mxu0 %v2167
        %2199 = vmatprep.subr.bf16.mxu0 0
        %2200 = vmatpush2.bf16.msra.mxu0 0
        %2201 = vmatprep.subr.bf16.mxu0 0
        %2202 = vmatpush2.bf16.msra.mxu0 0
        %2203 = vmatprep.subr.bf16.mxu0 0
        %2204 = vmatpush2.bf16.msra.mxu0 0
        %2205 = vmatprep.subr.bf16.mxu0 0
        %2206 = vmatpush2.bf16.msra.mxu0 0
        %2207 = vmatprep.subr.bf16.mxu0 0
        %2208 = vmatpush2.bf16.msra.mxu0 0
        %2209 = vmatprep.subr.bf16.mxu0 0
        %2210 = vmatpush2.bf16.msra.mxu0 0
        %2211 = vmatprep.subr.bf16.mxu0 0
        %2212 = vmatpush2.bf16.msra.mxu0 0
        %2213 = vmatprep.subr.bf16.mxu0 0
        %2214 = vmatpush2.bf16.msra.mxu0 0
        %2215 = vmatprep.mubr.bf16.mxu0 0
        %2216 = vmatmul.mubr.bf16.gmra.mxu0 %v2114
        %v2217 = vpop.f32.mrf.mxu0
        %v2218 = vadd.f32 %v2134, %v2217
        %v2219 = vpop.f32.mrf.mxu0
        %v2220 = vpop.f32.mrf.mxu0
        %v2221 = vpop.f32.mrf.mxu0
        %2222 = vdwg.mxu0
        %v2223 = vadd.f32 %v1371, %v2218
        %2224 = vadd.xlane.f32.xlu0 %v2223
        %v2225 = vpop.xlane.xlu0 %2224
        %v2226 = vmul.f32 %v2225, %v516
        %v2227 = vsub.f32 %v2223, %v2226
        %v2228 = vmul.f32 %v2227, %v2227
        %2229 = vadd.xlane.f32.xlu0 %v2228
        %v2230 = vpop.xlane.xlu0 %2229
        %v2231 = vmul.f32 %v2230, 0.007874016
        %v2232 = vrsqrt.pop %v2231
        %v2233 = vmul.f32 %v2231, %v2232
        %vm2234 = vcmp.eq.f32.partialorder %v2231, inf
        %v2235 = vsel %vm2234, %v2231, %v2233
        %vm2236 = vcmp.eq.f32.partialorder %v2231, 0.0
        %v2237 = vand.u32 %v2231, 2147483648
        %v2238 = vsel %vm2236, %v2237, %v2235
        %v2239 = vadd.f32 %v2238, 1e-06
        %v2240 = vrsqrt.pop %v2239
        %v2241 = vmul.f32 %v2227, %v2240
        %v2242 = vlaneseq
        %v2243 = vshrl.u32 %v2242, 7
        %v2244 = vsub.s32 4, %v2243
        %v2245 = vrot.slane %v512, %v2244
        %v2246 = vmul.f32 %v2245, %v2241
        %v2247 = vlaneseq
        %v2248 = vshrl.u32 %v2247, 7
        %v2249 = vsub.s32 5, %v2248
        %v2250 = vrot.slane %v512, %v2249
        %v2251 = vadd.f32 %v2246, %v2250
        %v2252 = vpack.c.bf16 %v2251, %v2251
        %v2253 = vld [vmem:[%s12] sm:$0xff]
        %v2254 = vld [vmem:[%s12 + $0x8] sm:$0xff]
        %v2255 = vld [vmem:[%s12 + $0x10] sm:$0xff]
        %v2256 = vld [vmem:[%s12 + $0x18] sm:$0xff]
        %v2257 = vld [vmem:[%s12 + $0x20] sm:$0xff]
        %v2258 = vld [vmem:[%s12 + $0x28] sm:$0xff]
        %v2259 = vld [vmem:[%s12 + $0x30] sm:$0xff]
        %v2260 = vld [vmem:[%s12 + $0x38] sm:$0xff]
        %v2261 = vld [vmem:[%s12 + $0x40] sm:$0xff]
        %v2262 = vld [vmem:[%s12 + $0x48] sm:$0xff]
        %v2263 = vld [vmem:[%s12 + $0x50] sm:$0xff]
        %v2264 = vld [vmem:[%s12 + $0x58] sm:$0xff]
        %v2265 = vld [vmem:[%s12 + $0x60] sm:$0xff]
        %v2266 = vld [vmem:[%s12 + $0x68] sm:$0xff]
        %v2267 = vld [vmem:[%s12 + $0x70] sm:$0xff]
        %v2268 = vld [vmem:[%s12 + $0x78] sm:$0xff]
        %v2269 = vld [vmem:[%s13] sm:$0x3]
        %v2271 = vlaneseq
        %v2272 = vshrl.u32 %v2271, 7
        %v2273 = vsub.s32 0, %v2272
        %v2274 = vrot.slane %v2269, %v2273
        %v2275 = vlaneseq
        %v2276 = vshrl.u32 %v2275, 7
        %v2277 = vsub.s32 1, %v2276
        %v2278 = vrot.slane %v2269, %v2277
        %v2297 = vunpack.c.l.b16 %v2253
        %v2298 = vunpack.c.h.b16 %v2253
        %v2299 = vunpack.c.l.b16 %v2254
        %v2300 = vunpack.c.h.b16 %v2254
        %v2301 = vunpack.c.l.b16 %v2255
        %v2302 = vunpack.c.h.b16 %v2255
        %v2303 = vunpack.c.l.b16 %v2256
        %v2304 = vunpack.c.h.b16 %v2256
        %v2305 = vunpack.c.l.b16 %v2257
        %v2306 = vunpack.c.h.b16 %v2257
        %v2307 = vunpack.c.l.b16 %v2258
        %v2308 = vunpack.c.h.b16 %v2258
        %v2309 = vunpack.c.l.b16 %v2259
        %v2310 = vunpack.c.h.b16 %v2259
        %v2311 = vunpack.c.l.b16 %v2260
        %v2312 = vunpack.c.h.b16 %v2260
        %v2313 = vunpack.c.l.b16 %v2261
        %v2314 = vunpack.c.h.b16 %v2261
        %v2315 = vunpack.c.l.b16 %v2262
        %v2316 = vunpack.c.h.b16 %v2262
        %v2317 = vunpack.c.l.b16 %v2263
        %v2318 = vunpack.c.h.b16 %v2263
        %v2319 = vunpack.c.l.b16 %v2264
        %v2320 = vunpack.c.h.b16 %v2264
        %v2321 = vunpack.c.l.b16 %v2265
        %v2322 = vunpack.c.h.b16 %v2265
        %v2323 = vunpack.c.l.b16 %v2266
        %v2324 = vunpack.c.h.b16 %v2266
        %v2325 = vunpack.c.l.b16 %v2267
        %v2326 = vunpack.c.h.b16 %v2267
        %v2327 = vunpack.c.l.b16 %v2268
        %v2328 = vunpack.c.h.b16 %v2268
        %v2329 = vpack.c.b16 %v2299, %v2297
        %v2330 = vpack.c.b16 %v2300, %v2298
        %v2331 = vpack.c.b16 %v2303, %v2301
        %v2332 = vpack.c.b16 %v2304, %v2302
        %v2333 = vpack.c.b16 %v2307, %v2305
        %v2334 = vpack.c.b16 %v2308, %v2306
        %v2335 = vpack.c.b16 %v2311, %v2309
        %v2336 = vpack.c.b16 %v2312, %v2310
        %v2337 = vpack.c.b16 %v2315, %v2313
        %v2338 = vpack.c.b16 %v2316, %v2314
        %v2339 = vpack.c.b16 %v2319, %v2317
        %v2340 = vpack.c.b16 %v2320, %v2318
        %v2341 = vpack.c.b16 %v2323, %v2321
        %v2342 = vpack.c.b16 %v2324, %v2322
        %v2343 = vpack.c.b16 %v2327, %v2325
        %v2344 = vpack.c.b16 %v2328, %v2326
        %2361 = vmatprep.subr.bf16.mxu0 %v2344
        %2362 = vmatpush1.bf16.msra.mxu0 %v2343
        %2363 = vmatprep.subr.bf16.mxu0 %v2342
        %2364 = vmatpush1.bf16.msra.mxu0 %v2341
        %2365 = vmatprep.subr.bf16.mxu0 %v2340
        %2366 = vmatpush1.bf16.msra.mxu0 %v2339
        %2367 = vmatprep.subr.bf16.mxu0 %v2338
        %2368 = vmatpush1.bf16.msra.mxu0 %v2337
        %2369 = vmatprep.subr.bf16.mxu0 %v2336
        %2370 = vmatpush1.bf16.msra.mxu0 %v2335
        %2371 = vmatprep.subr.bf16.mxu0 %v2334
        %2372 = vmatpush1.bf16.msra.mxu0 %v2333
        %2373 = vmatprep.subr.bf16.mxu0 %v2332
        %2374 = vmatpush1.bf16.msra.mxu0 %v2331
        %2375 = vmatprep.subr.bf16.mxu0 %v2330
        %2376 = vmatpush1.bf16.msra.mxu0 %v2329
        %2377 = vmatprep.subr.bf16.mxu0 0
        %2378 = vmatpush2.bf16.msra.mxu0 0
        %2379 = vmatprep.subr.bf16.mxu0 0
        %2380 = vmatpush2.bf16.msra.mxu0 0
        %2381 = vmatprep.subr.bf16.mxu0 0
        %2382 = vmatpush2.bf16.msra.mxu0 0
        %2383 = vmatprep.subr.bf16.mxu0 0
        %2384 = vmatpush2.bf16.msra.mxu0 0
        %2385 = vmatprep.subr.bf16.mxu0 0
        %2386 = vmatpush2.bf16.msra.mxu0 0
        %2387 = vmatprep.subr.bf16.mxu0 0
        %2388 = vmatpush2.bf16.msra.mxu0 0
        %2389 = vmatprep.subr.bf16.mxu0 0
        %2390 = vmatpush2.bf16.msra.mxu0 0
        %2391 = vmatprep.subr.bf16.mxu0 0
        %2392 = vmatpush2.bf16.msra.mxu0 0
        %2393 = vmatprep.mubr.bf16.mxu0 0
        %2394 = vmatmul.mubr.bf16.gmra.mxu0 %v2252
        %v2395 = vpop.f32.mrf.mxu0
        %v2396 = vadd.f32 %v2274, %v2395
        %v2397 = vpop.f32.mrf.mxu0
        %v2398 = vadd.f32 %v2278, %v2397
        %v2399 = vpop.f32.mrf.mxu0
        %v2400 = vpop.f32.mrf.mxu0
        %2401 = vdwg.mxu0
        %v2402 = vmax.f32 %v2396, 0.0
        %v2403 = vmax.f32 %v2398, 0.0
        %v2404 = vpack.c.bf16 %v2402, %v2402
        %v2405 = vpack.c.bf16 %v2403, %v2403
        %v2406 = vld [vmem:[%s14] sm:$0xf]
        %v2407 = vld [vmem:[%s14 + $0x4] sm:$0xf]
        %v2408 = vld [vmem:[%s14 + $0x8] sm:$0xf]
        %v2409 = vld [vmem:[%s14 + $0xc] sm:$0xf]
        %v2410 = vld [vmem:[%s14 + $0x10] sm:$0xf]
        %v2411 = vld [vmem:[%s14 + $0x14] sm:$0xf]
        %v2412 = vld [vmem:[%s14 + $0x18] sm:$0xf]
        %v2413 = vld [vmem:[%s14 + $0x1c] sm:$0xf]
        %v2414 = vld [vmem:[%s14 + $0x20] sm:$0xf]
        %v2415 = vld [vmem:[%s14 + $0x24] sm:$0xf]
        %v2416 = vld [vmem:[%s14 + $0x28] sm:$0xf]
        %v2417 = vld [vmem:[%s14 + $0x2c] sm:$0xf]
        %v2418 = vld [vmem:[%s14 + $0x30] sm:$0xf]
        %v2419 = vld [vmem:[%s14 + $0x34] sm:$0xf]
        %v2420 = vld [vmem:[%s14 + $0x38] sm:$0xf]
        %v2421 = vld [vmem:[%s14 + $0x3c] sm:$0xf]
        %v2422 = vld [vmem:[%s14 + $0x40] sm:$0xf]
        %v2423 = vld [vmem:[%s14 + $0x44] sm:$0xf]
        %v2424 = vld [vmem:[%s14 + $0x48] sm:$0xf]
        %v2425 = vld [vmem:[%s14 + $0x4c] sm:$0xf]
        %v2426 = vld [vmem:[%s14 + $0x50] sm:$0xf]
        %v2427 = vld [vmem:[%s14 + $0x54] sm:$0xf]
        %v2428 = vld [vmem:[%s14 + $0x58] sm:$0xf]
        %v2429 = vld [vmem:[%s14 + $0x5c] sm:$0xf]
        %v2430 = vld [vmem:[%s14 + $0x60] sm:$0xf]
        %v2431 = vld [vmem:[%s14 + $0x64] sm:$0xf]
        %v2432 = vld [vmem:[%s14 + $0x68] sm:$0xf]
        %v2433 = vld [vmem:[%s14 + $0x6c] sm:$0xf]
        %v2434 = vld [vmem:[%s14 + $0x70] sm:$0xf]
        %v2435 = vld [vmem:[%s14 + $0x74] sm:$0xf]
        %v2436 = vld [vmem:[%s14 + $0x78] sm:$0xf]
        %v2437 = vld [vmem:[%s14 + $0x7c] sm:$0xf]
        %v2438 = vlaneseq
        %v2439 = vshrl.u32 %v2438, 7
        %v2440 = vsub.s32 1, %v2439
        %v2441 = vrot.slane %v513, %v2440
        %v2474 = vunpack.c.l.b16 %v2406
        %v2475 = vunpack.c.l.b16 %v2407
        %v2476 = vunpack.c.l.b16 %v2408
        %v2477 = vunpack.c.l.b16 %v2409
        %v2478 = vunpack.c.l.b16 %v2410
        %v2479 = vunpack.c.l.b16 %v2411
        %v2480 = vunpack.c.l.b16 %v2412
        %v2481 = vunpack.c.l.b16 %v2413
        %v2482 = vunpack.c.l.b16 %v2414
        %v2483 = vunpack.c.l.b16 %v2415
        %v2484 = vunpack.c.l.b16 %v2416
        %v2485 = vunpack.c.l.b16 %v2417
        %v2486 = vunpack.c.l.b16 %v2418
        %v2487 = vunpack.c.l.b16 %v2419
        %v2488 = vunpack.c.l.b16 %v2420
        %v2489 = vunpack.c.l.b16 %v2421
        %v2490 = vunpack.c.l.b16 %v2422
        %v2491 = vunpack.c.l.b16 %v2423
        %v2492 = vunpack.c.l.b16 %v2424
        %v2493 = vunpack.c.l.b16 %v2425
        %v2494 = vunpack.c.l.b16 %v2426
        %v2495 = vunpack.c.l.b16 %v2427
        %v2496 = vunpack.c.l.b16 %v2428
        %v2497 = vunpack.c.l.b16 %v2429
        %v2498 = vunpack.c.l.b16 %v2430
        %v2499 = vunpack.c.l.b16 %v2431
        %v2500 = vunpack.c.l.b16 %v2432
        %v2501 = vunpack.c.l.b16 %v2433
        %v2502 = vunpack.c.l.b16 %v2434
        %v2503 = vunpack.c.l.b16 %v2435
        %v2504 = vunpack.c.l.b16 %v2436
        %v2505 = vunpack.c.l.b16 %v2437
        %v2506 = vpack.c.b16 %v2475, %v2474
        %v2507 = vpack.c.b16 %v2477, %v2476
        %v2508 = vpack.c.b16 %v2479, %v2478
        %v2509 = vpack.c.b16 %v2481, %v2480
        %v2510 = vpack.c.b16 %v2483, %v2482
        %v2511 = vpack.c.b16 %v2485, %v2484
        %v2512 = vpack.c.b16 %v2487, %v2486
        %v2513 = vpack.c.b16 %v2489, %v2488
        %v2514 = vpack.c.b16 %v2491, %v2490
        %v2515 = vpack.c.b16 %v2493, %v2492
        %v2516 = vpack.c.b16 %v2495, %v2494
        %v2517 = vpack.c.b16 %v2497, %v2496
        %v2518 = vpack.c.b16 %v2499, %v2498
        %v2519 = vpack.c.b16 %v2501, %v2500
        %v2520 = vpack.c.b16 %v2503, %v2502
        %v2521 = vpack.c.b16 %v2505, %v2504
        %2538 = vmatprep.subr.bf16.mxu0 0
        %2539 = vmatpush1.bf16.msra.mxu0 %v2513
        %2540 = vmatprep.subr.bf16.mxu0 0
        %2541 = vmatpush1.bf16.msra.mxu0 %v2512
        %2542 = vmatprep.subr.bf16.mxu0 0
        %2543 = vmatpush1.bf16.msra.mxu0 %v2511
        %2544 = vmatprep.subr.bf16.mxu0 0
        %2545 = vmatpush1.bf16.msra.mxu0 %v2510
        %2546 = vmatprep.subr.bf16.mxu0 0
        %2547 = vmatpush1.bf16.msra.mxu0 %v2509
        %2548 = vmatprep.subr.bf16.mxu0 0
        %2549 = vmatpush1.bf16.msra.mxu0 %v2508
        %2550 = vmatprep.subr.bf16.mxu0 0
        %2551 = vmatpush1.bf16.msra.mxu0 %v2507
        %2552 = vmatprep.subr.bf16.mxu0 0
        %2553 = vmatpush1.bf16.msra.mxu0 %v2506
        %2554 = vmatprep.subr.bf16.mxu0 0
        %2555 = vmatpush2.bf16.msra.mxu0 %v2521
        %2556 = vmatprep.subr.bf16.mxu0 0
        %2557 = vmatpush2.bf16.msra.mxu0 %v2520
        %2558 = vmatprep.subr.bf16.mxu0 0
        %2559 = vmatpush2.bf16.msra.mxu0 %v2519
        %2560 = vmatprep.subr.bf16.mxu0 0
        %2561 = vmatpush2.bf16.msra.mxu0 %v2518
        %2562 = vmatprep.subr.bf16.mxu0 0
        %2563 = vmatpush2.bf16.msra.mxu0 %v2517
        %2564 = vmatprep.subr.bf16.mxu0 0
        %2565 = vmatpush2.bf16.msra.mxu0 %v2516
        %2566 = vmatprep.subr.bf16.mxu0 0
        %2567 = vmatpush2.bf16.msra.mxu0 %v2515
        %2568 = vmatprep.subr.bf16.mxu0 0
        %2569 = vmatpush2.bf16.msra.mxu0 %v2514
        %2570 = vmatprep.mubr.bf16.mxu0 %v2405
        %2571 = vmatmul.mubr.bf16.gmra.mxu0 %v2404
        %v2572 = vpop.f32.mrf.mxu0
        %v2573 = vadd.f32 %v2441, %v2572
        %v2574 = vpop.f32.mrf.mxu0
        %v2575 = vpop.f32.mrf.mxu0
        %v2576 = vpop.f32.mrf.mxu0
        %2577 = vdwg.mxu0
        %v2578 = vadd.f32 %v2223, %v2573
        %2579 = vst [vmem:[%s498] sm:$0xff] %v2578
        %s2580 = sand.u32 %s362, 1
        %s2581 = scalar_lea.sflag [#allocation3], %s2580
        %s2582 = sand.u32 %s362, 1
        %s2583 = smul.addr %s2582, 8
        %s2584 = scalar_lea.vmem [#allocation2], %s2583
        // Predicated region
        $region81: #{decoder_layer.1} parent=79 // pred_check
          %p2585 = pneg %p372
        $region82: #{decoder_layer.1} parent=79 // pred_check_branch
          %2587 = sbr.rel (%p2585) target = $region84
        $region83: #{decoder_layer.1} parent=79 // pred_region
          %s2589 = ssub.s32 128, 128
          %2590 = vsyncadd %s2581, %s2589
          %s2591 = smul.addr %s29, 128
          %s2592 = scalar_lea.hbm %s15, %s2591
          %s2594 = sshll.u32 %s2584, 4
          %s2595 = int_to_ptr.vmem [resolvable:$true] %s2594
          %2597 = dma.vmem_to_hbm [thread:$0]  %s2595, 128, %s2592, %s2581
        $region84: #{decoder_layer.1} parent=79 // pred_fallthru
          _
      $region80: #{decoder_layer.1} parent=5 // pred_fallthru
        _
      %p2598 = scmp.le.s32.totalorder 2, %s24
      // Predicated region
      $region85: #{decoder_layer.1} parent=5 // pred_check
        %p2599 = pneg %p2598
      $region86: #{decoder_layer.1} parent=5 // pred_check_branch
        %2601 = sbr.rel (%p2599) target = $region88
      $region87: #{decoder_layer.1} parent=5 // pred_region
        %s2602 = ssub.s32 %s24, 2
        // Predicated region
        $region89: #{decoder_layer.1} parent=87 // pred_check
          %p2603 = pneg %p378
        $region90: #{decoder_layer.1} parent=87 // pred_check_branch
          %2605 = sbr.rel (%p2603) target = $region92
        $region91: #{decoder_layer.1} parent=87 // pred_region
          %s2606 = sand.u32 %s363, 1
          %s2607 = scalar_lea.sflag [#allocation3], %s2606
          %s2608 = sand.u32 %s363, 1
          %s2609 = smul.addr %s2608, 8
          %s2610 = scalar_lea.vmem [#allocation2], %s2609
          %2611 = dma.done %s2607, 128
        $region92: #{decoder_layer.1} parent=87 // pred_fallthru
          _
      $region88: #{decoder_layer.1} parent=5 // pred_fallthru
        _
    $region6: #{decoder_layer.1} parent=1 // loop_footer
      %s28 = sadd.s32 1, %s24
    $region7: #{decoder_layer.1} parent=1 // loop_footer_branch
      %23 = sbr.rel target = $region3
    $region8: #{decoder_layer.1} parent=1 // loop_exit
      _
    %2612 = vsyncpa [#allocation3], 1
    %s2613 = scalar_lea.sflag [#allocation3], 1
    %2614 = vsyncpa %s2613, 1

</llo_original>
